<compile_context>
chip_gen: v7x
topology: tpu7x:2x2x1
jax: 0.10.0
libtpu: 0.0.40
codegen_flags: <defaults>
</compile_context>

<pallas_src>
import math
import functools

import jax
import jax.numpy as jnp
from jax.experimental import pallas as pl
from jax.experimental.pallas import tpu as pltpu


def _comm_attention_kernel(
    h_ref, mask_ref, wk_ref, wq_ref, wv_ref, wo_ref,   # inputs
    out_ref,                                           # output
    *, num_heads, kdim, num_blocks, hidden_size,
):
    f32 = jnp.float32
    h2d = h_ref[...]            # (TB, nb*Dh)   compute dtype (f32 or bf16)
    mask = mask_ref[...]        # (TB, nb)      f32

    tb = h2d.shape[0]

    # --- GroupLinearLayer projections: one block-diagonal MXU matmul each ---
    key = jnp.dot(h2d, wk_ref[...], preferred_element_type=f32)    # (TB, nb*H*kdim)
    query = jnp.dot(h2d, wq_ref[...], preferred_element_type=f32)  # (TB, nb*H*kdim)
    value = jnp.dot(h2d, wv_ref[...], preferred_element_type=f32)  # (TB, nb*H*Dh)

    q3 = query.reshape(tb, num_blocks, num_heads * kdim)
    k3 = key.reshape(tb, num_blocks, num_heads * kdim)
    v3 = value.reshape(tb, num_blocks, num_heads * hidden_size)

    inv_sqrt_kdim = 1.0 / math.sqrt(kdim)
    out_acc = jnp.zeros((tb, num_blocks * hidden_size), f32)

    # Static unroll over heads (num_heads is small); batch tile stays on the
    # matmul/einsum leading batch dim.
    for hh in range(num_heads):
        qh = q3[:, :, hh * kdim:(hh + 1) * kdim]                    # (TB, nb, kdim)
        kh = k3[:, :, hh * kdim:(hh + 1) * kdim]                    # (TB, nb, kdim)
        vh = v3[:, :, hh * hidden_size:(hh + 1) * hidden_size]      # (TB, nb, Dh)

        # scores[b,u,v] = <q[b,u], k[b,v]> / sqrt(kdim)
        s = jnp.einsum('buk,bvk->buv', qh, kh,
                       preferred_element_type=f32) * inv_sqrt_kdim  # (TB, nb, nb)

        # softmax over the key dim, then multiply query rows by mask
        m = jnp.max(s, axis=-1, keepdims=True)
        e = jnp.exp(s - m)
        p = e * pl.reciprocal(jnp.sum(e, axis=-1, keepdims=True), approx=True)
        p = p * mask[:, :, None]                                    # probs[b,h,u,v] *= mask[b,u]
        # TODO(synk): nn.Dropout on attention probs is identity at inference time.

        ctx_h = jnp.einsum('buv,bvd->bud', p, vh,
                           preferred_element_type=f32)              # (TB, nb, Dh)
        ctx_h2d = ctx_h.reshape(tb, num_blocks * hidden_size)       # (TB, nb*Dh)

        # output_fc (GroupLinearLayer) decomposed per head:
        #   out += ctx_h @ block_diag(W_out[:, h*Dh:(h+1)*Dh, :])
        out_acc = out_acc + jnp.dot(ctx_h2d.astype(wo_ref.dtype), wo_ref[hh],
                                    preferred_element_type=f32)     # (TB, nb*Dh)

    out_ref[...] = out_acc.astype(out_ref.dtype)


def _block_diag(w):
    """(nb, din, dout) group weights -> (nb*din, nb*dout) block-diagonal matrix."""
    nb, din, dout = w.shape
    bd = jnp.zeros((nb * din, nb * dout), w.dtype)
    for u in range(nb):
        bd = bd.at[u * din:(u + 1) * din, u * dout:(u + 1) * dout].set(w[u])
    return bd


def comm_attention(h, mask, w_key, w_query, w_value, w_out, *,
                   num_heads, kdim, tile_b=128, use_bf16=False):
    B, nb, Dh = h.shape
    assert w_key.shape == (nb, Dh, num_heads * kdim)
    assert w_query.shape == (nb, Dh, num_heads * kdim)
    assert w_value.shape == (nb, Dh, num_heads * Dh)
    assert w_out.shape == (nb, num_heads * Dh, Dh)

    compute_dtype = jnp.bfloat16 if use_bf16 else jnp.float32

    # Block-diagonal GroupLinearLayer weights (single MXU matmul per projection).
    wk_bd = _block_diag(w_key).astype(compute_dtype)       # (nb*Dh, nb*H*kdim)
    wq_bd = _block_diag(w_query).astype(compute_dtype)     # (nb*Dh, nb*H*kdim)
    wv_bd = _block_diag(w_value).astype(compute_dtype)     # (nb*Dh, nb*H*Dh)
    # output_fc split per head: (H, nb*Dh, nb*Dh)
    wo_bd = jnp.stack(
        [_block_diag(w_out[:, hh * Dh:(hh + 1) * Dh, :]) for hh in range(num_heads)],
        axis=0).astype(compute_dtype)

    # Lane-dense 2-D activations.
    h2d = h.reshape(B, nb * Dh).astype(compute_dtype)
    mask2d = mask.astype(jnp.float32)

    # Batch tiling (sublane-aligned); pad the batch to a multiple of the tile.
    tile_b = max(8, min(int(tile_b), B))
    tile_b = (tile_b + 7) // 8 * 8
    n_tiles = pl.cdiv(B, tile_b)
    b_pad = n_tiles * tile_b
    if b_pad != B:
        h2d = jnp.pad(h2d, ((0, b_pad - B), (0, 0)))
        mask2d = jnp.pad(mask2d, ((0, b_pad - B), (0, 0)))

    kernel = functools.partial(
        _comm_attention_kernel,
        num_heads=num_heads, kdim=kdim, num_blocks=nb, hidden_size=Dh)

    grid_spec = pltpu.PrefetchScalarGridSpec(
        num_scalar_prefetch=0,
        grid=(n_tiles,),
        in_specs=[
            pl.BlockSpec((tile_b, nb * Dh), lambda i: (i, 0)),      # h
            pl.BlockSpec((tile_b, nb), lambda i: (i, 0)),           # mask
            pl.BlockSpec(wk_bd.shape, lambda i: (0, 0)),            # W_key   (resident)
            pl.BlockSpec(wq_bd.shape, lambda i: (0, 0)),            # W_query (resident)
            pl.BlockSpec(wv_bd.shape, lambda i: (0, 0)),            # W_value (resident)
            pl.BlockSpec(wo_bd.shape, lambda i: (0, 0, 0)),         # W_out   (resident)
        ],
        out_specs=pl.BlockSpec((tile_b, nb * Dh), lambda i: (i, 0)),
    )

    out2d = pl.pallas_call(
        kernel,
        out_shape=jax.ShapeDtypeStruct((b_pad, nb * Dh), jnp.float32),
        grid_spec=grid_spec,
        compiler_params=pltpu.CompilerParams(
            dimension_semantics=("parallel",)),
    )(h2d, mask2d, wk_bd, wq_bd, wv_bd, wo_bd)

    return out2d[:B].reshape(B, nb, Dh)


def comm_attention_ref(h, mask, w_key, w_query, w_value, w_out, *, num_heads, kdim):
    """Pure-JAX reference mirroring the PyTorch CommAttention.forward exactly."""
    B, nb, Dh = h.shape

    def gll(x, w):   # GroupLinearLayer: per-block weight matrix
        return jnp.einsum('bud,udo->buo', x, w)

    key = gll(h, w_key)        # (B, nb, H*kdim)
    query = gll(h, w_query)    # (B, nb, H*kdim)
    value = gll(h, w_value)    # (B, nb, H*Dh)

    def t4s(x, hd):            # transpose_for_scores
        return x.reshape(B, nb, num_heads, hd).transpose(0, 2, 1, 3)

    key = t4s(key, kdim)
    query = t4s(query, kdim)
    value = t4s(value, Dh)

    scores = jnp.einsum('bhuk,bhvk->bhuv', query, key) / math.sqrt(kdim)
    probs = jax.nn.softmax(scores, axis=-1)
    probs = probs * mask[:, None, :, None]          # mask query rows (stack over heads)
    ctx = jnp.einsum('bhuv,bhvd->bhud', probs, value)
    ctx = ctx.transpose(0, 2, 1, 3).reshape(B, nb, num_heads * Dh)
    return gll(ctx, w_out)                          # (B, nb, Dh)


if __name__ == "__main__":
    # module hyper-parameters
    hidden_size = 32
    kdim = 16
    num_heads = 2
    num_blocks = 4

    # example shapes
    B = 16          # tiled as two grid steps of 8 -> both v7x TensorCores get work

    key0 = jax.random.PRNGKey(0)
    kh, km, k1, k2, k3, k4 = jax.random.split(key0, 6)

    h = jax.random.normal(kh, (B, num_blocks, hidden_size), jnp.float32)
    mask = (jax.random.uniform(km, (B, num_blocks)) > 0.3).astype(jnp.float32)

    # GroupLinearLayer-style init (0.01 * randn), matching module __init__ shapes.
    w_key = 0.01 * jax.random.normal(
        k1, (num_blocks, hidden_size, num_heads * kdim), jnp.float32)
    w_query = 0.01 * jax.random.normal(
        k2, (num_blocks, hidden_size, num_heads * kdim), jnp.float32)
    w_value = 0.01 * jax.random.normal(
        k3, (num_blocks, hidden_size, num_heads * hidden_size), jnp.float32)
    w_out = 0.01 * jax.random.normal(
        k4, (num_blocks, num_heads * hidden_size, hidden_size), jnp.float32)

    out_ref = comm_attention_ref(
        h, mask, w_key, w_query, w_value, w_out, num_heads=num_heads, kdim=kdim)

    # f32 path (exact numerics up to approx-reciprocal softmax)
    out = comm_attention(
        h, mask, w_key, w_query, w_value, w_out,
        num_heads=num_heads, kdim=kdim, tile_b=8, use_bf16=False)
    jax.block_until_ready(out)

    assert out.shape == (B, num_blocks, hidden_size)
    assert jnp.allclose(out, out_ref, atol=1e-4, rtol=1e-4), \
        float(jnp.max(jnp.abs(out - out_ref)))

    # bf16 MXU operands (recommended on v6e / v7x); f32 accumulation, looser tolerance.
    out_bf16 = comm_attention(
        h, mask, w_key, w_query, w_value, w_out,
        num_heads=num_heads, kdim=kdim, tile_b=8, use_bf16=True)
    jax.block_until_ready(out_bf16)
    assert jnp.allclose(out_bf16, out_ref, atol=2e-3, rtol=5e-2), \
        float(jnp.max(jnp.abs(out_bf16 - out_ref)))

    print("KERNEL_OK")
</pallas_src>

<mosaic_0001>
module attributes {stable_mosaic.version = 11 : i64} {
  func.func @_comm_attention_kernel(%arg0: i32, %arg1: memref<8x128xf32, #tpu.memory_space<vmem>>, %arg2: memref<8x4xf32, #tpu.memory_space<vmem>>, %arg3: memref<128x128xf32, #tpu.memory_space<vmem>>, %arg4: memref<128x128xf32, #tpu.memory_space<vmem>>, %arg5: memref<128x256xf32, #tpu.memory_space<vmem>>, %arg6: memref<2x128x128xf32, #tpu.memory_space<vmem>>, %arg7: memref<8x128xf32, #tpu.memory_space<vmem>>) attributes {dimension_semantics = [#tpu.dimension_semantics<parallel>], iteration_bounds = array<i64: 2>, scalar_prefetch = 0 : i64, scratch_operands = 0 : i64, tpu.core_type = #tpu.core_type<tc>, window_params = [{transform_indices = @transform_0, window_bounds = array<i64: 8, 128>}, {transform_indices = @transform_1, window_bounds = array<i64: 8, 4>}, {pipeline_mode = #tpu.pipeline_mode<synchronous>, transform_indices = @transform_2, window_bounds = array<i64: 128, 128>}, {pipeline_mode = #tpu.pipeline_mode<synchronous>, transform_indices = @transform_3, window_bounds = array<i64: 128, 128>}, {pipeline_mode = #tpu.pipeline_mode<synchronous>, transform_indices = @transform_4, window_bounds = array<i64: 128, 256>}, {pipeline_mode = #tpu.pipeline_mode<synchronous>, transform_indices = @transform_5, window_bounds = array<i64: 2, 128, 128>}, {transform_indices = @transform_6, window_bounds = array<i64: 8, 128>}]} {
    %c0 = arith.constant 0 : index
    %c0_0 = arith.constant 0 : index
    %0 = vector.load %arg1[%c0, %c0_0] : memref<8x128xf32, #tpu.memory_space<vmem>>, vector<8x128xf32>
    %c0_1 = arith.constant 0 : index
    %c0_2 = arith.constant 0 : index
    %1 = vector.load %arg2[%c0_1, %c0_2] : memref<8x4xf32, #tpu.memory_space<vmem>>, vector<8x4xf32>
    %c0_3 = arith.constant 0 : index
    %c0_4 = arith.constant 0 : index
    %2 = vector.load %arg3[%c0_3, %c0_4] : memref<128x128xf32, #tpu.memory_space<vmem>>, vector<128x128xf32>
    %cst = arith.constant dense<0.000000e+00> : vector<8x128xf32>
    %3 = tpu.matmul %0, %2, %cst {dimension_numbers = #tpu.dot_dimension_numbers<[1], [0], [0], [1], [0, 0, 1, 1], [], []>} : vector<8x128xf32>, vector<128x128xf32>, vector<8x128xf32> -> vector<8x128xf32>
    %c0_5 = arith.constant 0 : index
    %c0_6 = arith.constant 0 : index
    %4 = vector.load %arg4[%c0_5, %c0_6] : memref<128x128xf32, #tpu.memory_space<vmem>>, vector<128x128xf32>
    %cst_7 = arith.constant dense<0.000000e+00> : vector<8x128xf32>
    %5 = tpu.matmul %0, %4, %cst_7 {dimension_numbers = #tpu.dot_dimension_numbers<[1], [0], [0], [1], [0, 0, 1, 1], [], []>} : vector<8x128xf32>, vector<128x128xf32>, vector<8x128xf32> -> vector<8x128xf32>
    %c0_8 = arith.constant 0 : index
    %c0_9 = arith.constant 0 : index
    %6 = vector.load %arg5[%c0_8, %c0_9] : memref<128x256xf32, #tpu.memory_space<vmem>>, vector<128x256xf32>
    %cst_10 = arith.constant dense<0.000000e+00> : vector<8x256xf32>
    %7 = tpu.matmul %0, %6, %cst_10 {dimension_numbers = #tpu.dot_dimension_numbers<[1], [0], [0], [1], [0, 0, 1, 1], [], []>} : vector<8x128xf32>, vector<128x256xf32>, vector<8x256xf32> -> vector<8x256xf32>
    %8 = vector.shape_cast %5 : vector<8x128xf32> to vector<8x4x32xf32>
    %9 = vector.shape_cast %3 : vector<8x128xf32> to vector<8x4x32xf32>
    %10 = vector.shape_cast %7 : vector<8x256xf32> to vector<8x4x64xf32>
    %cst_11 = arith.constant 0.000000e+00 : f32
    %11 = vector.broadcast %cst_11 : f32 to vector<8x128xf32>
    %12 = vector.extract_strided_slice %8 {offsets = [0, 0, 0], sizes = [8, 4, 16], strides = [1, 1, 1]} : vector<8x4x32xf32> to vector<8x4x16xf32>
    %13 = vector.extract_strided_slice %9 {offsets = [0, 0, 0], sizes = [8, 4, 16], strides = [1, 1, 1]} : vector<8x4x32xf32> to vector<8x4x16xf32>
    %14 = vector.extract_strided_slice %10 {offsets = [0, 0, 0], sizes = [8, 4, 32], strides = [1, 1, 1]} : vector<8x4x64xf32> to vector<8x4x32xf32>
    "tpu.trace_start"() <{level = 10 : i32, message = "buk,bvk->buv"}> : () -> ()
    %cst_12 = arith.constant dense<0.000000e+00> : vector<8x4x4xf32>
    %15 = tpu.matmul %12, %13, %cst_12 {dimension_numbers = #tpu.dot_dimension_numbers<[2], [2], [1], [1], [0, 0, 0, 1, 1, 1], [0], [0]>} : vector<8x4x16xf32>, vector<8x4x16xf32>, vector<8x4x4xf32> -> vector<8x4x4xf32>
    "tpu.trace_stop"() : () -> ()
    %cst_13 = arith.constant 2.500000e-01 : f32
    %16 = vector.broadcast %cst_13 : f32 to vector<8x4x4xf32>
    %17 = arith.mulf %15, %16 : vector<8x4x4xf32>
    %cst_14 = arith.constant dense<0xFF800000> : vector<8x4xf32>
    %18 = vector.multi_reduction <maximumf>, %17, %cst_14 [2] : vector<8x4x4xf32> to vector<8x4xf32>
    %19 = vector.shape_cast %18 : vector<8x4xf32> to vector<8x4x1xf32>
    %20 = vector.broadcast %19 : vector<8x4x1xf32> to vector<8x4x4xf32>
    %21 = arith.subf %17, %20 : vector<8x4x4xf32>
    %22 = math.exp %21 : vector<8x4x4xf32>
    %cst_15 = arith.constant dense<0.000000e+00> : vector<8x4xf32>
    %23 = vector.multi_reduction <add>, %22, %cst_15 [2] : vector<8x4x4xf32> to vector<8x4xf32>
    %24 = vector.shape_cast %23 : vector<8x4xf32> to vector<8x4x1xf32>
    %25 = tpu.reciprocal %24 {approx = true} : vector<8x4x1xf32> -> vector<8x4x1xf32>
    %26 = vector.broadcast %25 : vector<8x4x1xf32> to vector<8x4x4xf32>
    %27 = arith.mulf %22, %26 : vector<8x4x4xf32>
    %28 = vector.shape_cast %1 : vector<8x4xf32> to vector<8x4x1xf32>
    %29 = vector.broadcast %28 : vector<8x4x1xf32> to vector<8x4x4xf32>
    %30 = arith.mulf %27, %29 : vector<8x4x4xf32>
    "tpu.trace_start"() <{level = 10 : i32, message = "buv,bvd->bud"}> : () -> ()
    %cst_16 = arith.constant dense<0.000000e+00> : vector<8x4x32xf32>
    %31 = tpu.matmul %30, %14, %cst_16 {dimension_numbers = #tpu.dot_dimension_numbers<[2], [1], [1], [2], [0, 0, 0, 1, 1, 2], [0], [0]>} : vector<8x4x4xf32>, vector<8x4x32xf32>, vector<8x4x32xf32> -> vector<8x4x32xf32>
    "tpu.trace_stop"() : () -> ()
    %32 = vector.shape_cast %31 : vector<8x4x32xf32> to vector<8x128xf32>
    %c0_17 = arith.constant 0 : index
    %c0_18 = arith.constant 0 : index
    %c0_19 = arith.constant 0 : index
    %33 = vector.load %arg6[%c0_17, %c0_18, %c0_19] : memref<2x128x128xf32, #tpu.memory_space<vmem>>, vector<1x128x128xf32>
    %34 = vector.shape_cast %33 : vector<1x128x128xf32> to vector<128x128xf32>
    %cst_20 = arith.constant dense<0.000000e+00> : vector<8x128xf32>
    %35 = tpu.matmul %32, %34, %cst_20 {dimension_numbers = #tpu.dot_dimension_numbers<[1], [0], [0], [1], [0, 0, 1, 1], [], []>} : vector<8x128xf32>, vector<128x128xf32>, vector<8x128xf32> -> vector<8x128xf32>
    %36 = arith.addf %11, %35 : vector<8x128xf32>
    %37 = vector.extract_strided_slice %8 {offsets = [0, 0, 16], sizes = [8, 4, 16], strides = [1, 1, 1]} : vector<8x4x32xf32> to vector<8x4x16xf32>
    %38 = vector.extract_strided_slice %9 {offsets = [0, 0, 16], sizes = [8, 4, 16], strides = [1, 1, 1]} : vector<8x4x32xf32> to vector<8x4x16xf32>
    %39 = vector.extract_strided_slice %10 {offsets = [0, 0, 32], sizes = [8, 4, 32], strides = [1, 1, 1]} : vector<8x4x64xf32> to vector<8x4x32xf32>
    "tpu.trace_start"() <{level = 10 : i32, message = "buk,bvk->buv"}> : () -> ()
    %cst_21 = arith.constant dense<0.000000e+00> : vector<8x4x4xf32>
    %40 = tpu.matmul %37, %38, %cst_21 {dimension_numbers = #tpu.dot_dimension_numbers<[2], [2], [1], [1], [0, 0, 0, 1, 1, 1], [0], [0]>} : vector<8x4x16xf32>, vector<8x4x16xf32>, vector<8x4x4xf32> -> vector<8x4x4xf32>
    "tpu.trace_stop"() : () -> ()
    %cst_22 = arith.constant 2.500000e-01 : f32
    %41 = vector.broadcast %cst_22 : f32 to vector<8x4x4xf32>
    %42 = arith.mulf %40, %41 : vector<8x4x4xf32>
    %cst_23 = arith.constant dense<0xFF800000> : vector<8x4xf32>
    %43 = vector.multi_reduction <maximumf>, %42, %cst_23 [2] : vector<8x4x4xf32> to vector<8x4xf32>
    %44 = vector.shape_cast %43 : vector<8x4xf32> to vector<8x4x1xf32>
    %45 = vector.broadcast %44 : vector<8x4x1xf32> to vector<8x4x4xf32>
    %46 = arith.subf %42, %45 : vector<8x4x4xf32>
    %47 = math.exp %46 : vector<8x4x4xf32>
    %cst_24 = arith.constant dense<0.000000e+00> : vector<8x4xf32>
    %48 = vector.multi_reduction <add>, %47, %cst_24 [2] : vector<8x4x4xf32> to vector<8x4xf32>
    %49 = vector.shape_cast %48 : vector<8x4xf32> to vector<8x4x1xf32>
    %50 = tpu.reciprocal %49 {approx = true} : vector<8x4x1xf32> -> vector<8x4x1xf32>
    %51 = vector.broadcast %50 : vector<8x4x1xf32> to vector<8x4x4xf32>
    %52 = arith.mulf %47, %51 : vector<8x4x4xf32>
    %53 = vector.shape_cast %1 : vector<8x4xf32> to vector<8x4x1xf32>
    %54 = vector.broadcast %53 : vector<8x4x1xf32> to vector<8x4x4xf32>
    %55 = arith.mulf %52, %54 : vector<8x4x4xf32>
    "tpu.trace_start"() <{level = 10 : i32, message = "buv,bvd->bud"}> : () -> ()
    %cst_25 = arith.constant dense<0.000000e+00> : vector<8x4x32xf32>
    %56 = tpu.matmul %55, %39, %cst_25 {dimension_numbers = #tpu.dot_dimension_numbers<[2], [1], [1], [2], [0, 0, 0, 1, 1, 2], [0], [0]>} : vector<8x4x4xf32>, vector<8x4x32xf32>, vector<8x4x32xf32> -> vector<8x4x32xf32>
    "tpu.trace_stop"() : () -> ()
    %57 = vector.shape_cast %56 : vector<8x4x32xf32> to vector<8x128xf32>
    %c1 = arith.constant 1 : index
    %c0_26 = arith.constant 0 : index
    %c0_27 = arith.constant 0 : index
    %58 = vector.load %arg6[%c1, %c0_26, %c0_27] : memref<2x128x128xf32, #tpu.memory_space<vmem>>, vector<1x128x128xf32>
    %59 = vector.shape_cast %58 : vector<1x128x128xf32> to vector<128x128xf32>
    %cst_28 = arith.constant dense<0.000000e+00> : vector<8x128xf32>
    %60 = tpu.matmul %57, %59, %cst_28 {dimension_numbers = #tpu.dot_dimension_numbers<[1], [0], [0], [1], [0, 0, 1, 1], [], []>} : vector<8x128xf32>, vector<128x128xf32>, vector<8x128xf32> -> vector<8x128xf32>
    %61 = arith.addf %36, %60 : vector<8x128xf32>
    %c0_29 = arith.constant 0 : index
    %c0_30 = arith.constant 0 : index
    %62 = vector.load %arg7[%c0_29, %c0_30] : memref<8x128xf32, #tpu.memory_space<vmem>>, vector<8x128xf32>
    tpu.vector_store %arg7[%c0_29, %c0_30], %61 {strides = array<i32>} : memref<8x128xf32, #tpu.memory_space<vmem>>, vector<8x128xf32>,
    return
  }
  func.func @transform_0(%arg0: i32) -> (i32, i32) {
    %c0_i32 = arith.constant 0 : i32
    %c0_i32_0 = arith.constant 0 : i32
    return %arg0, %c0_i32 : i32, i32
  }
  func.func @transform_1(%arg0: i32) -> (i32, i32) {
    %c0_i32 = arith.constant 0 : i32
    %c0_i32_0 = arith.constant 0 : i32
    return %arg0, %c0_i32 : i32, i32
  }
  func.func @transform_2(%arg0: i32) -> (i32, i32) {
    %c0_i32 = arith.constant 0 : i32
    %c0_i32_0 = arith.constant 0 : i32
    %c0_i32_1 = arith.constant 0 : i32
    return %c0_i32, %c0_i32_0 : i32, i32
  }
  func.func @transform_3(%arg0: i32) -> (i32, i32) {
    %c0_i32 = arith.constant 0 : i32
    %c0_i32_0 = arith.constant 0 : i32
    %c0_i32_1 = arith.constant 0 : i32
    return %c0_i32, %c0_i32_0 : i32, i32
  }
  func.func @transform_4(%arg0: i32) -> (i32, i32) {
    %c0_i32 = arith.constant 0 : i32
    %c0_i32_0 = arith.constant 0 : i32
    %c0_i32_1 = arith.constant 0 : i32
    return %c0_i32, %c0_i32_0 : i32, i32
  }
  func.func @transform_5(%arg0: i32) -> (i32, i32, i32) {
    %c0_i32 = arith.constant 0 : i32
    %c0_i32_0 = arith.constant 0 : i32
    %c0_i32_1 = arith.constant 0 : i32
    %c0_i32_2 = arith.constant 0 : i32
    return %c0_i32, %c0_i32_0, %c0_i32_1 : i32, i32, i32
  }
  func.func @transform_6(%arg0: i32) -> (i32, i32) {
    %c0_i32 = arith.constant 0 : i32
    %c0_i32_0 = arith.constant 0 : i32
    return %arg0, %c0_i32 : i32, i32
  }
}

</mosaic_0001>

<llo_original>
// kernel: tpu_custom_call.1
$region0: #{tpu_custom_call.1}
  #allocation0 [shape = 'u32[]', space=smem, size = 0x4, offset = 0x4, fixed_abs, tag = 'smem constant byte address 0x4 - core index']
  #allocation1 [shape = 'u32[144,128]{1,0:T(1,128)}', space=vmem, size = 0x12000, scoped, tag = 'internal scratch']
  %s0 = inlined_call_operand.vmem [shape: f32[16,128], index: 0, kind: input, shape index: {}]
  %s1 = inlined_call_operand.vmem [shape: f32[16,4], index: 1, kind: input, shape index: {}]
  %s2 = inlined_call_operand.hbm [shape: f32[128,128], index: 2, kind: input, shape index: {}]
  %s3 = inlined_call_operand.hbm [shape: f32[128,128], index: 3, kind: input, shape index: {}]
  %s4 = inlined_call_operand.hbm [shape: f32[128,256], index: 4, kind: input, shape index: {}]
  %s5 = inlined_call_operand.hbm [shape: f32[2,128,128], index: 5, kind: input, shape index: {}]
  %s6 = inlined_call_operand.hbm [shape: f32[16,128], index: 6, kind: output, shape index: {}]
  %s7 = sld [smem:[#allocation0]]
  $region73: #{tpu_custom_call.1} parent=0
    _
  %s9 = ssub.s32 1, %s7
  %s10 = scalar_select 0, %s9, %s7
  $region1: #{tpu_custom_call.1} parent=0
    #allocation2 [shape = 'u8[65536]{0}', space=vmem, size = 0x10000, scoped, tag = 'input window, operand 2, single buffered']
    #allocation3 [shape = 's32[2]{0}', space=sflag, size = 0x8, scoped, tag = 'scoped memory for tpu_custom_call.1']
    #allocation4 [shape = 's32[2]{0}', space=sflag, size = 0x8, scoped, tag = 'scoped memory for tpu_custom_call.1']
    #allocation5 [shape = 'u8[65536]{0}', space=vmem, size = 0x10000, scoped, tag = 'input window, operand 3, single buffered']
    #allocation6 [shape = 's32[1]{0}', space=sflag, size = 0x4, scoped, tag = 'scoped memory for tpu_custom_call.1']
    #allocation7 [shape = 'u8[131072]{0}', space=vmem, size = 0x20000, scoped, tag = 'input window, operand 4, single buffered']
    #allocation8 [shape = 'u8[131072]{0}', space=vmem, size = 0x20000, scoped, tag = 'input window, operand 5, single buffered']
    #allocation9 [shape = 's32[1]{0}', space=sflag, size = 0x4, scoped, tag = 'scoped memory for tpu_custom_call.1']
    #allocation10 [shape = 'u8[8192]{0}', space=vmem, size = 0x2000, scoped, tag = 'output window, operand 0']
    %11 = vsyncpa [#allocation3], 0
    %12 = vsyncpa [#allocation6], 0
    %13 = vsyncpa [#allocation9], 0
    %14 = vsyncpa [#allocation4], 0
    %s15 = scalar_lea.sflag [#allocation4], 1
    %16 = vsyncpa %s15, 0
    loop: start=0, step=1, limit=4
    $region2: #{tpu_custom_call.1} parent=1 // loop_pre_header
      _
    $region3: #{tpu_custom_call.1} parent=1 // loop_header
      %s18 = sphi 0, %s22
      %p19 = scmp.ge.s32.totalorder %s18, 4
      %s28 = sphi 0, %s30
      %s31 = sphi 0, %s28
      %s32 = sphi 0, %s31
      %s48 = sphi 0, %s32
      %s54 = sphi 0, %s56
      %s57 = sphi 0, %s54
      %s58 = sphi 0, %s57
      %s74 = sphi 0, %s58
      %s78 = sphi 0, %s78
      %s80 = sphi 0, %s78
      %s81 = sphi 0, %s80
      %s95 = sphi 0, %s81
      %s99 = sphi 0, %s99
      %s101 = sphi 0, %s99
      %s102 = sphi 0, %s101
      %s116 = sphi 0, %s102
      %s120 = sphi 0, %s120
      %s122 = sphi 0, %s120
      %s123 = sphi 0, %s122
      %s137 = sphi 0, %s123
      %s141 = sphi 0, %s141
      %s143 = sphi 0, %s141
      %s144 = sphi 0, %s143
      %s158 = sphi 0, %s144
      %s164 = sphi 0, %s166
      %s167 = sphi 0, %s164
      %s168 = sphi 0, %s167
      %s184 = sphi 0, %s168
    $region4: #{tpu_custom_call.1} parent=1 // loop_header_branch
      %21 = sbr.rel (%p19) target = $region8
    $region5: #{tpu_custom_call.1} parent=1 // loop_body
      %s23 = ssub.s32 %s18, 1
      %s24 = ssub.s32 %s18, 2
      %s25 = sadd.s32 %s18, 1
      %s26 = ssub.s32 %s18, %s25
      %p27 = scmp.eq.s32.totalorder %s26, 0
      %s29 = sadd.s32 %s28, 1
      %s30 = scalar_select %p27, %s28, %s29
      %p33 = pneg %p27
      %p34 = scmp.eq.s32.totalorder %s18, 1
      %p35 = por %p33, %p34
      %p36 = scmp.ne.s32.totalorder %s28, %s31
      %p37 = scmp.eq.s32.totalorder %s18, 0
      %p38 = por %p36, %p37
      %p39 = scmp.ne.s32.totalorder %s28, %s31
      %p40 = scmp.eq.s32.totalorder %s23, 1
      %p41 = por %p39, %p40
      %p42 = scmp.ne.s32.totalorder %s31, %s32
      %p43 = scmp.eq.s32.totalorder %s23, 0
      %p44 = por %p42, %p43
      %p45 = scmp.ne.s32.totalorder %s31, %s32
      %p46 = scmp.eq.s32.totalorder %s24, 1
      %p47 = por %p45, %p46
      %p49 = scmp.ne.s32.totalorder %s32, %s48
      %p50 = scmp.eq.s32.totalorder %s24, 0
      %p51 = por %p49, %p50
      %s52 = ssub.s32 %s18, %s25
      %p53 = scmp.eq.s32.totalorder %s52, 0
      %s55 = sadd.s32 %s54, 1
      %s56 = scalar_select %p53, %s54, %s55
      %p59 = pneg %p53
      %p60 = scmp.eq.s32.totalorder %s18, 1
      %p61 = por %p59, %p60
      %p62 = scmp.ne.s32.totalorder %s54, %s57
      %p63 = scmp.eq.s32.totalorder %s18, 0
      %p64 = por %p62, %p63
      %p65 = scmp.ne.s32.totalorder %s54, %s57
      %p66 = scmp.eq.s32.totalorder %s23, 1
      %p67 = por %p65, %p66
      %p68 = scmp.ne.s32.totalorder %s57, %s58
      %p69 = scmp.eq.s32.totalorder %s23, 0
      %p70 = por %p68, %p69
      %p71 = scmp.ne.s32.totalorder %s57, %s58
      %p72 = scmp.eq.s32.totalorder %s24, 1
      %p73 = por %p71, %p72
      %p75 = scmp.ne.s32.totalorder %s58, %s74
      %p76 = scmp.eq.s32.totalorder %s24, 0
      %p77 = por %p75, %p76
      %s79 = sadd.s32 %s78, 1
      %p82 = scmp.eq.s32.totalorder %s18, 1
      %p83 = scmp.ne.s32.totalorder %s78, %s80
      %p84 = scmp.eq.s32.totalorder %s18, 0
      %p85 = por %p83, %p84
      %p86 = scmp.ne.s32.totalorder %s78, %s80
      %p87 = scmp.eq.s32.totalorder %s23, 1
      %p88 = por %p86, %p87
      %p89 = scmp.ne.s32.totalorder %s80, %s81
      %p90 = scmp.eq.s32.totalorder %s23, 0
      %p91 = por %p89, %p90
      %p92 = scmp.ne.s32.totalorder %s80, %s81
      %p93 = scmp.eq.s32.totalorder %s24, 1
      %p94 = por %p92, %p93
      %p96 = scmp.ne.s32.totalorder %s81, %s95
      %p97 = scmp.eq.s32.totalorder %s24, 0
      %p98 = por %p96, %p97
      %s100 = sadd.s32 %s99, 1
      %p103 = scmp.eq.s32.totalorder %s18, 1
      %p104 = scmp.ne.s32.totalorder %s99, %s101
      %p105 = scmp.eq.s32.totalorder %s18, 0
      %p106 = por %p104, %p105
      %p107 = scmp.ne.s32.totalorder %s99, %s101
      %p108 = scmp.eq.s32.totalorder %s23, 1
      %p109 = por %p107, %p108
      %p110 = scmp.ne.s32.totalorder %s101, %s102
      %p111 = scmp.eq.s32.totalorder %s23, 0
      %p112 = por %p110, %p111
      %p113 = scmp.ne.s32.totalorder %s101, %s102
      %p114 = scmp.eq.s32.totalorder %s24, 1
      %p115 = por %p113, %p114
      %p117 = scmp.ne.s32.totalorder %s102, %s116
      %p118 = scmp.eq.s32.totalorder %s24, 0
      %p119 = por %p117, %p118
      %s121 = sadd.s32 %s120, 1
      %p124 = scmp.eq.s32.totalorder %s18, 1
      %p125 = scmp.ne.s32.totalorder %s120, %s122
      %p126 = scmp.eq.s32.totalorder %s18, 0
      %p127 = por %p125, %p126
      %p128 = scmp.ne.s32.totalorder %s120, %s122
      %p129 = scmp.eq.s32.totalorder %s23, 1
      %p130 = por %p128, %p129
      %p131 = scmp.ne.s32.totalorder %s122, %s123
      %p132 = scmp.eq.s32.totalorder %s23, 0
      %p133 = por %p131, %p132
      %p134 = scmp.ne.s32.totalorder %s122, %s123
      %p135 = scmp.eq.s32.totalorder %s24, 1
      %p136 = por %p134, %p135
      %p138 = scmp.ne.s32.totalorder %s123, %s137
      %p139 = scmp.eq.s32.totalorder %s24, 0
      %p140 = por %p138, %p139
      %s142 = sadd.s32 %s141, 1
      %p145 = scmp.eq.s32.totalorder %s18, 1
      %p146 = scmp.ne.s32.totalorder %s141, %s143
      %p147 = scmp.eq.s32.totalorder %s18, 0
      %p148 = por %p146, %p147
      %p149 = scmp.ne.s32.totalorder %s141, %s143
      %p150 = scmp.eq.s32.totalorder %s23, 1
      %p151 = por %p149, %p150
      %p152 = scmp.ne.s32.totalorder %s143, %s144
      %p153 = scmp.eq.s32.totalorder %s23, 0
      %p154 = por %p152, %p153
      %p155 = scmp.ne.s32.totalorder %s143, %s144
      %p156 = scmp.eq.s32.totalorder %s24, 1
      %p157 = por %p155, %p156
      %p159 = scmp.ne.s32.totalorder %s144, %s158
      %p160 = scmp.eq.s32.totalorder %s24, 0
      %p161 = por %p159, %p160
      %s162 = ssub.s32 %s18, %s25
      %p163 = scmp.eq.s32.totalorder %s162, 0
      %s165 = sadd.s32 %s164, 1
      %s166 = scalar_select %p163, %s164, %s165
      %p169 = pneg %p163
      %p170 = scmp.eq.s32.totalorder %s18, 1
      %p171 = por %p169, %p170
      %p172 = scmp.ne.s32.totalorder %s164, %s167
      %p173 = scmp.eq.s32.totalorder %s18, 0
      %p174 = por %p172, %p173
      %p175 = scmp.ne.s32.totalorder %s164, %s167
      %p176 = scmp.eq.s32.totalorder %s23, 1
      %p177 = por %p175, %p176
      %p178 = scmp.ne.s32.totalorder %s167, %s168
      %p179 = scmp.eq.s32.totalorder %s23, 0
      %p180 = por %p178, %p179
      %p181 = scmp.ne.s32.totalorder %s167, %s168
      %p182 = scmp.eq.s32.totalorder %s24, 1
      %p183 = por %p181, %p182
      %p185 = scmp.ne.s32.totalorder %s168, %s184
      %p186 = scmp.eq.s32.totalorder %s24, 0
      %p187 = por %p185, %p186
      %p188 = scmp.le.s32.totalorder 1, %s18
      %p189 = scmp.lt.s32.totalorder %s18, 3
      %p190 = pnand %p188, %p189
      %p191 = pneg %p190
      // Predicated region
      $region9: #{tpu_custom_call.1} parent=5 // pred_check
        _
      $region10: #{tpu_custom_call.1} parent=5 // pred_check_branch
        %193 = sbr.rel (%p190) target = $region12
      $region11: #{tpu_custom_call.1} parent=5 // pred_region
        %s194 = ssub.s32 %s18, 1
        // Predicated region
        $region13: #{tpu_custom_call.1} parent=11 // pred_check
          %p195 = pneg %p91
        $region14: #{tpu_custom_call.1} parent=11 // pred_check_branch
          %197 = sbr.rel (%p195) target = $region16
        $region15: #{tpu_custom_call.1} parent=11 // pred_region
          %s199 = ssub.s32 2048, 2048
          %200 = vsyncadd [#allocation3], %s199
          %s201 = sshll.u32 [#allocation2], 4
          %s202 = int_to_ptr.vmem [resolvable:$true] %s201
          %207 = dma.hbm_to_vmem [thread:$0]  %s2, 2048, %s202, [#allocation3], 128, 128, 8
        $region16: #{tpu_custom_call.1} parent=11 // pred_fallthru
          _
        // Predicated region
        $region17: #{tpu_custom_call.1} parent=11 // pred_check
          %p208 = pneg %p112
        $region18: #{tpu_custom_call.1} parent=11 // pred_check_branch
          %210 = sbr.rel (%p208) target = $region20
        $region19: #{tpu_custom_call.1} parent=11 // pred_region
          %s212 = ssub.s32 2048, 2048
          %213 = vsyncadd [#allocation6], %s212
          %s214 = sshll.u32 [#allocation5], 4
          %s215 = int_to_ptr.vmem [resolvable:$true] %s214
          %220 = dma.hbm_to_vmem [thread:$0]  %s3, 2048, %s215, [#allocation6], 128, 128, 8
        $region20: #{tpu_custom_call.1} parent=11 // pred_fallthru
          _
        // Predicated region
        $region21: #{tpu_custom_call.1} parent=11 // pred_check
          %p221 = pneg %p133
        $region22: #{tpu_custom_call.1} parent=11 // pred_check_branch
          %223 = sbr.rel (%p221) target = $region24
        $region23: #{tpu_custom_call.1} parent=11 // pred_region
          %s225 = ssub.s32 4096, 4096
          %226 = vsyncadd [#allocation6], %s225
          %s227 = sshll.u32 [#allocation7], 4
          %s228 = int_to_ptr.vmem [resolvable:$true] %s227
          %233 = dma.hbm_to_vmem [thread:$0]  %s4, 4096, %s228, [#allocation6], 256, 256, 16
        $region24: #{tpu_custom_call.1} parent=11 // pred_fallthru
          _
        // Predicated region
        $region25: #{tpu_custom_call.1} parent=11 // pred_check
          %p234 = pneg %p154
        $region26: #{tpu_custom_call.1} parent=11 // pred_check_branch
          %236 = sbr.rel (%p234) target = $region28
        $region27: #{tpu_custom_call.1} parent=11 // pred_region
          %s238 = ssub.s32 4096, 4096
          %239 = vsyncadd [#allocation9], %s238
          %s240 = sshll.u32 [#allocation8], 4
          %s241 = int_to_ptr.vmem [resolvable:$true] %s240
          %246 = dma.hbm_to_vmem [thread:$0]  %s5, 4096, %s241, [#allocation9], 128, 128, 8
        $region28: #{tpu_custom_call.1} parent=11 // pred_fallthru
          _
      $region12: #{tpu_custom_call.1} parent=5 // pred_fallthru
        _
      %p247 = scmp.lt.s32.totalorder %s18, 2
      // Predicated region
      $region29: #{tpu_custom_call.1} parent=5 // pred_check
        %p248 = pneg %p247
      $region30: #{tpu_custom_call.1} parent=5 // pred_check_branch
        %250 = sbr.rel (%p248) target = $region32
      $region31: #{tpu_custom_call.1} parent=5 // pred_region
        // Predicated region
        $region33: #{tpu_custom_call.1} parent=31 // pred_check
          %p251 = pneg %p38
        $region34: #{tpu_custom_call.1} parent=31 // pred_check_branch
          %253 = sbr.rel (%p251) target = $region36
        $region35: #{tpu_custom_call.1} parent=31 // pred_region
          %p254 = scmp.lt.s32.totalorder %s18, 1
          %s255 = scalar_select %p254, %s18, 1
          %s256 = smul.addr %s255, 8
          %s257 = scalar_lea.vmem %s0, %s256
        $region36: #{tpu_custom_call.1} parent=31 // pred_fallthru
          _
        // Predicated region
        $region37: #{tpu_custom_call.1} parent=31 // pred_check
          %p258 = pneg %p64
        $region38: #{tpu_custom_call.1} parent=31 // pred_check_branch
          %260 = sbr.rel (%p258) target = $region40
        $region39: #{tpu_custom_call.1} parent=31 // pred_region
          %p261 = scmp.lt.s32.totalorder %s18, 1
          %s262 = scalar_select %p261, %s18, 1
          %s263 = smul.addr %s262, 8
          %s264 = scalar_lea.vmem %s1, %s263
        $region40: #{tpu_custom_call.1} parent=31 // pred_fallthru
          _
      $region32: #{tpu_custom_call.1} parent=5 // pred_fallthru
        _
      %p265 = scmp.le.s32.totalorder 1, %s18
      %p266 = scmp.lt.s32.totalorder %s18, 3
      %p267 = pnand %p265, %p266
      %p268 = pneg %p267
      // Predicated region
      $region41: #{tpu_custom_call.1} parent=5 // pred_check
        _
      $region42: #{tpu_custom_call.1} parent=5 // pred_check_branch
        %270 = sbr.rel (%p267) target = $region44
      $region43: #{tpu_custom_call.1} parent=5 // pred_region
        %s271 = ssub.s32 %s18, 1
        // Predicated region
        $region45: #{tpu_custom_call.1} parent=43 // pred_check
          %p272 = pneg %p91
        $region46: #{tpu_custom_call.1} parent=43 // pred_check_branch
          %274 = sbr.rel (%p272) target = $region48
        $region47: #{tpu_custom_call.1} parent=43 // pred_region
          %275 = dma.done [#allocation3], 2048
        $region48: #{tpu_custom_call.1} parent=43 // pred_fallthru
          _
        // Predicated region
        $region49: #{tpu_custom_call.1} parent=43 // pred_check
          %p276 = pneg %p112
        $region50: #{tpu_custom_call.1} parent=43 // pred_check_branch
          %278 = sbr.rel (%p276) target = $region52
        $region51: #{tpu_custom_call.1} parent=43 // pred_region
          %279 = dma.done [#allocation6], 2048
        $region52: #{tpu_custom_call.1} parent=43 // pred_fallthru
          _
        // Predicated region
        $region53: #{tpu_custom_call.1} parent=43 // pred_check
          %p280 = pneg %p133
        $region54: #{tpu_custom_call.1} parent=43 // pred_check_branch
          %282 = sbr.rel (%p280) target = $region56
        $region55: #{tpu_custom_call.1} parent=43 // pred_region
          %283 = dma.done [#allocation6], 4096
        $region56: #{tpu_custom_call.1} parent=43 // pred_fallthru
          _
        // Predicated region
        $region57: #{tpu_custom_call.1} parent=43 // pred_check
          %p284 = pneg %p154
        $region58: #{tpu_custom_call.1} parent=43 // pred_check_branch
          %286 = sbr.rel (%p284) target = $region60
        $region59: #{tpu_custom_call.1} parent=43 // pred_region
          %287 = dma.done [#allocation9], 4096
        $region60: #{tpu_custom_call.1} parent=43 // pred_fallthru
          _
        %p288 = scmp.lt.s32.totalorder %s23, 1
        %s289 = scalar_select %p288, %s23, 1
        %s290 = smul.addr %s289, 8
        %s291 = scalar_lea.vmem %s0, %s290
        %p292 = pneg %p44
        %p293 = pneg %p41
        %p294 = scmp.lt.s32.totalorder %s23, 1
        %s295 = scalar_select %p294, %s23, 1
        %s296 = smul.addr %s295, 8
        %s297 = scalar_lea.vmem %s1, %s296
        %p298 = pneg %p70
        %p299 = pneg %p67
        %p300 = pneg %p91
        %p301 = pneg %p88
        %p302 = pneg %p112
        %p303 = pneg %p109
        %p304 = pneg %p133
        %p305 = pneg %p130
        %p306 = pneg %p154
        %p307 = pneg %p151
        %p308 = pneg %p180
        %p309 = pneg %p177
        %s310 = sand.u32 %s167, 1
        %s311 = scalar_lea.sflag [#allocation4], %s310
        %s312 = sand.u32 %s167, 1
        %s313 = smul.addr %s312, 8
        %s314 = scalar_lea.vmem [#allocation10], %s313
        %p315 = scmp.lt.s32.totalorder %s23, 1
        %s316 = scalar_select %p315, %s23, 1
        %s317 = smul.addr %s316, 8
        %s318 = scalar_lea.vmem %s0, %s317
        %p319 = scmp.lt.s32.totalorder %s23, 1
        %s320 = scalar_select %p319, %s23, 1
        %s321 = smul.addr %s320, 8
        %s322 = scalar_lea.vmem %s1, %s321
        %v323 = vld [vmem:[%s318] sm:$0xff]
        %v324 = vld [vmem:[%s322] sm:$0xff]
        %v325 = vld [vmem:[#allocation2] sm:$0xff]
        %v326 = vld [vmem:[#allocation2 + $0x8] sm:$0xff]
        %v327 = vld [vmem:[#allocation2 + $0x10] sm:$0xff]
        %v328 = vld [vmem:[#allocation2 + $0x18] sm:$0xff]
        %v329 = vld [vmem:[#allocation2 + $0x20] sm:$0xff]
        %v330 = vld [vmem:[#allocation2 + $0x28] sm:$0xff]
        %v331 = vld [vmem:[#allocation2 + $0x30] sm:$0xff]
        %v332 = vld [vmem:[#allocation2 + $0x38] sm:$0xff]
        %v333 = vld [vmem:[#allocation2 + $0x40] sm:$0xff]
        %v334 = vld [vmem:[#allocation2 + $0x48] sm:$0xff]
        %v335 = vld [vmem:[#allocation2 + $0x50] sm:$0xff]
        %v336 = vld [vmem:[#allocation2 + $0x58] sm:$0xff]
        %v337 = vld [vmem:[#allocation2 + $0x60] sm:$0xff]
        %v338 = vld [vmem:[#allocation2 + $0x68] sm:$0xff]
        %v339 = vld [vmem:[#allocation2 + $0x70] sm:$0xff]
        %v340 = vld [vmem:[#allocation2 + $0x78] sm:$0xff]
        %341 = vmatprep.subr.mxu0 0.0
        %342 = vmatpush1.msra.mxu0 %v325
        %343 = vmatprep.subr.mxu0 0.0
        %344 = vmatpush1.msra.mxu0 %v326
        %345 = vmatprep.subr.mxu0 0.0
        %346 = vmatpush1.msra.mxu0 %v327
        %347 = vmatprep.subr.mxu0 0.0
        %348 = vmatpush1.msra.mxu0 %v328
        %349 = vmatprep.subr.mxu0 0.0
        %350 = vmatpush1.msra.mxu0 %v329
        %351 = vmatprep.subr.mxu0 0.0
        %352 = vmatpush1.msra.mxu0 %v330
        %353 = vmatprep.subr.mxu0 0.0
        %354 = vmatpush1.msra.mxu0 %v331
        %355 = vmatprep.subr.mxu0 0.0
        %356 = vmatpush1.msra.mxu0 %v332
        %357 = vmatprep.subr.mxu0 0.0
        %358 = vmatpush1.msra.mxu0 %v333
        %359 = vmatprep.subr.mxu0 0.0
        %360 = vmatpush1.msra.mxu0 %v334
        %361 = vmatprep.subr.mxu0 0.0
        %362 = vmatpush1.msra.mxu0 %v335
        %363 = vmatprep.subr.mxu0 0.0
        %364 = vmatpush1.msra.mxu0 %v336
        %365 = vmatprep.subr.mxu0 0.0
        %366 = vmatpush1.msra.mxu0 %v337
        %367 = vmatprep.subr.mxu0 0.0
        %368 = vmatpush1.msra.mxu0 %v338
        %369 = vmatprep.subr.mxu0 0.0
        %370 = vmatpush1.msra.mxu0 %v339
        %371 = vmatprep.subr.mxu0 0.0
        %372 = vmatpush1.msra.mxu0 %v340
        %373 = vmatprep.subr.mxu0 0.0
        %374 = vmatpush1.msra.mxu0 0.0
        %375 = vmatprep.subr.mxu0 0.0
        %376 = vmatpush1.msra.mxu0 0.0
        %377 = vmatprep.subr.mxu0 0.0
        %378 = vmatpush1.msra.mxu0 0.0
        %379 = vmatprep.subr.mxu0 0.0
        %380 = vmatpush1.msra.mxu0 0.0
        %381 = vmatprep.subr.mxu0 0.0
        %382 = vmatpush1.msra.mxu0 0.0
        %383 = vmatprep.subr.mxu0 0.0
        %384 = vmatpush1.msra.mxu0 0.0
        %385 = vmatprep.subr.mxu0 0.0
        %386 = vmatpush1.msra.mxu0 0.0
        %387 = vmatprep.subr.mxu0 0.0
        %388 = vmatpush1.msra.mxu0 0.0
        %389 = vmatprep.subr.mxu0 0.0
        %390 = vmatpush1.msra.mxu0 0.0
        %391 = vmatprep.subr.mxu0 0.0
        %392 = vmatpush1.msra.mxu0 0.0
        %393 = vmatprep.subr.mxu0 0.0
        %394 = vmatpush1.msra.mxu0 0.0
        %395 = vmatprep.subr.mxu0 0.0
        %396 = vmatpush1.msra.mxu0 0.0
        %397 = vmatprep.subr.mxu0 0.0
        %398 = vmatpush1.msra.mxu0 0.0
        %399 = vmatprep.subr.mxu0 0.0
        %400 = vmatpush1.msra.mxu0 0.0
        %401 = vmatprep.subr.mxu0 0.0
        %402 = vmatpush1.msra.mxu0 0.0
        %403 = vmatprep.subr.mxu0 0.0
        %404 = vmatpush1.msra.mxu0 0.0
        %405 = vmatprep.mubr.f32.mxu0 0.0
        %406 = vmatmul.mubr.f32.gmra.mrb[0].mxu0 %v323
        %v407 = vpop.f32.mrb[0].mxu0
        %v408 = vadd.f32 0.0, %v407
        %v409 = vpop.f32.mrb[0].mxu0
        %410 = vdwg.mxu0
        %v411 = vld [vmem:[#allocation5] sm:$0xff]
        %v412 = vld [vmem:[#allocation5 + $0x8] sm:$0xff]
        %v413 = vld [vmem:[#allocation5 + $0x10] sm:$0xff]
        %v414 = vld [vmem:[#allocation5 + $0x18] sm:$0xff]
        %v415 = vld [vmem:[#allocation5 + $0x20] sm:$0xff]
        %v416 = vld [vmem:[#allocation5 + $0x28] sm:$0xff]
        %v417 = vld [vmem:[#allocation5 + $0x30] sm:$0xff]
        %v418 = vld [vmem:[#allocation5 + $0x38] sm:$0xff]
        %v419 = vld [vmem:[#allocation5 + $0x40] sm:$0xff]
        %v420 = vld [vmem:[#allocation5 + $0x48] sm:$0xff]
        %v421 = vld [vmem:[#allocation5 + $0x50] sm:$0xff]
        %v422 = vld [vmem:[#allocation5 + $0x58] sm:$0xff]
        %v423 = vld [vmem:[#allocation5 + $0x60] sm:$0xff]
        %v424 = vld [vmem:[#allocation5 + $0x68] sm:$0xff]
        %v425 = vld [vmem:[#allocation5 + $0x70] sm:$0xff]
        %v426 = vld [vmem:[#allocation5 + $0x78] sm:$0xff]
        %427 = vmatprep.subr.mxu0 0.0
        %428 = vmatpush1.msra.mxu0 %v411
        %429 = vmatprep.subr.mxu0 0.0
        %430 = vmatpush1.msra.mxu0 %v412
        %431 = vmatprep.subr.mxu0 0.0
        %432 = vmatpush1.msra.mxu0 %v413
        %433 = vmatprep.subr.mxu0 0.0
        %434 = vmatpush1.msra.mxu0 %v414
        %435 = vmatprep.subr.mxu0 0.0
        %436 = vmatpush1.msra.mxu0 %v415
        %437 = vmatprep.subr.mxu0 0.0
        %438 = vmatpush1.msra.mxu0 %v416
        %439 = vmatprep.subr.mxu0 0.0
        %440 = vmatpush1.msra.mxu0 %v417
        %441 = vmatprep.subr.mxu0 0.0
        %442 = vmatpush1.msra.mxu0 %v418
        %443 = vmatprep.subr.mxu0 0.0
        %444 = vmatpush1.msra.mxu0 %v419
        %445 = vmatprep.subr.mxu0 0.0
        %446 = vmatpush1.msra.mxu0 %v420
        %447 = vmatprep.subr.mxu0 0.0
        %448 = vmatpush1.msra.mxu0 %v421
        %449 = vmatprep.subr.mxu0 0.0
        %450 = vmatpush1.msra.mxu0 %v422
        %451 = vmatprep.subr.mxu0 0.0
        %452 = vmatpush1.msra.mxu0 %v423
        %453 = vmatprep.subr.mxu0 0.0
        %454 = vmatpush1.msra.mxu0 %v424
        %455 = vmatprep.subr.mxu0 0.0
        %456 = vmatpush1.msra.mxu0 %v425
        %457 = vmatprep.subr.mxu0 0.0
        %458 = vmatpush1.msra.mxu0 %v426
        %459 = vmatprep.subr.mxu0 0.0
        %460 = vmatpush1.msra.mxu0 0.0
        %461 = vmatprep.subr.mxu0 0.0
        %462 = vmatpush1.msra.mxu0 0.0
        %463 = vmatprep.subr.mxu0 0.0
        %464 = vmatpush1.msra.mxu0 0.0
        %465 = vmatprep.subr.mxu0 0.0
        %466 = vmatpush1.msra.mxu0 0.0
        %467 = vmatprep.subr.mxu0 0.0
        %468 = vmatpush1.msra.mxu0 0.0
        %469 = vmatprep.subr.mxu0 0.0
        %470 = vmatpush1.msra.mxu0 0.0
        %471 = vmatprep.subr.mxu0 0.0
        %472 = vmatpush1.msra.mxu0 0.0
        %473 = vmatprep.subr.mxu0 0.0
        %474 = vmatpush1.msra.mxu0 0.0
        %475 = vmatprep.subr.mxu0 0.0
        %476 = vmatpush1.msra.mxu0 0.0
        %477 = vmatprep.subr.mxu0 0.0
        %478 = vmatpush1.msra.mxu0 0.0
        %479 = vmatprep.subr.mxu0 0.0
        %480 = vmatpush1.msra.mxu0 0.0
        %481 = vmatprep.subr.mxu0 0.0
        %482 = vmatpush1.msra.mxu0 0.0
        %483 = vmatprep.subr.mxu0 0.0
        %484 = vmatpush1.msra.mxu0 0.0
        %485 = vmatprep.subr.mxu0 0.0
        %486 = vmatpush1.msra.mxu0 0.0
        %487 = vmatprep.subr.mxu0 0.0
        %488 = vmatpush1.msra.mxu0 0.0
        %489 = vmatprep.subr.mxu0 0.0
        %490 = vmatpush1.msra.mxu0 0.0
        %491 = vmatprep.mubr.f32.mxu0 0.0
        %492 = vmatmul.mubr.f32.gmra.mrb[0].mxu0 %v323
        %v493 = vpop.f32.mrb[0].mxu0
        %v494 = vadd.f32 0.0, %v493
        %v495 = vpop.f32.mrb[0].mxu0
        %496 = vdwg.mxu0
        %v497 = vld [vmem:[#allocation7] sm:$0xff]
        %v498 = vld [vmem:[#allocation7 + $0x8] sm:$0xff]
        %v499 = vld [vmem:[#allocation7 + $0x10] sm:$0xff]
        %v500 = vld [vmem:[#allocation7 + $0x18] sm:$0xff]
        %v501 = vld [vmem:[#allocation7 + $0x20] sm:$0xff]
        %v502 = vld [vmem:[#allocation7 + $0x28] sm:$0xff]
        %v503 = vld [vmem:[#allocation7 + $0x30] sm:$0xff]
        %v504 = vld [vmem:[#allocation7 + $0x38] sm:$0xff]
        %v505 = vld [vmem:[#allocation7 + $0x40] sm:$0xff]
        %v506 = vld [vmem:[#allocation7 + $0x48] sm:$0xff]
        %v507 = vld [vmem:[#allocation7 + $0x50] sm:$0xff]
        %v508 = vld [vmem:[#allocation7 + $0x58] sm:$0xff]
        %v509 = vld [vmem:[#allocation7 + $0x60] sm:$0xff]
        %v510 = vld [vmem:[#allocation7 + $0x68] sm:$0xff]
        %v511 = vld [vmem:[#allocation7 + $0x70] sm:$0xff]
        %v512 = vld [vmem:[#allocation7 + $0x78] sm:$0xff]
        %v513 = vld [vmem:[#allocation7 + $0x80] sm:$0xff]
        %v514 = vld [vmem:[#allocation7 + $0x88] sm:$0xff]
        %v515 = vld [vmem:[#allocation7 + $0x90] sm:$0xff]
        %v516 = vld [vmem:[#allocation7 + $0x98] sm:$0xff]
        %v517 = vld [vmem:[#allocation7 + $0xa0] sm:$0xff]
        %v518 = vld [vmem:[#allocation7 + $0xa8] sm:$0xff]
        %v519 = vld [vmem:[#allocation7 + $0xb0] sm:$0xff]
        %v520 = vld [vmem:[#allocation7 + $0xb8] sm:$0xff]
        %v521 = vld [vmem:[#allocation7 + $0xc0] sm:$0xff]
        %v522 = vld [vmem:[#allocation7 + $0xc8] sm:$0xff]
        %v523 = vld [vmem:[#allocation7 + $0xd0] sm:$0xff]
        %v524 = vld [vmem:[#allocation7 + $0xd8] sm:$0xff]
        %v525 = vld [vmem:[#allocation7 + $0xe0] sm:$0xff]
        %v526 = vld [vmem:[#allocation7 + $0xe8] sm:$0xff]
        %v527 = vld [vmem:[#allocation7 + $0xf0] sm:$0xff]
        %v528 = vld [vmem:[#allocation7 + $0xf8] sm:$0xff]
        %529 = vmatprep.subr.mxu0 %v498
        %530 = vmatpush1.msra.mxu0 %v497
        %531 = vmatprep.subr.mxu0 %v500
        %532 = vmatpush1.msra.mxu0 %v499
        %533 = vmatprep.subr.mxu0 %v502
        %534 = vmatpush1.msra.mxu0 %v501
        %535 = vmatprep.subr.mxu0 %v504
        %536 = vmatpush1.msra.mxu0 %v503
        %537 = vmatprep.subr.mxu0 %v506
        %538 = vmatpush1.msra.mxu0 %v505
        %539 = vmatprep.subr.mxu0 %v508
        %540 = vmatpush1.msra.mxu0 %v507
        %541 = vmatprep.subr.mxu0 %v510
        %542 = vmatpush1.msra.mxu0 %v509
        %543 = vmatprep.subr.mxu0 %v512
        %544 = vmatpush1.msra.mxu0 %v511
        %545 = vmatprep.subr.mxu0 %v514
        %546 = vmatpush1.msra.mxu0 %v513
        %547 = vmatprep.subr.mxu0 %v516
        %548 = vmatpush1.msra.mxu0 %v515
        %549 = vmatprep.subr.mxu0 %v518
        %550 = vmatpush1.msra.mxu0 %v517
        %551 = vmatprep.subr.mxu0 %v520
        %552 = vmatpush1.msra.mxu0 %v519
        %553 = vmatprep.subr.mxu0 %v522
        %554 = vmatpush1.msra.mxu0 %v521
        %555 = vmatprep.subr.mxu0 %v524
        %556 = vmatpush1.msra.mxu0 %v523
        %557 = vmatprep.subr.mxu0 %v526
        %558 = vmatpush1.msra.mxu0 %v525
        %559 = vmatprep.subr.mxu0 %v528
        %560 = vmatpush1.msra.mxu0 %v527
        %561 = vmatprep.subr.mxu0 0.0
        %562 = vmatpush1.msra.mxu0 0.0
        %563 = vmatprep.subr.mxu0 0.0
        %564 = vmatpush1.msra.mxu0 0.0
        %565 = vmatprep.subr.mxu0 0.0
        %566 = vmatpush1.msra.mxu0 0.0
        %567 = vmatprep.subr.mxu0 0.0
        %568 = vmatpush1.msra.mxu0 0.0
        %569 = vmatprep.subr.mxu0 0.0
        %570 = vmatpush1.msra.mxu0 0.0
        %571 = vmatprep.subr.mxu0 0.0
        %572 = vmatpush1.msra.mxu0 0.0
        %573 = vmatprep.subr.mxu0 0.0
        %574 = vmatpush1.msra.mxu0 0.0
        %575 = vmatprep.subr.mxu0 0.0
        %576 = vmatpush1.msra.mxu0 0.0
        %577 = vmatprep.subr.mxu0 0.0
        %578 = vmatpush1.msra.mxu0 0.0
        %579 = vmatprep.subr.mxu0 0.0
        %580 = vmatpush1.msra.mxu0 0.0
        %581 = vmatprep.subr.mxu0 0.0
        %582 = vmatpush1.msra.mxu0 0.0
        %583 = vmatprep.subr.mxu0 0.0
        %584 = vmatpush1.msra.mxu0 0.0
        %585 = vmatprep.subr.mxu0 0.0
        %586 = vmatpush1.msra.mxu0 0.0
        %587 = vmatprep.subr.mxu0 0.0
        %588 = vmatpush1.msra.mxu0 0.0
        %589 = vmatprep.subr.mxu0 0.0
        %590 = vmatpush1.msra.mxu0 0.0
        %591 = vmatprep.subr.mxu0 0.0
        %592 = vmatpush1.msra.mxu0 0.0
        %593 = vmatprep.mubr.f32.mxu0 0.0
        %594 = vmatmul.mubr.f32.gmra.mrb[0].mxu0 %v323
        %v595 = vpop.f32.mrb[0].mxu0
        %v596 = vadd.f32 0.0, %v595
        %v597 = vpop.f32.mrb[0].mxu0
        %v598 = vadd.f32 0.0, %v597
        %599 = vdwg.mxu0
        %601 = vrot.lane.b32.xlu0 %v494, 96
        %v602 = vpop.permute.xlu0 %601
        %604 = vrot.lane.b32.xlu0 %v494, 64
        %v605 = vpop.permute.xlu0 %604
        %607 = vrot.lane.b32.xlu0 %v494, 32
        %v608 = vpop.permute.xlu0 %607
        %v610 = vcombine.low %v494, %v605
        %v611 = vcombine.high %v494, %v605
        %v613 = vunpack.c.l.s4 1983009808
        %v614 = vunpack.c.0.s8 %v613
        %v615 = vlaneseq
        %v616 = vshrl.u32 %v615, 7
        %v617 = vsub.s32 %v614, %v616
        %v618 = vrot.slane %v610, %v617
        %v620 = vunpack.c.l.s4 1983009808
        %v621 = vunpack.c.0.s8 %v620
        %v622 = vlaneseq
        %v623 = vshrl.u32 %v622, 7
        %v624 = vsub.s32 %v621, %v623
        %v625 = vrot.slane %v611, %v624
        %v626 = vcombine.low %v602, %v608
        %v627 = vcombine.high %v602, %v608
        %v629 = vunpack.c.l.s4 1983009808
        %v630 = vunpack.c.0.s8 %v629
        %v631 = vlaneseq
        %v632 = vshrl.u32 %v631, 7
        %v633 = vsub.s32 %v630, %v632
        %v634 = vrot.slane %v626, %v633
        %v636 = vunpack.c.l.s4 1983009808
        %v637 = vunpack.c.0.s8 %v636
        %v638 = vlaneseq
        %v639 = vshrl.u32 %v638, 7
        %v640 = vsub.s32 %v637, %v639
        %v641 = vrot.slane %v627, %v640
        %v642 = vcombine.low %v618, %v634
        %v643 = vcombine.high %v618, %v634
        %v645 = vunpack.c.l.s4 1934713408
        %v646 = vunpack.c.0.s8 %v645
        %v647 = vlaneseq
        %v648 = vshrl.u32 %v647, 7
        %v649 = vsub.s32 %v646, %v648
        %v650 = vrot.slane %v642, %v649
        %v652 = vunpack.c.l.s4 1934713408
        %v653 = vunpack.c.0.s8 %v652
        %v654 = vlaneseq
        %v655 = vshrl.u32 %v654, 7
        %v656 = vsub.s32 %v653, %v655
        %v657 = vrot.slane %v643, %v656
        %v658 = vcombine.low %v625, %v641
        %v659 = vcombine.high %v625, %v641
        %v661 = vunpack.c.l.s4 1934713408
        %v662 = vunpack.c.0.s8 %v661
        %v663 = vlaneseq
        %v664 = vshrl.u32 %v663, 7
        %v665 = vsub.s32 %v662, %v664
        %v666 = vrot.slane %v658, %v665
        %v668 = vunpack.c.l.s4 1934713408
        %v669 = vunpack.c.0.s8 %v668
        %v670 = vlaneseq
        %v671 = vshrl.u32 %v670, 7
        %v672 = vsub.s32 %v669, %v671
        %v673 = vrot.slane %v659, %v672
        %v674 = vcombine.high %v650, 0.0
        %v675 = vcombine.high %v657, 0.0
        %v676 = vcombine.high %v666, 0.0
        %v677 = vcombine.high %v673, 0.0
        %679 = vrot.lane.b32.xlu0 %v408, 96
        %v680 = vpop.permute.xlu0 %679
        %682 = vrot.lane.b32.xlu0 %v408, 64
        %v683 = vpop.permute.xlu0 %682
        %685 = vrot.lane.b32.xlu0 %v408, 32
        %v686 = vpop.permute.xlu0 %685
        %v688 = vcombine.low %v408, %v683
        %v689 = vcombine.high %v408, %v683
        %v691 = vunpack.c.l.s4 1983009808
        %v692 = vunpack.c.0.s8 %v691
        %v693 = vlaneseq
        %v694 = vshrl.u32 %v693, 7
        %v695 = vsub.s32 %v692, %v694
        %v696 = vrot.slane %v688, %v695
        %v698 = vunpack.c.l.s4 1983009808
        %v699 = vunpack.c.0.s8 %v698
        %v700 = vlaneseq
        %v701 = vshrl.u32 %v700, 7
        %v702 = vsub.s32 %v699, %v701
        %v703 = vrot.slane %v689, %v702
        %v704 = vcombine.low %v680, %v686
        %v705 = vcombine.high %v680, %v686
        %v707 = vunpack.c.l.s4 1983009808
        %v708 = vunpack.c.0.s8 %v707
        %v709 = vlaneseq
        %v710 = vshrl.u32 %v709, 7
        %v711 = vsub.s32 %v708, %v710
        %v712 = vrot.slane %v704, %v711
        %v714 = vunpack.c.l.s4 1983009808
        %v715 = vunpack.c.0.s8 %v714
        %v716 = vlaneseq
        %v717 = vshrl.u32 %v716, 7
        %v718 = vsub.s32 %v715, %v717
        %v719 = vrot.slane %v705, %v718
        %v720 = vcombine.low %v696, %v712
        %v721 = vcombine.high %v696, %v712
        %v723 = vunpack.c.l.s4 1934713408
        %v724 = vunpack.c.0.s8 %v723
        %v725 = vlaneseq
        %v726 = vshrl.u32 %v725, 7
        %v727 = vsub.s32 %v724, %v726
        %v728 = vrot.slane %v720, %v727
        %v730 = vunpack.c.l.s4 1934713408
        %v731 = vunpack.c.0.s8 %v730
        %v732 = vlaneseq
        %v733 = vshrl.u32 %v732, 7
        %v734 = vsub.s32 %v731, %v733
        %v735 = vrot.slane %v721, %v734
        %v736 = vcombine.low %v703, %v719
        %v737 = vcombine.high %v703, %v719
        %v739 = vunpack.c.l.s4 1934713408
        %v740 = vunpack.c.0.s8 %v739
        %v741 = vlaneseq
        %v742 = vshrl.u32 %v741, 7
        %v743 = vsub.s32 %v740, %v742
        %v744 = vrot.slane %v736, %v743
        %v746 = vunpack.c.l.s4 1934713408
        %v747 = vunpack.c.0.s8 %v746
        %v748 = vlaneseq
        %v749 = vshrl.u32 %v748, 7
        %v750 = vsub.s32 %v747, %v749
        %v751 = vrot.slane %v737, %v750
        %v752 = vcombine.high %v728, 0.0
        %v753 = vcombine.high %v735, 0.0
        %v754 = vcombine.high %v744, 0.0
        %v755 = vcombine.high %v751, 0.0
        %757 = vrot.lane.b32.xlu0 %v596, 64
        %v758 = vpop.permute.xlu0 %757
        %761 = vrot.lane.b32.xlu0 %v598, 64
        %v762 = vpop.permute.xlu0 %761
        %v764 = vcombine.low %v596, %v598
        %v765 = vcombine.high %v596, %v598
        %v767 = vunpack.c.l.s4 1983009808
        %v768 = vunpack.c.0.s8 %v767
        %v769 = vlaneseq
        %v770 = vshrl.u32 %v769, 7
        %v771 = vsub.s32 %v768, %v770
        %v772 = vrot.slane %v764, %v771
        %v774 = vunpack.c.l.s4 1983009808
        %v775 = vunpack.c.0.s8 %v774
        %v776 = vlaneseq
        %v777 = vshrl.u32 %v776, 7
        %v778 = vsub.s32 %v775, %v777
        %v779 = vrot.slane %v765, %v778
        %v780 = vcombine.low %v758, %v762
        %v781 = vcombine.high %v758, %v762
        %v783 = vunpack.c.l.s4 1983009808
        %v784 = vunpack.c.0.s8 %v783
        %v785 = vlaneseq
        %v786 = vshrl.u32 %v785, 7
        %v787 = vsub.s32 %v784, %v786
        %v788 = vrot.slane %v780, %v787
        %v790 = vunpack.c.l.s4 1983009808
        %v791 = vunpack.c.0.s8 %v790
        %v792 = vlaneseq
        %v793 = vshrl.u32 %v792, 7
        %v794 = vsub.s32 %v791, %v793
        %v795 = vrot.slane %v781, %v794
        %v796 = vcombine.low %v772, %v788
        %v797 = vcombine.high %v772, %v788
        %v799 = vunpack.c.l.s4 1934713408
        %v800 = vunpack.c.0.s8 %v799
        %v801 = vlaneseq
        %v802 = vshrl.u32 %v801, 7
        %v803 = vsub.s32 %v800, %v802
        %v804 = vrot.slane %v796, %v803
        %v806 = vunpack.c.l.s4 1934713408
        %v807 = vunpack.c.0.s8 %v806
        %v808 = vlaneseq
        %v809 = vshrl.u32 %v808, 7
        %v810 = vsub.s32 %v807, %v809
        %v811 = vrot.slane %v797, %v810
        %v812 = vcombine.low %v779, %v795
        %v813 = vcombine.high %v779, %v795
        %v815 = vunpack.c.l.s4 1934713408
        %v816 = vunpack.c.0.s8 %v815
        %v817 = vlaneseq
        %v818 = vshrl.u32 %v817, 7
        %v819 = vsub.s32 %v816, %v818
        %v820 = vrot.slane %v812, %v819
        %v822 = vunpack.c.l.s4 1934713408
        %v823 = vunpack.c.0.s8 %v822
        %v824 = vlaneseq
        %v825 = vshrl.u32 %v824, 7
        %v826 = vsub.s32 %v823, %v825
        %v827 = vrot.slane %v813, %v826
        %v828 = vcombine.high %v804, 0.0
        %v829 = vcombine.high %v811, 0.0
        %v830 = vcombine.high %v820, 0.0
        %v831 = vcombine.high %v827, 0.0
        %vm832 = vcmask 130048
        %v834 = vsel %vm832, %v650, 0
        %v837 = vsel %vm832, %v728, 0
        %839 = vmatprep.subr.mxu0 0.0
        %840 = vmatpush1.xpose.msra.mxu0 %v837
        %841 = vmatprep.subr.mxu0 0.0
        %842 = vmatpush1.xpose.msra.mxu0 0.0
        %843 = vmatprep.subr.mxu0 0.0
        %844 = vmatpush1.xpose.msra.mxu0 0.0
        %845 = vmatprep.subr.mxu0 0.0
        %846 = vmatpush1.xpose.msra.mxu0 0.0
        %847 = vmatprep.subr.mxu0 0.0
        %848 = vmatpush1.xpose.msra.mxu0 0.0
        %849 = vmatprep.subr.mxu0 0.0
        %850 = vmatpush1.xpose.msra.mxu0 0.0
        %851 = vmatprep.subr.mxu0 0.0
        %852 = vmatpush1.xpose.msra.mxu0 0.0
        %853 = vmatprep.subr.mxu0 0.0
        %854 = vmatpush1.xpose.msra.mxu0 0.0
        %855 = vmatprep.subr.mxu0 0.0
        %856 = vmatpush1.xpose.msra.mxu0 0.0
        %857 = vmatprep.subr.mxu0 0.0
        %858 = vmatpush1.xpose.msra.mxu0 0.0
        %859 = vmatprep.subr.mxu0 0.0
        %860 = vmatpush1.xpose.msra.mxu0 0.0
        %861 = vmatprep.subr.mxu0 0.0
        %862 = vmatpush1.xpose.msra.mxu0 0.0
        %863 = vmatprep.subr.mxu0 0.0
        %864 = vmatpush1.xpose.msra.mxu0 0.0
        %865 = vmatprep.subr.mxu0 0.0
        %866 = vmatpush1.xpose.msra.mxu0 0.0
        %867 = vmatprep.subr.mxu0 0.0
        %868 = vmatpush1.xpose.msra.mxu0 0.0
        %869 = vmatprep.subr.mxu0 0.0
        %870 = vmatpush1.xpose.msra.mxu0 0.0
        %871 = vmatprep.subr.mxu0 0.0
        %872 = vmatpush1.xpose.msra.mxu0 0.0
        %873 = vmatprep.subr.mxu0 0.0
        %874 = vmatpush1.xpose.msra.mxu0 0.0
        %875 = vmatprep.subr.mxu0 0.0
        %876 = vmatpush1.xpose.msra.mxu0 0.0
        %877 = vmatprep.subr.mxu0 0.0
        %878 = vmatpush1.xpose.msra.mxu0 0.0
        %879 = vmatprep.subr.mxu0 0.0
        %880 = vmatpush1.xpose.msra.mxu0 0.0
        %881 = vmatprep.subr.mxu0 0.0
        %882 = vmatpush1.xpose.msra.mxu0 0.0
        %883 = vmatprep.subr.mxu0 0.0
        %884 = vmatpush1.xpose.msra.mxu0 0.0
        %885 = vmatprep.subr.mxu0 0.0
        %886 = vmatpush1.xpose.msra.mxu0 0.0
        %887 = vmatprep.subr.mxu0 0.0
        %888 = vmatpush1.xpose.msra.mxu0 0.0
        %889 = vmatprep.subr.mxu0 0.0
        %890 = vmatpush1.xpose.msra.mxu0 0.0
        %891 = vmatprep.subr.mxu0 0.0
        %892 = vmatpush1.xpose.msra.mxu0 0.0
        %893 = vmatprep.subr.mxu0 0.0
        %894 = vmatpush1.xpose.msra.mxu0 0.0
        %895 = vmatprep.subr.mxu0 0.0
        %896 = vmatpush1.xpose.msra.mxu0 0.0
        %897 = vmatprep.subr.mxu0 0.0
        %898 = vmatpush1.xpose.msra.mxu0 0.0
        %899 = vmatprep.subr.mxu0 0.0
        %900 = vmatpush1.xpose.msra.mxu0 0.0
        %901 = vmatprep.subr.mxu0 0.0
        %902 = vmatpush1.xpose.msra.mxu0 0.0
        %903 = vmatprep.mubr.f32.mxu0 0.0
        %904 = vmatmul.mubr.f32.gmra.mrb[0].mxu0 %v834
        %v905 = vpop.f32.mrb[0].mxu0
        %v906 = vadd.f32 0.0, %v905
        %v907 = vpop.f32.mrb[0].mxu0
        %908 = vdwg.mxu0
        %v910 = vsel %vm832, %v674, 0
        %v913 = vsel %vm832, %v752, 0
        %915 = vmatprep.subr.mxu0 0.0
        %916 = vmatpush1.xpose.msra.mxu0 %v913
        %917 = vmatprep.subr.mxu0 0.0
        %918 = vmatpush1.xpose.msra.mxu0 0.0
        %919 = vmatprep.subr.mxu0 0.0
        %920 = vmatpush1.xpose.msra.mxu0 0.0
        %921 = vmatprep.subr.mxu0 0.0
        %922 = vmatpush1.xpose.msra.mxu0 0.0
        %923 = vmatprep.subr.mxu0 0.0
        %924 = vmatpush1.xpose.msra.mxu0 0.0
        %925 = vmatprep.subr.mxu0 0.0
        %926 = vmatpush1.xpose.msra.mxu0 0.0
        %927 = vmatprep.subr.mxu0 0.0
        %928 = vmatpush1.xpose.msra.mxu0 0.0
        %929 = vmatprep.subr.mxu0 0.0
        %930 = vmatpush1.xpose.msra.mxu0 0.0
        %931 = vmatprep.subr.mxu0 0.0
        %932 = vmatpush1.xpose.msra.mxu0 0.0
        %933 = vmatprep.subr.mxu0 0.0
        %934 = vmatpush1.xpose.msra.mxu0 0.0
        %935 = vmatprep.subr.mxu0 0.0
        %936 = vmatpush1.xpose.msra.mxu0 0.0
        %937 = vmatprep.subr.mxu0 0.0
        %938 = vmatpush1.xpose.msra.mxu0 0.0
        %939 = vmatprep.subr.mxu0 0.0
        %940 = vmatpush1.xpose.msra.mxu0 0.0
        %941 = vmatprep.subr.mxu0 0.0
        %942 = vmatpush1.xpose.msra.mxu0 0.0
        %943 = vmatprep.subr.mxu0 0.0
        %944 = vmatpush1.xpose.msra.mxu0 0.0
        %945 = vmatprep.subr.mxu0 0.0
        %946 = vmatpush1.xpose.msra.mxu0 0.0
        %947 = vmatprep.subr.mxu0 0.0
        %948 = vmatpush1.xpose.msra.mxu0 0.0
        %949 = vmatprep.subr.mxu0 0.0
        %950 = vmatpush1.xpose.msra.mxu0 0.0
        %951 = vmatprep.subr.mxu0 0.0
        %952 = vmatpush1.xpose.msra.mxu0 0.0
        %953 = vmatprep.subr.mxu0 0.0
        %954 = vmatpush1.xpose.msra.mxu0 0.0
        %955 = vmatprep.subr.mxu0 0.0
        %956 = vmatpush1.xpose.msra.mxu0 0.0
        %957 = vmatprep.subr.mxu0 0.0
        %958 = vmatpush1.xpose.msra.mxu0 0.0
        %959 = vmatprep.subr.mxu0 0.0
        %960 = vmatpush1.xpose.msra.mxu0 0.0
        %961 = vmatprep.subr.mxu0 0.0
        %962 = vmatpush1.xpose.msra.mxu0 0.0
        %963 = vmatprep.subr.mxu0 0.0
        %964 = vmatpush1.xpose.msra.mxu0 0.0
        %965 = vmatprep.subr.mxu0 0.0
        %966 = vmatpush1.xpose.msra.mxu0 0.0
        %967 = vmatprep.subr.mxu0 0.0
        %968 = vmatpush1.xpose.msra.mxu0 0.0
        %969 = vmatprep.subr.mxu0 0.0
        %970 = vmatpush1.xpose.msra.mxu0 0.0
        %971 = vmatprep.subr.mxu0 0.0
        %972 = vmatpush1.xpose.msra.mxu0 0.0
        %973 = vmatprep.subr.mxu0 0.0
        %974 = vmatpush1.xpose.msra.mxu0 0.0
        %975 = vmatprep.subr.mxu0 0.0
        %976 = vmatpush1.xpose.msra.mxu0 0.0
        %977 = vmatprep.subr.mxu0 0.0
        %978 = vmatpush1.xpose.msra.mxu0 0.0
        %979 = vmatprep.mubr.f32.mxu0 0.0
        %980 = vmatmul.mubr.f32.gmra.mrb[0].mxu0 %v910
        %v981 = vpop.f32.mrb[0].mxu0
        %v982 = vadd.f32 0.0, %v981
        %v983 = vpop.f32.mrb[0].mxu0
        %984 = vdwg.mxu0
        %v986 = vsel %vm832, %v657, 0
        %v989 = vsel %vm832, %v735, 0
        %991 = vmatprep.subr.mxu0 0.0
        %992 = vmatpush1.xpose.msra.mxu0 %v989
        %993 = vmatprep.subr.mxu0 0.0
        %994 = vmatpush1.xpose.msra.mxu0 0.0
        %995 = vmatprep.subr.mxu0 0.0
        %996 = vmatpush1.xpose.msra.mxu0 0.0
        %997 = vmatprep.subr.mxu0 0.0
        %998 = vmatpush1.xpose.msra.mxu0 0.0
        %999 = vmatprep.subr.mxu0 0.0
        %1000 = vmatpush1.xpose.msra.mxu0 0.0
        %1001 = vmatprep.subr.mxu0 0.0
        %1002 = vmatpush1.xpose.msra.mxu0 0.0
        %1003 = vmatprep.subr.mxu0 0.0
        %1004 = vmatpush1.xpose.msra.mxu0 0.0
        %1005 = vmatprep.subr.mxu0 0.0
        %1006 = vmatpush1.xpose.msra.mxu0 0.0
        %1007 = vmatprep.subr.mxu0 0.0
        %1008 = vmatpush1.xpose.msra.mxu0 0.0
        %1009 = vmatprep.subr.mxu0 0.0
        %1010 = vmatpush1.xpose.msra.mxu0 0.0
        %1011 = vmatprep.subr.mxu0 0.0
        %1012 = vmatpush1.xpose.msra.mxu0 0.0
        %1013 = vmatprep.subr.mxu0 0.0
        %1014 = vmatpush1.xpose.msra.mxu0 0.0
        %1015 = vmatprep.subr.mxu0 0.0
        %1016 = vmatpush1.xpose.msra.mxu0 0.0
        %1017 = vmatprep.subr.mxu0 0.0
        %1018 = vmatpush1.xpose.msra.mxu0 0.0
        %1019 = vmatprep.subr.mxu0 0.0
        %1020 = vmatpush1.xpose.msra.mxu0 0.0
        %1021 = vmatprep.subr.mxu0 0.0
        %1022 = vmatpush1.xpose.msra.mxu0 0.0
        %1023 = vmatprep.subr.mxu0 0.0
        %1024 = vmatpush1.xpose.msra.mxu0 0.0
        %1025 = vmatprep.subr.mxu0 0.0
        %1026 = vmatpush1.xpose.msra.mxu0 0.0
        %1027 = vmatprep.subr.mxu0 0.0
        %1028 = vmatpush1.xpose.msra.mxu0 0.0
        %1029 = vmatprep.subr.mxu0 0.0
        %1030 = vmatpush1.xpose.msra.mxu0 0.0
        %1031 = vmatprep.subr.mxu0 0.0
        %1032 = vmatpush1.xpose.msra.mxu0 0.0
        %1033 = vmatprep.subr.mxu0 0.0
        %1034 = vmatpush1.xpose.msra.mxu0 0.0
        %1035 = vmatprep.subr.mxu0 0.0
        %1036 = vmatpush1.xpose.msra.mxu0 0.0
        %1037 = vmatprep.subr.mxu0 0.0
        %1038 = vmatpush1.xpose.msra.mxu0 0.0
        %1039 = vmatprep.subr.mxu0 0.0
        %1040 = vmatpush1.xpose.msra.mxu0 0.0
        %1041 = vmatprep.subr.mxu0 0.0
        %1042 = vmatpush1.xpose.msra.mxu0 0.0
        %1043 = vmatprep.subr.mxu0 0.0
        %1044 = vmatpush1.xpose.msra.mxu0 0.0
        %1045 = vmatprep.subr.mxu0 0.0
        %1046 = vmatpush1.xpose.msra.mxu0 0.0
        %1047 = vmatprep.subr.mxu0 0.0
        %1048 = vmatpush1.xpose.msra.mxu0 0.0
        %1049 = vmatprep.subr.mxu0 0.0
        %1050 = vmatpush1.xpose.msra.mxu0 0.0
        %1051 = vmatprep.subr.mxu0 0.0
        %1052 = vmatpush1.xpose.msra.mxu0 0.0
        %1053 = vmatprep.subr.mxu0 0.0
        %1054 = vmatpush1.xpose.msra.mxu0 0.0
        %1055 = vmatprep.mubr.f32.mxu0 0.0
        %1056 = vmatmul.mubr.f32.gmra.mrb[0].mxu0 %v986
        %v1057 = vpop.f32.mrb[0].mxu0
        %v1058 = vadd.f32 0.0, %v1057
        %v1059 = vpop.f32.mrb[0].mxu0
        %1060 = vdwg.mxu0
        %v1062 = vsel %vm832, %v675, 0
        %v1065 = vsel %vm832, %v753, 0
        %1067 = vmatprep.subr.mxu0 0.0
        %1068 = vmatpush1.xpose.msra.mxu0 %v1065
        %1069 = vmatprep.subr.mxu0 0.0
        %1070 = vmatpush1.xpose.msra.mxu0 0.0
        %1071 = vmatprep.subr.mxu0 0.0
        %1072 = vmatpush1.xpose.msra.mxu0 0.0
        %1073 = vmatprep.subr.mxu0 0.0
        %1074 = vmatpush1.xpose.msra.mxu0 0.0
        %1075 = vmatprep.subr.mxu0 0.0
        %1076 = vmatpush1.xpose.msra.mxu0 0.0
        %1077 = vmatprep.subr.mxu0 0.0
        %1078 = vmatpush1.xpose.msra.mxu0 0.0
        %1079 = vmatprep.subr.mxu0 0.0
        %1080 = vmatpush1.xpose.msra.mxu0 0.0
        %1081 = vmatprep.subr.mxu0 0.0
        %1082 = vmatpush1.xpose.msra.mxu0 0.0
        %1083 = vmatprep.subr.mxu0 0.0
        %1084 = vmatpush1.xpose.msra.mxu0 0.0
        %1085 = vmatprep.subr.mxu0 0.0
        %1086 = vmatpush1.xpose.msra.mxu0 0.0
        %1087 = vmatprep.subr.mxu0 0.0
        %1088 = vmatpush1.xpose.msra.mxu0 0.0
        %1089 = vmatprep.subr.mxu0 0.0
        %1090 = vmatpush1.xpose.msra.mxu0 0.0
        %1091 = vmatprep.subr.mxu0 0.0
        %1092 = vmatpush1.xpose.msra.mxu0 0.0
        %1093 = vmatprep.subr.mxu0 0.0
        %1094 = vmatpush1.xpose.msra.mxu0 0.0
        %1095 = vmatprep.subr.mxu0 0.0
        %1096 = vmatpush1.xpose.msra.mxu0 0.0
        %1097 = vmatprep.subr.mxu0 0.0
        %1098 = vmatpush1.xpose.msra.mxu0 0.0
        %1099 = vmatprep.subr.mxu0 0.0
        %1100 = vmatpush1.xpose.msra.mxu0 0.0
        %1101 = vmatprep.subr.mxu0 0.0
        %1102 = vmatpush1.xpose.msra.mxu0 0.0
        %1103 = vmatprep.subr.mxu0 0.0
        %1104 = vmatpush1.xpose.msra.mxu0 0.0
        %1105 = vmatprep.subr.mxu0 0.0
        %1106 = vmatpush1.xpose.msra.mxu0 0.0
        %1107 = vmatprep.subr.mxu0 0.0
        %1108 = vmatpush1.xpose.msra.mxu0 0.0
        %1109 = vmatprep.subr.mxu0 0.0
        %1110 = vmatpush1.xpose.msra.mxu0 0.0
        %1111 = vmatprep.subr.mxu0 0.0
        %1112 = vmatpush1.xpose.msra.mxu0 0.0
        %1113 = vmatprep.subr.mxu0 0.0
        %1114 = vmatpush1.xpose.msra.mxu0 0.0
        %1115 = vmatprep.subr.mxu0 0.0
        %1116 = vmatpush1.xpose.msra.mxu0 0.0
        %1117 = vmatprep.subr.mxu0 0.0
        %1118 = vmatpush1.xpose.msra.mxu0 0.0
        %1119 = vmatprep.subr.mxu0 0.0
        %1120 = vmatpush1.xpose.msra.mxu0 0.0
        %1121 = vmatprep.subr.mxu0 0.0
        %1122 = vmatpush1.xpose.msra.mxu0 0.0
        %1123 = vmatprep.subr.mxu0 0.0
        %1124 = vmatpush1.xpose.msra.mxu0 0.0
        %1125 = vmatprep.subr.mxu0 0.0
        %1126 = vmatpush1.xpose.msra.mxu0 0.0
        %1127 = vmatprep.subr.mxu0 0.0
        %1128 = vmatpush1.xpose.msra.mxu0 0.0
        %1129 = vmatprep.subr.mxu0 0.0
        %1130 = vmatpush1.xpose.msra.mxu0 0.0
        %1131 = vmatprep.mubr.f32.mxu0 0.0
        %1132 = vmatmul.mubr.f32.gmra.mrb[0].mxu0 %v1062
        %v1133 = vpop.f32.mrb[0].mxu0
        %v1134 = vadd.f32 0.0, %v1133
        %v1135 = vpop.f32.mrb[0].mxu0
        %1136 = vdwg.mxu0
        %v1138 = vsel %vm832, %v666, 0
        %v1141 = vsel %vm832, %v744, 0
        %1143 = vmatprep.subr.mxu0 0.0
        %1144 = vmatpush1.xpose.msra.mxu0 %v1141
        %1145 = vmatprep.subr.mxu0 0.0
        %1146 = vmatpush1.xpose.msra.mxu0 0.0
        %1147 = vmatprep.subr.mxu0 0.0
        %1148 = vmatpush1.xpose.msra.mxu0 0.0
        %1149 = vmatprep.subr.mxu0 0.0
        %1150 = vmatpush1.xpose.msra.mxu0 0.0
        %1151 = vmatprep.subr.mxu0 0.0
        %1152 = vmatpush1.xpose.msra.mxu0 0.0
        %1153 = vmatprep.subr.mxu0 0.0
        %1154 = vmatpush1.xpose.msra.mxu0 0.0
        %1155 = vmatprep.subr.mxu0 0.0
        %1156 = vmatpush1.xpose.msra.mxu0 0.0
        %1157 = vmatprep.subr.mxu0 0.0
        %1158 = vmatpush1.xpose.msra.mxu0 0.0
        %1159 = vmatprep.subr.mxu0 0.0
        %1160 = vmatpush1.xpose.msra.mxu0 0.0
        %1161 = vmatprep.subr.mxu0 0.0
        %1162 = vmatpush1.xpose.msra.mxu0 0.0
        %1163 = vmatprep.subr.mxu0 0.0
        %1164 = vmatpush1.xpose.msra.mxu0 0.0
        %1165 = vmatprep.subr.mxu0 0.0
        %1166 = vmatpush1.xpose.msra.mxu0 0.0
        %1167 = vmatprep.subr.mxu0 0.0
        %1168 = vmatpush1.xpose.msra.mxu0 0.0
        %1169 = vmatprep.subr.mxu0 0.0
        %1170 = vmatpush1.xpose.msra.mxu0 0.0
        %1171 = vmatprep.subr.mxu0 0.0
        %1172 = vmatpush1.xpose.msra.mxu0 0.0
        %1173 = vmatprep.subr.mxu0 0.0
        %1174 = vmatpush1.xpose.msra.mxu0 0.0
        %1175 = vmatprep.subr.mxu0 0.0
        %1176 = vmatpush1.xpose.msra.mxu0 0.0
        %1177 = vmatprep.subr.mxu0 0.0
        %1178 = vmatpush1.xpose.msra.mxu0 0.0
        %1179 = vmatprep.subr.mxu0 0.0
        %1180 = vmatpush1.xpose.msra.mxu0 0.0
        %1181 = vmatprep.subr.mxu0 0.0
        %1182 = vmatpush1.xpose.msra.mxu0 0.0
        %1183 = vmatprep.subr.mxu0 0.0
        %1184 = vmatpush1.xpose.msra.mxu0 0.0
        %1185 = vmatprep.subr.mxu0 0.0
        %1186 = vmatpush1.xpose.msra.mxu0 0.0
        %1187 = vmatprep.subr.mxu0 0.0
        %1188 = vmatpush1.xpose.msra.mxu0 0.0
        %1189 = vmatprep.subr.mxu0 0.0
        %1190 = vmatpush1.xpose.msra.mxu0 0.0
        %1191 = vmatprep.subr.mxu0 0.0
        %1192 = vmatpush1.xpose.msra.mxu0 0.0
        %1193 = vmatprep.subr.mxu0 0.0
        %1194 = vmatpush1.xpose.msra.mxu0 0.0
        %1195 = vmatprep.subr.mxu0 0.0
        %1196 = vmatpush1.xpose.msra.mxu0 0.0
        %1197 = vmatprep.subr.mxu0 0.0
        %1198 = vmatpush1.xpose.msra.mxu0 0.0
        %1199 = vmatprep.subr.mxu0 0.0
        %1200 = vmatpush1.xpose.msra.mxu0 0.0
        %1201 = vmatprep.subr.mxu0 0.0
        %1202 = vmatpush1.xpose.msra.mxu0 0.0
        %1203 = vmatprep.subr.mxu0 0.0
        %1204 = vmatpush1.xpose.msra.mxu0 0.0
        %1205 = vmatprep.subr.mxu0 0.0
        %1206 = vmatpush1.xpose.msra.mxu0 0.0
        %1207 = vmatprep.mubr.f32.mxu0 0.0
        %1208 = vmatmul.mubr.f32.gmra.mrb[0].mxu0 %v1138
        %v1209 = vpop.f32.mrb[0].mxu0
        %v1210 = vadd.f32 0.0, %v1209
        %v1211 = vpop.f32.mrb[0].mxu0
        %1212 = vdwg.mxu0
        %v1214 = vsel %vm832, %v676, 0
        %v1217 = vsel %vm832, %v754, 0
        %1219 = vmatprep.subr.mxu0 0.0
        %1220 = vmatpush1.xpose.msra.mxu0 %v1217
        %1221 = vmatprep.subr.mxu0 0.0
        %1222 = vmatpush1.xpose.msra.mxu0 0.0
        %1223 = vmatprep.subr.mxu0 0.0
        %1224 = vmatpush1.xpose.msra.mxu0 0.0
        %1225 = vmatprep.subr.mxu0 0.0
        %1226 = vmatpush1.xpose.msra.mxu0 0.0
        %1227 = vmatprep.subr.mxu0 0.0
        %1228 = vmatpush1.xpose.msra.mxu0 0.0
        %1229 = vmatprep.subr.mxu0 0.0
        %1230 = vmatpush1.xpose.msra.mxu0 0.0
        %1231 = vmatprep.subr.mxu0 0.0
        %1232 = vmatpush1.xpose.msra.mxu0 0.0
        %1233 = vmatprep.subr.mxu0 0.0
        %1234 = vmatpush1.xpose.msra.mxu0 0.0
        %1235 = vmatprep.subr.mxu0 0.0
        %1236 = vmatpush1.xpose.msra.mxu0 0.0
        %1237 = vmatprep.subr.mxu0 0.0
        %1238 = vmatpush1.xpose.msra.mxu0 0.0
        %1239 = vmatprep.subr.mxu0 0.0
        %1240 = vmatpush1.xpose.msra.mxu0 0.0
        %1241 = vmatprep.subr.mxu0 0.0
        %1242 = vmatpush1.xpose.msra.mxu0 0.0
        %1243 = vmatprep.subr.mxu0 0.0
        %1244 = vmatpush1.xpose.msra.mxu0 0.0
        %1245 = vmatprep.subr.mxu0 0.0
        %1246 = vmatpush1.xpose.msra.mxu0 0.0
        %1247 = vmatprep.subr.mxu0 0.0
        %1248 = vmatpush1.xpose.msra.mxu0 0.0
        %1249 = vmatprep.subr.mxu0 0.0
        %1250 = vmatpush1.xpose.msra.mxu0 0.0
        %1251 = vmatprep.subr.mxu0 0.0
        %1252 = vmatpush1.xpose.msra.mxu0 0.0
        %1253 = vmatprep.subr.mxu0 0.0
        %1254 = vmatpush1.xpose.msra.mxu0 0.0
        %1255 = vmatprep.subr.mxu0 0.0
        %1256 = vmatpush1.xpose.msra.mxu0 0.0
        %1257 = vmatprep.subr.mxu0 0.0
        %1258 = vmatpush1.xpose.msra.mxu0 0.0
        %1259 = vmatprep.subr.mxu0 0.0
        %1260 = vmatpush1.xpose.msra.mxu0 0.0
        %1261 = vmatprep.subr.mxu0 0.0
        %1262 = vmatpush1.xpose.msra.mxu0 0.0
        %1263 = vmatprep.subr.mxu0 0.0
        %1264 = vmatpush1.xpose.msra.mxu0 0.0
        %1265 = vmatprep.subr.mxu0 0.0
        %1266 = vmatpush1.xpose.msra.mxu0 0.0
        %1267 = vmatprep.subr.mxu0 0.0
        %1268 = vmatpush1.xpose.msra.mxu0 0.0
        %1269 = vmatprep.subr.mxu0 0.0
        %1270 = vmatpush1.xpose.msra.mxu0 0.0
        %1271 = vmatprep.subr.mxu0 0.0
        %1272 = vmatpush1.xpose.msra.mxu0 0.0
        %1273 = vmatprep.subr.mxu0 0.0
        %1274 = vmatpush1.xpose.msra.mxu0 0.0
        %1275 = vmatprep.subr.mxu0 0.0
        %1276 = vmatpush1.xpose.msra.mxu0 0.0
        %1277 = vmatprep.subr.mxu0 0.0
        %1278 = vmatpush1.xpose.msra.mxu0 0.0
        %1279 = vmatprep.subr.mxu0 0.0
        %1280 = vmatpush1.xpose.msra.mxu0 0.0
        %1281 = vmatprep.subr.mxu0 0.0
        %1282 = vmatpush1.xpose.msra.mxu0 0.0
        %1283 = vmatprep.mubr.f32.mxu0 0.0
        %1284 = vmatmul.mubr.f32.gmra.mrb[0].mxu0 %v1214
        %v1285 = vpop.f32.mrb[0].mxu0
        %v1286 = vadd.f32 0.0, %v1285
        %v1287 = vpop.f32.mrb[0].mxu0
        %1288 = vdwg.mxu0
        %v1290 = vsel %vm832, %v673, 0
        %v1293 = vsel %vm832, %v751, 0
        %1295 = vmatprep.subr.mxu0 0.0
        %1296 = vmatpush1.xpose.msra.mxu0 %v1293
        %1297 = vmatprep.subr.mxu0 0.0
        %1298 = vmatpush1.xpose.msra.mxu0 0.0
        %1299 = vmatprep.subr.mxu0 0.0
        %1300 = vmatpush1.xpose.msra.mxu0 0.0
        %1301 = vmatprep.subr.mxu0 0.0
        %1302 = vmatpush1.xpose.msra.mxu0 0.0
        %1303 = vmatprep.subr.mxu0 0.0
        %1304 = vmatpush1.xpose.msra.mxu0 0.0
        %1305 = vmatprep.subr.mxu0 0.0
        %1306 = vmatpush1.xpose.msra.mxu0 0.0
        %1307 = vmatprep.subr.mxu0 0.0
        %1308 = vmatpush1.xpose.msra.mxu0 0.0
        %1309 = vmatprep.subr.mxu0 0.0
        %1310 = vmatpush1.xpose.msra.mxu0 0.0
        %1311 = vmatprep.subr.mxu0 0.0
        %1312 = vmatpush1.xpose.msra.mxu0 0.0
        %1313 = vmatprep.subr.mxu0 0.0
        %1314 = vmatpush1.xpose.msra.mxu0 0.0
        %1315 = vmatprep.subr.mxu0 0.0
        %1316 = vmatpush1.xpose.msra.mxu0 0.0
        %1317 = vmatprep.subr.mxu0 0.0
        %1318 = vmatpush1.xpose.msra.mxu0 0.0
        %1319 = vmatprep.subr.mxu0 0.0
        %1320 = vmatpush1.xpose.msra.mxu0 0.0
        %1321 = vmatprep.subr.mxu0 0.0
        %1322 = vmatpush1.xpose.msra.mxu0 0.0
        %1323 = vmatprep.subr.mxu0 0.0
        %1324 = vmatpush1.xpose.msra.mxu0 0.0
        %1325 = vmatprep.subr.mxu0 0.0
        %1326 = vmatpush1.xpose.msra.mxu0 0.0
        %1327 = vmatprep.subr.mxu0 0.0
        %1328 = vmatpush1.xpose.msra.mxu0 0.0
        %1329 = vmatprep.subr.mxu0 0.0
        %1330 = vmatpush1.xpose.msra.mxu0 0.0
        %1331 = vmatprep.subr.mxu0 0.0
        %1332 = vmatpush1.xpose.msra.mxu0 0.0
        %1333 = vmatprep.subr.mxu0 0.0
        %1334 = vmatpush1.xpose.msra.mxu0 0.0
        %1335 = vmatprep.subr.mxu0 0.0
        %1336 = vmatpush1.xpose.msra.mxu0 0.0
        %1337 = vmatprep.subr.mxu0 0.0
        %1338 = vmatpush1.xpose.msra.mxu0 0.0
        %1339 = vmatprep.subr.mxu0 0.0
        %1340 = vmatpush1.xpose.msra.mxu0 0.0
        %1341 = vmatprep.subr.mxu0 0.0
        %1342 = vmatpush1.xpose.msra.mxu0 0.0
        %1343 = vmatprep.subr.mxu0 0.0
        %1344 = vmatpush1.xpose.msra.mxu0 0.0
        %1345 = vmatprep.subr.mxu0 0.0
        %1346 = vmatpush1.xpose.msra.mxu0 0.0
        %1347 = vmatprep.subr.mxu0 0.0
        %1348 = vmatpush1.xpose.msra.mxu0 0.0
        %1349 = vmatprep.subr.mxu0 0.0
        %1350 = vmatpush1.xpose.msra.mxu0 0.0
        %1351 = vmatprep.subr.mxu0 0.0
        %1352 = vmatpush1.xpose.msra.mxu0 0.0
        %1353 = vmatprep.subr.mxu0 0.0
        %1354 = vmatpush1.xpose.msra.mxu0 0.0
        %1355 = vmatprep.subr.mxu0 0.0
        %1356 = vmatpush1.xpose.msra.mxu0 0.0
        %1357 = vmatprep.subr.mxu0 0.0
        %1358 = vmatpush1.xpose.msra.mxu0 0.0
        %1359 = vmatprep.mubr.f32.mxu0 0.0
        %1360 = vmatmul.mubr.f32.gmra.mrb[0].mxu0 %v1290
        %v1361 = vpop.f32.mrb[0].mxu0
        %v1362 = vadd.f32 0.0, %v1361
        %v1363 = vpop.f32.mrb[0].mxu0
        %1364 = vdwg.mxu0
        %v1366 = vsel %vm832, %v677, 0
        %v1369 = vsel %vm832, %v755, 0
        %1371 = vmatprep.subr.mxu0 0.0
        %1372 = vmatpush1.xpose.msra.mxu0 %v1369
        %1373 = vmatprep.subr.mxu0 0.0
        %1374 = vmatpush1.xpose.msra.mxu0 0.0
        %1375 = vmatprep.subr.mxu0 0.0
        %1376 = vmatpush1.xpose.msra.mxu0 0.0
        %1377 = vmatprep.subr.mxu0 0.0
        %1378 = vmatpush1.xpose.msra.mxu0 0.0
        %1379 = vmatprep.subr.mxu0 0.0
        %1380 = vmatpush1.xpose.msra.mxu0 0.0
        %1381 = vmatprep.subr.mxu0 0.0
        %1382 = vmatpush1.xpose.msra.mxu0 0.0
        %1383 = vmatprep.subr.mxu0 0.0
        %1384 = vmatpush1.xpose.msra.mxu0 0.0
        %1385 = vmatprep.subr.mxu0 0.0
        %1386 = vmatpush1.xpose.msra.mxu0 0.0
        %1387 = vmatprep.subr.mxu0 0.0
        %1388 = vmatpush1.xpose.msra.mxu0 0.0
        %1389 = vmatprep.subr.mxu0 0.0
        %1390 = vmatpush1.xpose.msra.mxu0 0.0
        %1391 = vmatprep.subr.mxu0 0.0
        %1392 = vmatpush1.xpose.msra.mxu0 0.0
        %1393 = vmatprep.subr.mxu0 0.0
        %1394 = vmatpush1.xpose.msra.mxu0 0.0
        %1395 = vmatprep.subr.mxu0 0.0
        %1396 = vmatpush1.xpose.msra.mxu0 0.0
        %1397 = vmatprep.subr.mxu0 0.0
        %1398 = vmatpush1.xpose.msra.mxu0 0.0
        %1399 = vmatprep.subr.mxu0 0.0
        %1400 = vmatpush1.xpose.msra.mxu0 0.0
        %1401 = vmatprep.subr.mxu0 0.0
        %1402 = vmatpush1.xpose.msra.mxu0 0.0
        %1403 = vmatprep.subr.mxu0 0.0
        %1404 = vmatpush1.xpose.msra.mxu0 0.0
        %1405 = vmatprep.subr.mxu0 0.0
        %1406 = vmatpush1.xpose.msra.mxu0 0.0
        %1407 = vmatprep.subr.mxu0 0.0
        %1408 = vmatpush1.xpose.msra.mxu0 0.0
        %1409 = vmatprep.subr.mxu0 0.0
        %1410 = vmatpush1.xpose.msra.mxu0 0.0
        %1411 = vmatprep.subr.mxu0 0.0
        %1412 = vmatpush1.xpose.msra.mxu0 0.0
        %1413 = vmatprep.subr.mxu0 0.0
        %1414 = vmatpush1.xpose.msra.mxu0 0.0
        %1415 = vmatprep.subr.mxu0 0.0
        %1416 = vmatpush1.xpose.msra.mxu0 0.0
        %1417 = vmatprep.subr.mxu0 0.0
        %1418 = vmatpush1.xpose.msra.mxu0 0.0
        %1419 = vmatprep.subr.mxu0 0.0
        %1420 = vmatpush1.xpose.msra.mxu0 0.0
        %1421 = vmatprep.subr.mxu0 0.0
        %1422 = vmatpush1.xpose.msra.mxu0 0.0
        %1423 = vmatprep.subr.mxu0 0.0
        %1424 = vmatpush1.xpose.msra.mxu0 0.0
        %1425 = vmatprep.subr.mxu0 0.0
        %1426 = vmatpush1.xpose.msra.mxu0 0.0
        %1427 = vmatprep.subr.mxu0 0.0
        %1428 = vmatpush1.xpose.msra.mxu0 0.0
        %1429 = vmatprep.subr.mxu0 0.0
        %1430 = vmatpush1.xpose.msra.mxu0 0.0
        %1431 = vmatprep.subr.mxu0 0.0
        %1432 = vmatpush1.xpose.msra.mxu0 0.0
        %1433 = vmatprep.subr.mxu0 0.0
        %1434 = vmatpush1.xpose.msra.mxu0 0.0
        %1435 = vmatprep.mubr.f32.mxu0 0.0
        %1436 = vmatmul.mubr.f32.gmra.mrb[0].mxu0 %v1366
        %v1437 = vpop.f32.mrb[0].mxu0
        %v1438 = vadd.f32 0.0, %v1437
        %v1439 = vpop.f32.mrb[0].mxu0
        %1440 = vdwg.mxu0
        %v1441 = vmul.f32 %v906, 0.25
        %v1442 = vmul.f32 %v982, 0.25
        %v1443 = vmul.f32 %v1058, 0.25
        %v1444 = vmul.f32 %v1134, 0.25
        %v1445 = vmul.f32 %v1210, 0.25
        %v1446 = vmul.f32 %v1286, 0.25
        %v1447 = vmul.f32 %v1362, 0.25
        %v1448 = vmul.f32 %v1438, 0.25
        %vm1449 = vcmask 27648
        %v1450 = vsel %vm1449, %v1441, -inf
        %1451 = vmax.xlane.f32.xlu0 %v1450
        %v1452 = vpop.xlane.xlu0 %1451
        %v1453 = vsel %vm1449, %v1442, -inf
        %1454 = vmax.xlane.f32.xlu0 %v1453
        %v1455 = vpop.xlane.xlu0 %1454
        %v1456 = vsel %vm1449, %v1443, -inf
        %1457 = vmax.xlane.f32.xlu0 %v1456
        %v1458 = vpop.xlane.xlu0 %1457
        %v1459 = vsel %vm1449, %v1444, -inf
        %1460 = vmax.xlane.f32.xlu0 %v1459
        %v1461 = vpop.xlane.xlu0 %1460
        %v1462 = vsel %vm1449, %v1445, -inf
        %1463 = vmax.xlane.f32.xlu0 %v1462
        %v1464 = vpop.xlane.xlu0 %1463
        %v1465 = vsel %vm1449, %v1446, -inf
        %1466 = vmax.xlane.f32.xlu0 %v1465
        %v1467 = vpop.xlane.xlu0 %1466
        %v1468 = vsel %vm1449, %v1447, -inf
        %1469 = vmax.xlane.f32.xlu0 %v1468
        %v1470 = vpop.xlane.xlu0 %1469
        %v1471 = vsel %vm1449, %v1448, -inf
        %1472 = vmax.xlane.f32.xlu0 %v1471
        %v1473 = vpop.xlane.xlu0 %1472
        %v1474 = vsub.f32 %v1441, %v1452
        %v1475 = vsub.f32 %v1442, %v1455
        %v1476 = vsub.f32 %v1443, %v1458
        %v1477 = vsub.f32 %v1444, %v1461
        %v1478 = vsub.f32 %v1445, %v1464
        %v1479 = vsub.f32 %v1446, %v1467
        %v1480 = vsub.f32 %v1447, %v1470
        %v1481 = vsub.f32 %v1448, %v1473
        %v1482 = vmul.f32 %v1474, 1.442695
        %v1483 = vpow.pop %v1482
        %v1484 = vmul.f32 %v1475, 1.442695
        %v1485 = vpow.pop %v1484
        %v1486 = vmul.f32 %v1476, 1.442695
        %v1487 = vpow.pop %v1486
        %v1488 = vmul.f32 %v1477, 1.442695
        %v1489 = vpow.pop %v1488
        %v1490 = vmul.f32 %v1478, 1.442695
        %v1491 = vpow.pop %v1490
        %v1492 = vmul.f32 %v1479, 1.442695
        %v1493 = vpow.pop %v1492
        %v1494 = vmul.f32 %v1480, 1.442695
        %v1495 = vpow.pop %v1494
        %v1496 = vmul.f32 %v1481, 1.442695
        %v1497 = vpow.pop %v1496
        %v1498 = vsel %vm1449, %v1483, 0.0
        %1499 = vadd.xlane.f32.xlu0 %v1498
        %v1500 = vpop.xlane.xlu0 %1499
        %v1501 = vsel %vm1449, %v1485, 0.0
        %1502 = vadd.xlane.f32.xlu0 %v1501
        %v1503 = vpop.xlane.xlu0 %1502
        %v1504 = vsel %vm1449, %v1487, 0.0
        %1505 = vadd.xlane.f32.xlu0 %v1504
        %v1506 = vpop.xlane.xlu0 %1505
        %v1507 = vsel %vm1449, %v1489, 0.0
        %1508 = vadd.xlane.f32.xlu0 %v1507
        %v1509 = vpop.xlane.xlu0 %1508
        %v1510 = vsel %vm1449, %v1491, 0.0
        %1511 = vadd.xlane.f32.xlu0 %v1510
        %v1512 = vpop.xlane.xlu0 %1511
        %v1513 = vsel %vm1449, %v1493, 0.0
        %1514 = vadd.xlane.f32.xlu0 %v1513
        %v1515 = vpop.xlane.xlu0 %1514
        %v1516 = vsel %vm1449, %v1495, 0.0
        %1517 = vadd.xlane.f32.xlu0 %v1516
        %v1518 = vpop.xlane.xlu0 %1517
        %v1519 = vsel %vm1449, %v1497, 0.0
        %1520 = vadd.xlane.f32.xlu0 %v1519
        %v1521 = vpop.xlane.xlu0 %1520
        %v1522 = vrcp.pop %v1500
        %v1523 = vrcp.pop %v1503
        %v1524 = vrcp.pop %v1506
        %v1525 = vrcp.pop %v1509
        %v1526 = vrcp.pop %v1512
        %v1527 = vrcp.pop %v1515
        %v1528 = vrcp.pop %v1518
        %v1529 = vrcp.pop %v1521
        %v1530 = vmul.f32 %v1483, %v1522
        %v1531 = vmul.f32 %v1485, %v1523
        %v1532 = vmul.f32 %v1487, %v1524
        %v1533 = vmul.f32 %v1489, %v1525
        %v1534 = vmul.f32 %v1491, %v1526
        %v1535 = vmul.f32 %v1493, %v1527
        %v1536 = vmul.f32 %v1495, %v1528
        %v1537 = vmul.f32 %v1497, %v1529
        %v1538 = vlaneseq
        %v1539 = vshrl.u32 %v1538, 7
        %v1540 = vsub.s32 0, %v1539
        %v1541 = vrot.slane %v324, %v1540
        %1543 = vbcast.lane.b32.xlu0 %v1541, 256
        %v1544 = vpop.permute.xlu0 %1543
        %v1545 = vlaneseq
        %v1546 = vshrl.u32 %v1545, 7
        %v1547 = vsub.s32 1, %v1546
        %v1548 = vrot.slane %v324, %v1547
        %1550 = vbcast.lane.b32.xlu0 %v1548, 256
        %v1551 = vpop.permute.xlu0 %1550
        %v1552 = vlaneseq
        %v1553 = vshrl.u32 %v1552, 7
        %v1554 = vsub.s32 2, %v1553
        %v1555 = vrot.slane %v324, %v1554
        %1557 = vbcast.lane.b32.xlu0 %v1555, 256
        %v1558 = vpop.permute.xlu0 %1557
        %v1559 = vlaneseq
        %v1560 = vshrl.u32 %v1559, 7
        %v1561 = vsub.s32 3, %v1560
        %v1562 = vrot.slane %v324, %v1561
        %1564 = vbcast.lane.b32.xlu0 %v1562, 256
        %v1565 = vpop.permute.xlu0 %1564
        %v1566 = vlaneseq
        %v1567 = vshrl.u32 %v1566, 7
        %v1568 = vsub.s32 4, %v1567
        %v1569 = vrot.slane %v324, %v1568
        %1571 = vbcast.lane.b32.xlu0 %v1569, 256
        %v1572 = vpop.permute.xlu0 %1571
        %v1573 = vlaneseq
        %v1574 = vshrl.u32 %v1573, 7
        %v1575 = vsub.s32 5, %v1574
        %v1576 = vrot.slane %v324, %v1575
        %1578 = vbcast.lane.b32.xlu0 %v1576, 256
        %v1579 = vpop.permute.xlu0 %1578
        %v1580 = vlaneseq
        %v1581 = vshrl.u32 %v1580, 7
        %v1582 = vsub.s32 6, %v1581
        %v1583 = vrot.slane %v324, %v1582
        %1585 = vbcast.lane.b32.xlu0 %v1583, 256
        %v1586 = vpop.permute.xlu0 %1585
        %v1587 = vlaneseq
        %v1588 = vshrl.u32 %v1587, 7
        %v1589 = vsub.s32 7, %v1588
        %v1590 = vrot.slane %v324, %v1589
        %1592 = vbcast.lane.b32.xlu0 %v1590, 256
        %v1593 = vpop.permute.xlu0 %1592
        %v1594 = vmul.f32 %v1530, %v1544
        %v1595 = vmul.f32 %v1531, %v1551
        %v1596 = vmul.f32 %v1532, %v1558
        %v1597 = vmul.f32 %v1533, %v1565
        %v1598 = vmul.f32 %v1534, %v1572
        %v1599 = vmul.f32 %v1535, %v1579
        %v1600 = vmul.f32 %v1536, %v1586
        %v1601 = vmul.f32 %v1537, %v1593
        %vm1602 = vcmask 31744
        %v1604 = vsel %vm1602, %v1594, 0
        %vm1606 = vcmask 1043456
        %v1608 = vsel %vm1606, %v804, 0
        %1610 = vmatprep.subr.mxu0 0.0
        %1611 = vmatpush1.msra.mxu0 %v1608
        %1612 = vmatprep.subr.mxu0 0.0
        %1613 = vmatpush1.msra.mxu0 0.0
        %1614 = vmatprep.subr.mxu0 0.0
        %1615 = vmatpush1.msra.mxu0 0.0
        %1616 = vmatprep.subr.mxu0 0.0
        %1617 = vmatpush1.msra.mxu0 0.0
        %1618 = vmatprep.subr.mxu0 0.0
        %1619 = vmatpush1.msra.mxu0 0.0
        %1620 = vmatprep.subr.mxu0 0.0
        %1621 = vmatpush1.msra.mxu0 0.0
        %1622 = vmatprep.subr.mxu0 0.0
        %1623 = vmatpush1.msra.mxu0 0.0
        %1624 = vmatprep.subr.mxu0 0.0
        %1625 = vmatpush1.msra.mxu0 0.0
        %1626 = vmatprep.subr.mxu0 0.0
        %1627 = vmatpush1.msra.mxu0 0.0
        %1628 = vmatprep.subr.mxu0 0.0
        %1629 = vmatpush1.msra.mxu0 0.0
        %1630 = vmatprep.subr.mxu0 0.0
        %1631 = vmatpush1.msra.mxu0 0.0
        %1632 = vmatprep.subr.mxu0 0.0
        %1633 = vmatpush1.msra.mxu0 0.0
        %1634 = vmatprep.subr.mxu0 0.0
        %1635 = vmatpush1.msra.mxu0 0.0
        %1636 = vmatprep.subr.mxu0 0.0
        %1637 = vmatpush1.msra.mxu0 0.0
        %1638 = vmatprep.subr.mxu0 0.0
        %1639 = vmatpush1.msra.mxu0 0.0
        %1640 = vmatprep.subr.mxu0 0.0
        %1641 = vmatpush1.msra.mxu0 0.0
        %1642 = vmatprep.subr.mxu0 0.0
        %1643 = vmatpush1.msra.mxu0 0.0
        %1644 = vmatprep.subr.mxu0 0.0
        %1645 = vmatpush1.msra.mxu0 0.0
        %1646 = vmatprep.subr.mxu0 0.0
        %1647 = vmatpush1.msra.mxu0 0.0
        %1648 = vmatprep.subr.mxu0 0.0
        %1649 = vmatpush1.msra.mxu0 0.0
        %1650 = vmatprep.subr.mxu0 0.0
        %1651 = vmatpush1.msra.mxu0 0.0
        %1652 = vmatprep.subr.mxu0 0.0
        %1653 = vmatpush1.msra.mxu0 0.0
        %1654 = vmatprep.subr.mxu0 0.0
        %1655 = vmatpush1.msra.mxu0 0.0
        %1656 = vmatprep.subr.mxu0 0.0
        %1657 = vmatpush1.msra.mxu0 0.0
        %1658 = vmatprep.subr.mxu0 0.0
        %1659 = vmatpush1.msra.mxu0 0.0
        %1660 = vmatprep.subr.mxu0 0.0
        %1661 = vmatpush1.msra.mxu0 0.0
        %1662 = vmatprep.subr.mxu0 0.0
        %1663 = vmatpush1.msra.mxu0 0.0
        %1664 = vmatprep.subr.mxu0 0.0
        %1665 = vmatpush1.msra.mxu0 0.0
        %1666 = vmatprep.subr.mxu0 0.0
        %1667 = vmatpush1.msra.mxu0 0.0
        %1668 = vmatprep.subr.mxu0 0.0
        %1669 = vmatpush1.msra.mxu0 0.0
        %1670 = vmatprep.subr.mxu0 0.0
        %1671 = vmatpush1.msra.mxu0 0.0
        %1672 = vmatprep.subr.mxu0 0.0
        %1673 = vmatpush1.msra.mxu0 0.0
        %1674 = vmatprep.mubr.f32.mxu0 0.0
        %1675 = vmatmul.mubr.f32.gmra.mrb[0].mxu0 %v1604
        %v1676 = vpop.f32.mrb[0].mxu0
        %v1677 = vadd.f32 0.0, %v1676
        %v1678 = vpop.f32.mrb[0].mxu0
        %1679 = vdwg.mxu0
        %v1681 = vsel %vm1602, %v1595, 0
        %v1684 = vsel %vm1606, %v828, 0
        %1686 = vmatprep.subr.mxu0 0.0
        %1687 = vmatpush1.msra.mxu0 %v1684
        %1688 = vmatprep.subr.mxu0 0.0
        %1689 = vmatpush1.msra.mxu0 0.0
        %1690 = vmatprep.subr.mxu0 0.0
        %1691 = vmatpush1.msra.mxu0 0.0
        %1692 = vmatprep.subr.mxu0 0.0
        %1693 = vmatpush1.msra.mxu0 0.0
        %1694 = vmatprep.subr.mxu0 0.0
        %1695 = vmatpush1.msra.mxu0 0.0
        %1696 = vmatprep.subr.mxu0 0.0
        %1697 = vmatpush1.msra.mxu0 0.0
        %1698 = vmatprep.subr.mxu0 0.0
        %1699 = vmatpush1.msra.mxu0 0.0
        %1700 = vmatprep.subr.mxu0 0.0
        %1701 = vmatpush1.msra.mxu0 0.0
        %1702 = vmatprep.subr.mxu0 0.0
        %1703 = vmatpush1.msra.mxu0 0.0
        %1704 = vmatprep.subr.mxu0 0.0
        %1705 = vmatpush1.msra.mxu0 0.0
        %1706 = vmatprep.subr.mxu0 0.0
        %1707 = vmatpush1.msra.mxu0 0.0
        %1708 = vmatprep.subr.mxu0 0.0
        %1709 = vmatpush1.msra.mxu0 0.0
        %1710 = vmatprep.subr.mxu0 0.0
        %1711 = vmatpush1.msra.mxu0 0.0
        %1712 = vmatprep.subr.mxu0 0.0
        %1713 = vmatpush1.msra.mxu0 0.0
        %1714 = vmatprep.subr.mxu0 0.0
        %1715 = vmatpush1.msra.mxu0 0.0
        %1716 = vmatprep.subr.mxu0 0.0
        %1717 = vmatpush1.msra.mxu0 0.0
        %1718 = vmatprep.subr.mxu0 0.0
        %1719 = vmatpush1.msra.mxu0 0.0
        %1720 = vmatprep.subr.mxu0 0.0
        %1721 = vmatpush1.msra.mxu0 0.0
        %1722 = vmatprep.subr.mxu0 0.0
        %1723 = vmatpush1.msra.mxu0 0.0
        %1724 = vmatprep.subr.mxu0 0.0
        %1725 = vmatpush1.msra.mxu0 0.0
        %1726 = vmatprep.subr.mxu0 0.0
        %1727 = vmatpush1.msra.mxu0 0.0
        %1728 = vmatprep.subr.mxu0 0.0
        %1729 = vmatpush1.msra.mxu0 0.0
        %1730 = vmatprep.subr.mxu0 0.0
        %1731 = vmatpush1.msra.mxu0 0.0
        %1732 = vmatprep.subr.mxu0 0.0
        %1733 = vmatpush1.msra.mxu0 0.0
        %1734 = vmatprep.subr.mxu0 0.0
        %1735 = vmatpush1.msra.mxu0 0.0
        %1736 = vmatprep.subr.mxu0 0.0
        %1737 = vmatpush1.msra.mxu0 0.0
        %1738 = vmatprep.subr.mxu0 0.0
        %1739 = vmatpush1.msra.mxu0 0.0
        %1740 = vmatprep.subr.mxu0 0.0
        %1741 = vmatpush1.msra.mxu0 0.0
        %1742 = vmatprep.subr.mxu0 0.0
        %1743 = vmatpush1.msra.mxu0 0.0
        %1744 = vmatprep.subr.mxu0 0.0
        %1745 = vmatpush1.msra.mxu0 0.0
        %1746 = vmatprep.subr.mxu0 0.0
        %1747 = vmatpush1.msra.mxu0 0.0
        %1748 = vmatprep.subr.mxu0 0.0
        %1749 = vmatpush1.msra.mxu0 0.0
        %1750 = vmatprep.mubr.f32.mxu0 0.0
        %1751 = vmatmul.mubr.f32.gmra.mrb[0].mxu0 %v1681
        %v1752 = vpop.f32.mrb[0].mxu0
        %v1753 = vadd.f32 0.0, %v1752
        %v1754 = vpop.f32.mrb[0].mxu0
        %1755 = vdwg.mxu0
        %v1757 = vsel %vm1602, %v1596, 0
        %v1760 = vsel %vm1606, %v811, 0
        %1762 = vmatprep.subr.mxu0 0.0
        %1763 = vmatpush1.msra.mxu0 %v1760
        %1764 = vmatprep.subr.mxu0 0.0
        %1765 = vmatpush1.msra.mxu0 0.0
        %1766 = vmatprep.subr.mxu0 0.0
        %1767 = vmatpush1.msra.mxu0 0.0
        %1768 = vmatprep.subr.mxu0 0.0
        %1769 = vmatpush1.msra.mxu0 0.0
        %1770 = vmatprep.subr.mxu0 0.0
        %1771 = vmatpush1.msra.mxu0 0.0
        %1772 = vmatprep.subr.mxu0 0.0
        %1773 = vmatpush1.msra.mxu0 0.0
        %1774 = vmatprep.subr.mxu0 0.0
        %1775 = vmatpush1.msra.mxu0 0.0
        %1776 = vmatprep.subr.mxu0 0.0
        %1777 = vmatpush1.msra.mxu0 0.0
        %1778 = vmatprep.subr.mxu0 0.0
        %1779 = vmatpush1.msra.mxu0 0.0
        %1780 = vmatprep.subr.mxu0 0.0
        %1781 = vmatpush1.msra.mxu0 0.0
        %1782 = vmatprep.subr.mxu0 0.0
        %1783 = vmatpush1.msra.mxu0 0.0
        %1784 = vmatprep.subr.mxu0 0.0
        %1785 = vmatpush1.msra.mxu0 0.0
        %1786 = vmatprep.subr.mxu0 0.0
        %1787 = vmatpush1.msra.mxu0 0.0
        %1788 = vmatprep.subr.mxu0 0.0
        %1789 = vmatpush1.msra.mxu0 0.0
        %1790 = vmatprep.subr.mxu0 0.0
        %1791 = vmatpush1.msra.mxu0 0.0
        %1792 = vmatprep.subr.mxu0 0.0
        %1793 = vmatpush1.msra.mxu0 0.0
        %1794 = vmatprep.subr.mxu0 0.0
        %1795 = vmatpush1.msra.mxu0 0.0
        %1796 = vmatprep.subr.mxu0 0.0
        %1797 = vmatpush1.msra.mxu0 0.0
        %1798 = vmatprep.subr.mxu0 0.0
        %1799 = vmatpush1.msra.mxu0 0.0
        %1800 = vmatprep.subr.mxu0 0.0
        %1801 = vmatpush1.msra.mxu0 0.0
        %1802 = vmatprep.subr.mxu0 0.0
        %1803 = vmatpush1.msra.mxu0 0.0
        %1804 = vmatprep.subr.mxu0 0.0
        %1805 = vmatpush1.msra.mxu0 0.0
        %1806 = vmatprep.subr.mxu0 0.0
        %1807 = vmatpush1.msra.mxu0 0.0
        %1808 = vmatprep.subr.mxu0 0.0
        %1809 = vmatpush1.msra.mxu0 0.0
        %1810 = vmatprep.subr.mxu0 0.0
        %1811 = vmatpush1.msra.mxu0 0.0
        %1812 = vmatprep.subr.mxu0 0.0
        %1813 = vmatpush1.msra.mxu0 0.0
        %1814 = vmatprep.subr.mxu0 0.0
        %1815 = vmatpush1.msra.mxu0 0.0
        %1816 = vmatprep.subr.mxu0 0.0
        %1817 = vmatpush1.msra.mxu0 0.0
        %1818 = vmatprep.subr.mxu0 0.0
        %1819 = vmatpush1.msra.mxu0 0.0
        %1820 = vmatprep.subr.mxu0 0.0
        %1821 = vmatpush1.msra.mxu0 0.0
        %1822 = vmatprep.subr.mxu0 0.0
        %1823 = vmatpush1.msra.mxu0 0.0
        %1824 = vmatprep.subr.mxu0 0.0
        %1825 = vmatpush1.msra.mxu0 0.0
        %1826 = vmatprep.mubr.f32.mxu0 0.0
        %1827 = vmatmul.mubr.f32.gmra.mrb[0].mxu0 %v1757
        %v1828 = vpop.f32.mrb[0].mxu0
        %v1829 = vadd.f32 0.0, %v1828
        %v1830 = vpop.f32.mrb[0].mxu0
        %1831 = vdwg.mxu0
        %v1833 = vsel %vm1602, %v1597, 0
        %v1836 = vsel %vm1606, %v829, 0
        %1838 = vmatprep.subr.mxu0 0.0
        %1839 = vmatpush1.msra.mxu0 %v1836
        %1840 = vmatprep.subr.mxu0 0.0
        %1841 = vmatpush1.msra.mxu0 0.0
        %1842 = vmatprep.subr.mxu0 0.0
        %1843 = vmatpush1.msra.mxu0 0.0
        %1844 = vmatprep.subr.mxu0 0.0
        %1845 = vmatpush1.msra.mxu0 0.0
        %1846 = vmatprep.subr.mxu0 0.0
        %1847 = vmatpush1.msra.mxu0 0.0
        %1848 = vmatprep.subr.mxu0 0.0
        %1849 = vmatpush1.msra.mxu0 0.0
        %1850 = vmatprep.subr.mxu0 0.0
        %1851 = vmatpush1.msra.mxu0 0.0
        %1852 = vmatprep.subr.mxu0 0.0
        %1853 = vmatpush1.msra.mxu0 0.0
        %1854 = vmatprep.subr.mxu0 0.0
        %1855 = vmatpush1.msra.mxu0 0.0
        %1856 = vmatprep.subr.mxu0 0.0
        %1857 = vmatpush1.msra.mxu0 0.0
        %1858 = vmatprep.subr.mxu0 0.0
        %1859 = vmatpush1.msra.mxu0 0.0
        %1860 = vmatprep.subr.mxu0 0.0
        %1861 = vmatpush1.msra.mxu0 0.0
        %1862 = vmatprep.subr.mxu0 0.0
        %1863 = vmatpush1.msra.mxu0 0.0
        %1864 = vmatprep.subr.mxu0 0.0
        %1865 = vmatpush1.msra.mxu0 0.0
        %1866 = vmatprep.subr.mxu0 0.0
        %1867 = vmatpush1.msra.mxu0 0.0
        %1868 = vmatprep.subr.mxu0 0.0
        %1869 = vmatpush1.msra.mxu0 0.0
        %1870 = vmatprep.subr.mxu0 0.0
        %1871 = vmatpush1.msra.mxu0 0.0
        %1872 = vmatprep.subr.mxu0 0.0
        %1873 = vmatpush1.msra.mxu0 0.0
        %1874 = vmatprep.subr.mxu0 0.0
        %1875 = vmatpush1.msra.mxu0 0.0
        %1876 = vmatprep.subr.mxu0 0.0
        %1877 = vmatpush1.msra.mxu0 0.0
        %1878 = vmatprep.subr.mxu0 0.0
        %1879 = vmatpush1.msra.mxu0 0.0
        %1880 = vmatprep.subr.mxu0 0.0
        %1881 = vmatpush1.msra.mxu0 0.0
        %1882 = vmatprep.subr.mxu0 0.0
        %1883 = vmatpush1.msra.mxu0 0.0
        %1884 = vmatprep.subr.mxu0 0.0
        %1885 = vmatpush1.msra.mxu0 0.0
        %1886 = vmatprep.subr.mxu0 0.0
        %1887 = vmatpush1.msra.mxu0 0.0
        %1888 = vmatprep.subr.mxu0 0.0
        %1889 = vmatpush1.msra.mxu0 0.0
        %1890 = vmatprep.subr.mxu0 0.0
        %1891 = vmatpush1.msra.mxu0 0.0
        %1892 = vmatprep.subr.mxu0 0.0
        %1893 = vmatpush1.msra.mxu0 0.0
        %1894 = vmatprep.subr.mxu0 0.0
        %1895 = vmatpush1.msra.mxu0 0.0
        %1896 = vmatprep.subr.mxu0 0.0
        %1897 = vmatpush1.msra.mxu0 0.0
        %1898 = vmatprep.subr.mxu0 0.0
        %1899 = vmatpush1.msra.mxu0 0.0
        %1900 = vmatprep.subr.mxu0 0.0
        %1901 = vmatpush1.msra.mxu0 0.0
        %1902 = vmatprep.mubr.f32.mxu0 0.0
        %1903 = vmatmul.mubr.f32.gmra.mrb[0].mxu0 %v1833
        %v1904 = vpop.f32.mrb[0].mxu0
        %v1905 = vadd.f32 0.0, %v1904
        %v1906 = vpop.f32.mrb[0].mxu0
        %1907 = vdwg.mxu0
        %v1909 = vsel %vm1602, %v1598, 0
        %v1912 = vsel %vm1606, %v820, 0
        %1914 = vmatprep.subr.mxu0 0.0
        %1915 = vmatpush1.msra.mxu0 %v1912
        %1916 = vmatprep.subr.mxu0 0.0
        %1917 = vmatpush1.msra.mxu0 0.0
        %1918 = vmatprep.subr.mxu0 0.0
        %1919 = vmatpush1.msra.mxu0 0.0
        %1920 = vmatprep.subr.mxu0 0.0
        %1921 = vmatpush1.msra.mxu0 0.0
        %1922 = vmatprep.subr.mxu0 0.0
        %1923 = vmatpush1.msra.mxu0 0.0
        %1924 = vmatprep.subr.mxu0 0.0
        %1925 = vmatpush1.msra.mxu0 0.0
        %1926 = vmatprep.subr.mxu0 0.0
        %1927 = vmatpush1.msra.mxu0 0.0
        %1928 = vmatprep.subr.mxu0 0.0
        %1929 = vmatpush1.msra.mxu0 0.0
        %1930 = vmatprep.subr.mxu0 0.0
        %1931 = vmatpush1.msra.mxu0 0.0
        %1932 = vmatprep.subr.mxu0 0.0
        %1933 = vmatpush1.msra.mxu0 0.0
        %1934 = vmatprep.subr.mxu0 0.0
        %1935 = vmatpush1.msra.mxu0 0.0
        %1936 = vmatprep.subr.mxu0 0.0
        %1937 = vmatpush1.msra.mxu0 0.0
        %1938 = vmatprep.subr.mxu0 0.0
        %1939 = vmatpush1.msra.mxu0 0.0
        %1940 = vmatprep.subr.mxu0 0.0
        %1941 = vmatpush1.msra.mxu0 0.0
        %1942 = vmatprep.subr.mxu0 0.0
        %1943 = vmatpush1.msra.mxu0 0.0
        %1944 = vmatprep.subr.mxu0 0.0
        %1945 = vmatpush1.msra.mxu0 0.0
        %1946 = vmatprep.subr.mxu0 0.0
        %1947 = vmatpush1.msra.mxu0 0.0
        %1948 = vmatprep.subr.mxu0 0.0
        %1949 = vmatpush1.msra.mxu0 0.0
        %1950 = vmatprep.subr.mxu0 0.0
        %1951 = vmatpush1.msra.mxu0 0.0
        %1952 = vmatprep.subr.mxu0 0.0
        %1953 = vmatpush1.msra.mxu0 0.0
        %1954 = vmatprep.subr.mxu0 0.0
        %1955 = vmatpush1.msra.mxu0 0.0
        %1956 = vmatprep.subr.mxu0 0.0
        %1957 = vmatpush1.msra.mxu0 0.0
        %1958 = vmatprep.subr.mxu0 0.0
        %1959 = vmatpush1.msra.mxu0 0.0
        %1960 = vmatprep.subr.mxu0 0.0
        %1961 = vmatpush1.msra.mxu0 0.0
        %1962 = vmatprep.subr.mxu0 0.0
        %1963 = vmatpush1.msra.mxu0 0.0
        %1964 = vmatprep.subr.mxu0 0.0
        %1965 = vmatpush1.msra.mxu0 0.0
        %1966 = vmatprep.subr.mxu0 0.0
        %1967 = vmatpush1.msra.mxu0 0.0
        %1968 = vmatprep.subr.mxu0 0.0
        %1969 = vmatpush1.msra.mxu0 0.0
        %1970 = vmatprep.subr.mxu0 0.0
        %1971 = vmatpush1.msra.mxu0 0.0
        %1972 = vmatprep.subr.mxu0 0.0
        %1973 = vmatpush1.msra.mxu0 0.0
        %1974 = vmatprep.subr.mxu0 0.0
        %1975 = vmatpush1.msra.mxu0 0.0
        %1976 = vmatprep.subr.mxu0 0.0
        %1977 = vmatpush1.msra.mxu0 0.0
        %1978 = vmatprep.mubr.f32.mxu0 0.0
        %1979 = vmatmul.mubr.f32.gmra.mrb[0].mxu0 %v1909
        %v1980 = vpop.f32.mrb[0].mxu0
        %v1981 = vadd.f32 0.0, %v1980
        %v1982 = vpop.f32.mrb[0].mxu0
        %1983 = vdwg.mxu0
        %v1985 = vsel %vm1602, %v1599, 0
        %v1988 = vsel %vm1606, %v830, 0
        %1990 = vmatprep.subr.mxu0 0.0
        %1991 = vmatpush1.msra.mxu0 %v1988
        %1992 = vmatprep.subr.mxu0 0.0
        %1993 = vmatpush1.msra.mxu0 0.0
        %1994 = vmatprep.subr.mxu0 0.0
        %1995 = vmatpush1.msra.mxu0 0.0
        %1996 = vmatprep.subr.mxu0 0.0
        %1997 = vmatpush1.msra.mxu0 0.0
        %1998 = vmatprep.subr.mxu0 0.0
        %1999 = vmatpush1.msra.mxu0 0.0
        %2000 = vmatprep.subr.mxu0 0.0
        %2001 = vmatpush1.msra.mxu0 0.0
        %2002 = vmatprep.subr.mxu0 0.0
        %2003 = vmatpush1.msra.mxu0 0.0
        %2004 = vmatprep.subr.mxu0 0.0
        %2005 = vmatpush1.msra.mxu0 0.0
        %2006 = vmatprep.subr.mxu0 0.0
        %2007 = vmatpush1.msra.mxu0 0.0
        %2008 = vmatprep.subr.mxu0 0.0
        %2009 = vmatpush1.msra.mxu0 0.0
        %2010 = vmatprep.subr.mxu0 0.0
        %2011 = vmatpush1.msra.mxu0 0.0
        %2012 = vmatprep.subr.mxu0 0.0
        %2013 = vmatpush1.msra.mxu0 0.0
        %2014 = vmatprep.subr.mxu0 0.0
        %2015 = vmatpush1.msra.mxu0 0.0
        %2016 = vmatprep.subr.mxu0 0.0
        %2017 = vmatpush1.msra.mxu0 0.0
        %2018 = vmatprep.subr.mxu0 0.0
        %2019 = vmatpush1.msra.mxu0 0.0
        %2020 = vmatprep.subr.mxu0 0.0
        %2021 = vmatpush1.msra.mxu0 0.0
        %2022 = vmatprep.subr.mxu0 0.0
        %2023 = vmatpush1.msra.mxu0 0.0
        %2024 = vmatprep.subr.mxu0 0.0
        %2025 = vmatpush1.msra.mxu0 0.0
        %2026 = vmatprep.subr.mxu0 0.0
        %2027 = vmatpush1.msra.mxu0 0.0
        %2028 = vmatprep.subr.mxu0 0.0
        %2029 = vmatpush1.msra.mxu0 0.0
        %2030 = vmatprep.subr.mxu0 0.0
        %2031 = vmatpush1.msra.mxu0 0.0
        %2032 = vmatprep.subr.mxu0 0.0
        %2033 = vmatpush1.msra.mxu0 0.0
        %2034 = vmatprep.subr.mxu0 0.0
        %2035 = vmatpush1.msra.mxu0 0.0
        %2036 = vmatprep.subr.mxu0 0.0
        %2037 = vmatpush1.msra.mxu0 0.0
        %2038 = vmatprep.subr.mxu0 0.0
        %2039 = vmatpush1.msra.mxu0 0.0
        %2040 = vmatprep.subr.mxu0 0.0
        %2041 = vmatpush1.msra.mxu0 0.0
        %2042 = vmatprep.subr.mxu0 0.0
        %2043 = vmatpush1.msra.mxu0 0.0
        %2044 = vmatprep.subr.mxu0 0.0
        %2045 = vmatpush1.msra.mxu0 0.0
        %2046 = vmatprep.subr.mxu0 0.0
        %2047 = vmatpush1.msra.mxu0 0.0
        %2048 = vmatprep.subr.mxu0 0.0
        %2049 = vmatpush1.msra.mxu0 0.0
        %2050 = vmatprep.subr.mxu0 0.0
        %2051 = vmatpush1.msra.mxu0 0.0
        %2052 = vmatprep.subr.mxu0 0.0
        %2053 = vmatpush1.msra.mxu0 0.0
        %2054 = vmatprep.mubr.f32.mxu0 0.0
        %2055 = vmatmul.mubr.f32.gmra.mrb[0].mxu0 %v1985
        %v2056 = vpop.f32.mrb[0].mxu0
        %v2057 = vadd.f32 0.0, %v2056
        %v2058 = vpop.f32.mrb[0].mxu0
        %2059 = vdwg.mxu0
        %v2061 = vsel %vm1602, %v1600, 0
        %v2064 = vsel %vm1606, %v827, 0
        %2066 = vmatprep.subr.mxu0 0.0
        %2067 = vmatpush1.msra.mxu0 %v2064
        %2068 = vmatprep.subr.mxu0 0.0
        %2069 = vmatpush1.msra.mxu0 0.0
        %2070 = vmatprep.subr.mxu0 0.0
        %2071 = vmatpush1.msra.mxu0 0.0
        %2072 = vmatprep.subr.mxu0 0.0
        %2073 = vmatpush1.msra.mxu0 0.0
        %2074 = vmatprep.subr.mxu0 0.0
        %2075 = vmatpush1.msra.mxu0 0.0
        %2076 = vmatprep.subr.mxu0 0.0
        %2077 = vmatpush1.msra.mxu0 0.0
        %2078 = vmatprep.subr.mxu0 0.0
        %2079 = vmatpush1.msra.mxu0 0.0
        %2080 = vmatprep.subr.mxu0 0.0
        %2081 = vmatpush1.msra.mxu0 0.0
        %2082 = vmatprep.subr.mxu0 0.0
        %2083 = vmatpush1.msra.mxu0 0.0
        %2084 = vmatprep.subr.mxu0 0.0
        %2085 = vmatpush1.msra.mxu0 0.0
        %2086 = vmatprep.subr.mxu0 0.0
        %2087 = vmatpush1.msra.mxu0 0.0
        %2088 = vmatprep.subr.mxu0 0.0
        %2089 = vmatpush1.msra.mxu0 0.0
        %2090 = vmatprep.subr.mxu0 0.0
        %2091 = vmatpush1.msra.mxu0 0.0
        %2092 = vmatprep.subr.mxu0 0.0
        %2093 = vmatpush1.msra.mxu0 0.0
        %2094 = vmatprep.subr.mxu0 0.0
        %2095 = vmatpush1.msra.mxu0 0.0
        %2096 = vmatprep.subr.mxu0 0.0
        %2097 = vmatpush1.msra.mxu0 0.0
        %2098 = vmatprep.subr.mxu0 0.0
        %2099 = vmatpush1.msra.mxu0 0.0
        %2100 = vmatprep.subr.mxu0 0.0
        %2101 = vmatpush1.msra.mxu0 0.0
        %2102 = vmatprep.subr.mxu0 0.0
        %2103 = vmatpush1.msra.mxu0 0.0
        %2104 = vmatprep.subr.mxu0 0.0
        %2105 = vmatpush1.msra.mxu0 0.0
        %2106 = vmatprep.subr.mxu0 0.0
        %2107 = vmatpush1.msra.mxu0 0.0
        %2108 = vmatprep.subr.mxu0 0.0
        %2109 = vmatpush1.msra.mxu0 0.0
        %2110 = vmatprep.subr.mxu0 0.0
        %2111 = vmatpush1.msra.mxu0 0.0
        %2112 = vmatprep.subr.mxu0 0.0
        %2113 = vmatpush1.msra.mxu0 0.0
        %2114 = vmatprep.subr.mxu0 0.0
        %2115 = vmatpush1.msra.mxu0 0.0
        %2116 = vmatprep.subr.mxu0 0.0
        %2117 = vmatpush1.msra.mxu0 0.0
        %2118 = vmatprep.subr.mxu0 0.0
        %2119 = vmatpush1.msra.mxu0 0.0
        %2120 = vmatprep.subr.mxu0 0.0
        %2121 = vmatpush1.msra.mxu0 0.0
        %2122 = vmatprep.subr.mxu0 0.0
        %2123 = vmatpush1.msra.mxu0 0.0
        %2124 = vmatprep.subr.mxu0 0.0
        %2125 = vmatpush1.msra.mxu0 0.0
        %2126 = vmatprep.subr.mxu0 0.0
        %2127 = vmatpush1.msra.mxu0 0.0
        %2128 = vmatprep.subr.mxu0 0.0
        %2129 = vmatpush1.msra.mxu0 0.0
        %2130 = vmatprep.mubr.f32.mxu0 0.0
        %2131 = vmatmul.mubr.f32.gmra.mrb[0].mxu0 %v2061
        %v2132 = vpop.f32.mrb[0].mxu0
        %v2133 = vadd.f32 0.0, %v2132
        %v2134 = vpop.f32.mrb[0].mxu0
        %2135 = vdwg.mxu0
        %v2137 = vsel %vm1602, %v1601, 0
        %v2140 = vsel %vm1606, %v831, 0
        %2142 = vmatprep.subr.mxu0 0.0
        %2143 = vmatpush1.msra.mxu0 %v2140
        %2144 = vmatprep.subr.mxu0 0.0
        %2145 = vmatpush1.msra.mxu0 0.0
        %2146 = vmatprep.subr.mxu0 0.0
        %2147 = vmatpush1.msra.mxu0 0.0
        %2148 = vmatprep.subr.mxu0 0.0
        %2149 = vmatpush1.msra.mxu0 0.0
        %2150 = vmatprep.subr.mxu0 0.0
        %2151 = vmatpush1.msra.mxu0 0.0
        %2152 = vmatprep.subr.mxu0 0.0
        %2153 = vmatpush1.msra.mxu0 0.0
        %2154 = vmatprep.subr.mxu0 0.0
        %2155 = vmatpush1.msra.mxu0 0.0
        %2156 = vmatprep.subr.mxu0 0.0
        %2157 = vmatpush1.msra.mxu0 0.0
        %2158 = vmatprep.subr.mxu0 0.0
        %2159 = vmatpush1.msra.mxu0 0.0
        %2160 = vmatprep.subr.mxu0 0.0
        %2161 = vmatpush1.msra.mxu0 0.0
        %2162 = vmatprep.subr.mxu0 0.0
        %2163 = vmatpush1.msra.mxu0 0.0
        %2164 = vmatprep.subr.mxu0 0.0
        %2165 = vmatpush1.msra.mxu0 0.0
        %2166 = vmatprep.subr.mxu0 0.0
        %2167 = vmatpush1.msra.mxu0 0.0
        %2168 = vmatprep.subr.mxu0 0.0
        %2169 = vmatpush1.msra.mxu0 0.0
        %2170 = vmatprep.subr.mxu0 0.0
        %2171 = vmatpush1.msra.mxu0 0.0
        %2172 = vmatprep.subr.mxu0 0.0
        %2173 = vmatpush1.msra.mxu0 0.0
        %2174 = vmatprep.subr.mxu0 0.0
        %2175 = vmatpush1.msra.mxu0 0.0
        %2176 = vmatprep.subr.mxu0 0.0
        %2177 = vmatpush1.msra.mxu0 0.0
        %2178 = vmatprep.subr.mxu0 0.0
        %2179 = vmatpush1.msra.mxu0 0.0
        %2180 = vmatprep.subr.mxu0 0.0
        %2181 = vmatpush1.msra.mxu0 0.0
        %2182 = vmatprep.subr.mxu0 0.0
        %2183 = vmatpush1.msra.mxu0 0.0
        %2184 = vmatprep.subr.mxu0 0.0
        %2185 = vmatpush1.msra.mxu0 0.0
        %2186 = vmatprep.subr.mxu0 0.0
        %2187 = vmatpush1.msra.mxu0 0.0
        %2188 = vmatprep.subr.mxu0 0.0
        %2189 = vmatpush1.msra.mxu0 0.0
        %2190 = vmatprep.subr.mxu0 0.0
        %2191 = vmatpush1.msra.mxu0 0.0
        %2192 = vmatprep.subr.mxu0 0.0
        %2193 = vmatpush1.msra.mxu0 0.0
        %2194 = vmatprep.subr.mxu0 0.0
        %2195 = vmatpush1.msra.mxu0 0.0
        %2196 = vmatprep.subr.mxu0 0.0
        %2197 = vmatpush1.msra.mxu0 0.0
        %2198 = vmatprep.subr.mxu0 0.0
        %2199 = vmatpush1.msra.mxu0 0.0
        %2200 = vmatprep.subr.mxu0 0.0
        %2201 = vmatpush1.msra.mxu0 0.0
        %2202 = vmatprep.subr.mxu0 0.0
        %2203 = vmatpush1.msra.mxu0 0.0
        %2204 = vmatprep.subr.mxu0 0.0
        %2205 = vmatpush1.msra.mxu0 0.0
        %2206 = vmatprep.mubr.f32.mxu0 0.0
        %2207 = vmatmul.mubr.f32.gmra.mrb[0].mxu0 %v2137
        %v2208 = vpop.f32.mrb[0].mxu0
        %v2209 = vadd.f32 0.0, %v2208
        %v2210 = vpop.f32.mrb[0].mxu0
        %2211 = vdwg.mxu0
        %v2212 = vcombine.low %v1677, %v1829
        %v2214 = vunpack.c.l.s4 1983009808
        %v2215 = vunpack.c.0.s8 %v2214
        %v2216 = vlaneseq
        %v2217 = vshrl.u32 %v2216, 7
        %v2218 = vsub.s32 %v2215, %v2217
        %v2219 = vrot.slane %v2212, %v2218
        %v2220 = vcombine.low %v1753, %v1905
        %v2222 = vunpack.c.l.s4 1983009808
        %v2223 = vunpack.c.0.s8 %v2222
        %v2224 = vlaneseq
        %v2225 = vshrl.u32 %v2224, 7
        %v2226 = vsub.s32 %v2223, %v2225
        %v2227 = vrot.slane %v2220, %v2226
        %v2228 = vcombine.low %v1981, %v2133
        %v2230 = vunpack.c.l.s4 1983009808
        %v2231 = vunpack.c.0.s8 %v2230
        %v2232 = vlaneseq
        %v2233 = vshrl.u32 %v2232, 7
        %v2234 = vsub.s32 %v2231, %v2233
        %v2235 = vrot.slane %v2228, %v2234
        %v2236 = vcombine.low %v2057, %v2209
        %v2238 = vunpack.c.l.s4 1983009808
        %v2239 = vunpack.c.0.s8 %v2238
        %v2240 = vlaneseq
        %v2241 = vshrl.u32 %v2240, 7
        %v2242 = vsub.s32 %v2239, %v2241
        %v2243 = vrot.slane %v2236, %v2242
        %v2244 = vcombine.low %v2219, %v2227
        %v2245 = vcombine.high %v2219, %v2227
        %v2247 = vunpack.c.l.s4 1934713408
        %v2248 = vunpack.c.0.s8 %v2247
        %v2249 = vlaneseq
        %v2250 = vshrl.u32 %v2249, 7
        %v2251 = vsub.s32 %v2248, %v2250
        %v2252 = vrot.slane %v2244, %v2251
        %v2254 = vunpack.c.l.s4 1934713408
        %v2255 = vunpack.c.0.s8 %v2254
        %v2256 = vlaneseq
        %v2257 = vshrl.u32 %v2256, 7
        %v2258 = vsub.s32 %v2255, %v2257
        %v2259 = vrot.slane %v2245, %v2258
        %v2260 = vcombine.low %v2235, %v2243
        %v2261 = vcombine.high %v2235, %v2243
        %v2263 = vunpack.c.l.s4 1934713408
        %v2264 = vunpack.c.0.s8 %v2263
        %v2265 = vlaneseq
        %v2266 = vshrl.u32 %v2265, 7
        %v2267 = vsub.s32 %v2264, %v2266
        %v2268 = vrot.slane %v2260, %v2267
        %v2270 = vunpack.c.l.s4 1934713408
        %v2271 = vunpack.c.0.s8 %v2270
        %v2272 = vlaneseq
        %v2273 = vshrl.u32 %v2272, 7
        %v2274 = vsub.s32 %v2271, %v2273
        %v2275 = vrot.slane %v2261, %v2274
        %v2276 = vcombine.low %v2252, %v2268
        %v2277 = vcombine.high %v2252, %v2268
        %v2278 = vcombine.low %v2259, %v2275
        %v2279 = vcombine.high %v2259, %v2275
        %2281 = vrot.lane.b32.xlu0 %v2277, 32
        %v2282 = vpop.permute.xlu0 %2281
        %2285 = vrot.lane.b32.xlu0 %v2278, 64
        %v2286 = vpop.permute.xlu0 %2285
        %2289 = vrot.lane.b32.xlu0 %v2279, 96
        %v2290 = vpop.permute.xlu0 %2289
        %vm2292 = vcmask 261120
        %v2293 = vsel %vm2292, %v2276, %v2282
        %vm2294 = vcmask 523264
        %v2295 = vsel %vm2294, %v2293, %v2286
        %vm2296 = vcmask 785408
        %v2297 = vsel %vm2296, %v2295, %v2290
        %v2298 = vld [vmem:[#allocation8] sm:$0xff]
        %v2299 = vld [vmem:[#allocation8 + $0x8] sm:$0xff]
        %v2300 = vld [vmem:[#allocation8 + $0x10] sm:$0xff]
        %v2301 = vld [vmem:[#allocation8 + $0x18] sm:$0xff]
        %v2302 = vld [vmem:[#allocation8 + $0x20] sm:$0xff]
        %v2303 = vld [vmem:[#allocation8 + $0x28] sm:$0xff]
        %v2304 = vld [vmem:[#allocation8 + $0x30] sm:$0xff]
        %v2305 = vld [vmem:[#allocation8 + $0x38] sm:$0xff]
        %v2306 = vld [vmem:[#allocation8 + $0x40] sm:$0xff]
        %v2307 = vld [vmem:[#allocation8 + $0x48] sm:$0xff]
        %v2308 = vld [vmem:[#allocation8 + $0x50] sm:$0xff]
        %v2309 = vld [vmem:[#allocation8 + $0x58] sm:$0xff]
        %v2310 = vld [vmem:[#allocation8 + $0x60] sm:$0xff]
        %v2311 = vld [vmem:[#allocation8 + $0x68] sm:$0xff]
        %v2312 = vld [vmem:[#allocation8 + $0x70] sm:$0xff]
        %v2313 = vld [vmem:[#allocation8 + $0x78] sm:$0xff]
        %2314 = vrot.lane.b32.xlu0 %v650, 112
        %v2315 = vpop.permute.xlu0 %2314
        %2316 = vrot.lane.b32.xlu0 %v728, 112
        %v2317 = vpop.permute.xlu0 %2316
        %v2318 = vsel %vm832, %v2315, 0
        %v2320 = vsel %vm832, %v2317, 0
        %2322 = vmatprep.subr.mxu0 0.0
        %2323 = vmatpush1.xpose.msra.mxu0 %v2320
        %2324 = vmatprep.subr.mxu0 0.0
        %2325 = vmatpush1.xpose.msra.mxu0 0.0
        %2326 = vmatprep.subr.mxu0 0.0
        %2327 = vmatpush1.xpose.msra.mxu0 0.0
        %2328 = vmatprep.subr.mxu0 0.0
        %2329 = vmatpush1.xpose.msra.mxu0 0.0
        %2330 = vmatprep.subr.mxu0 0.0
        %2331 = vmatpush1.xpose.msra.mxu0 0.0
        %2332 = vmatprep.subr.mxu0 0.0
        %2333 = vmatpush1.xpose.msra.mxu0 0.0
        %2334 = vmatprep.subr.mxu0 0.0
        %2335 = vmatpush1.xpose.msra.mxu0 0.0
        %2336 = vmatprep.subr.mxu0 0.0
        %2337 = vmatpush1.xpose.msra.mxu0 0.0
        %2338 = vmatprep.subr.mxu0 0.0
        %2339 = vmatpush1.xpose.msra.mxu0 0.0
        %2340 = vmatprep.subr.mxu0 0.0
        %2341 = vmatpush1.xpose.msra.mxu0 0.0
        %2342 = vmatprep.subr.mxu0 0.0
        %2343 = vmatpush1.xpose.msra.mxu0 0.0
        %2344 = vmatprep.subr.mxu0 0.0
        %2345 = vmatpush1.xpose.msra.mxu0 0.0
        %2346 = vmatprep.subr.mxu0 0.0
        %2347 = vmatpush1.xpose.msra.mxu0 0.0
        %2348 = vmatprep.subr.mxu0 0.0
        %2349 = vmatpush1.xpose.msra.mxu0 0.0
        %2350 = vmatprep.subr.mxu0 0.0
        %2351 = vmatpush1.xpose.msra.mxu0 0.0
        %2352 = vmatprep.subr.mxu0 0.0
        %2353 = vmatpush1.xpose.msra.mxu0 0.0
        %2354 = vmatprep.subr.mxu0 0.0
        %2355 = vmatpush1.xpose.msra.mxu0 0.0
        %2356 = vmatprep.subr.mxu0 0.0
        %2357 = vmatpush1.xpose.msra.mxu0 0.0
        %2358 = vmatprep.subr.mxu0 0.0
        %2359 = vmatpush1.xpose.msra.mxu0 0.0
        %2360 = vmatprep.subr.mxu0 0.0
        %2361 = vmatpush1.xpose.msra.mxu0 0.0
        %2362 = vmatprep.subr.mxu0 0.0
        %2363 = vmatpush1.xpose.msra.mxu0 0.0
        %2364 = vmatprep.subr.mxu0 0.0
        %2365 = vmatpush1.xpose.msra.mxu0 0.0
        %2366 = vmatprep.subr.mxu0 0.0
        %2367 = vmatpush1.xpose.msra.mxu0 0.0
        %2368 = vmatprep.subr.mxu0 0.0
        %2369 = vmatpush1.xpose.msra.mxu0 0.0
        %2370 = vmatprep.subr.mxu0 0.0
        %2371 = vmatpush1.xpose.msra.mxu0 0.0
        %2372 = vmatprep.subr.mxu0 0.0
        %2373 = vmatpush1.xpose.msra.mxu0 0.0
        %2374 = vmatprep.subr.mxu0 0.0
        %2375 = vmatpush1.xpose.msra.mxu0 0.0
        %2376 = vmatprep.subr.mxu0 0.0
        %2377 = vmatpush1.xpose.msra.mxu0 0.0
        %2378 = vmatprep.subr.mxu0 0.0
        %2379 = vmatpush1.xpose.msra.mxu0 0.0
        %2380 = vmatprep.subr.mxu0 0.0
        %2381 = vmatpush1.xpose.msra.mxu0 0.0
        %2382 = vmatprep.subr.mxu0 0.0
        %2383 = vmatpush1.xpose.msra.mxu0 0.0
        %2384 = vmatprep.subr.mxu0 0.0
        %2385 = vmatpush1.xpose.msra.mxu0 0.0
        %2386 = vmatprep.mubr.f32.mxu0 0.0
        %2387 = vmatmul.mubr.f32.gmra.mrb[0].mxu0 %v2318
        %v2388 = vpop.f32.mrb[0].mxu0
        %v2389 = vadd.f32 0.0, %v2388
        %v2390 = vpop.f32.mrb[0].mxu0
        %2391 = vdwg.mxu0
        %2392 = vrot.lane.b32.xlu0 %v674, 112
        %v2393 = vpop.permute.xlu0 %2392
        %2394 = vrot.lane.b32.xlu0 %v752, 112
        %v2395 = vpop.permute.xlu0 %2394
        %v2396 = vsel %vm832, %v2393, 0
        %v2398 = vsel %vm832, %v2395, 0
        %2400 = vmatprep.subr.mxu0 0.0
        %2401 = vmatpush1.xpose.msra.mxu0 %v2398
        %2402 = vmatprep.subr.mxu0 0.0
        %2403 = vmatpush1.xpose.msra.mxu0 0.0
        %2404 = vmatprep.subr.mxu0 0.0
        %2405 = vmatpush1.xpose.msra.mxu0 0.0
        %2406 = vmatprep.subr.mxu0 0.0
        %2407 = vmatpush1.xpose.msra.mxu0 0.0
        %2408 = vmatprep.subr.mxu0 0.0
        %2409 = vmatpush1.xpose.msra.mxu0 0.0
        %2410 = vmatprep.subr.mxu0 0.0
        %2411 = vmatpush1.xpose.msra.mxu0 0.0
        %2412 = vmatprep.subr.mxu0 0.0
        %2413 = vmatpush1.xpose.msra.mxu0 0.0
        %2414 = vmatprep.subr.mxu0 0.0
        %2415 = vmatpush1.xpose.msra.mxu0 0.0
        %2416 = vmatprep.subr.mxu0 0.0
        %2417 = vmatpush1.xpose.msra.mxu0 0.0
        %2418 = vmatprep.subr.mxu0 0.0
        %2419 = vmatpush1.xpose.msra.mxu0 0.0
        %2420 = vmatprep.subr.mxu0 0.0
        %2421 = vmatpush1.xpose.msra.mxu0 0.0
        %2422 = vmatprep.subr.mxu0 0.0
        %2423 = vmatpush1.xpose.msra.mxu0 0.0
        %2424 = vmatprep.subr.mxu0 0.0
        %2425 = vmatpush1.xpose.msra.mxu0 0.0
        %2426 = vmatprep.subr.mxu0 0.0
        %2427 = vmatpush1.xpose.msra.mxu0 0.0
        %2428 = vmatprep.subr.mxu0 0.0
        %2429 = vmatpush1.xpose.msra.mxu0 0.0
        %2430 = vmatprep.subr.mxu0 0.0
        %2431 = vmatpush1.xpose.msra.mxu0 0.0
        %2432 = vmatprep.subr.mxu0 0.0
        %2433 = vmatpush1.xpose.msra.mxu0 0.0
        %2434 = vmatprep.subr.mxu0 0.0
        %2435 = vmatpush1.xpose.msra.mxu0 0.0
        %2436 = vmatprep.subr.mxu0 0.0
        %2437 = vmatpush1.xpose.msra.mxu0 0.0
        %2438 = vmatprep.subr.mxu0 0.0
        %2439 = vmatpush1.xpose.msra.mxu0 0.0
        %2440 = vmatprep.subr.mxu0 0.0
        %2441 = vmatpush1.xpose.msra.mxu0 0.0
        %2442 = vmatprep.subr.mxu0 0.0
        %2443 = vmatpush1.xpose.msra.mxu0 0.0
        %2444 = vmatprep.subr.mxu0 0.0
        %2445 = vmatpush1.xpose.msra.mxu0 0.0
        %2446 = vmatprep.subr.mxu0 0.0
        %2447 = vmatpush1.xpose.msra.mxu0 0.0
        %2448 = vmatprep.subr.mxu0 0.0
        %2449 = vmatpush1.xpose.msra.mxu0 0.0
        %2450 = vmatprep.subr.mxu0 0.0
        %2451 = vmatpush1.xpose.msra.mxu0 0.0
        %2452 = vmatprep.subr.mxu0 0.0
        %2453 = vmatpush1.xpose.msra.mxu0 0.0
        %2454 = vmatprep.subr.mxu0 0.0
        %2455 = vmatpush1.xpose.msra.mxu0 0.0
        %2456 = vmatprep.subr.mxu0 0.0
        %2457 = vmatpush1.xpose.msra.mxu0 0.0
        %2458 = vmatprep.subr.mxu0 0.0
        %2459 = vmatpush1.xpose.msra.mxu0 0.0
        %2460 = vmatprep.subr.mxu0 0.0
        %2461 = vmatpush1.xpose.msra.mxu0 0.0
        %2462 = vmatprep.subr.mxu0 0.0
        %2463 = vmatpush1.xpose.msra.mxu0 0.0
        %2464 = vmatprep.mubr.f32.mxu0 0.0
        %2465 = vmatmul.mubr.f32.gmra.mrb[0].mxu0 %v2396
        %v2466 = vpop.f32.mrb[0].mxu0
        %v2467 = vadd.f32 0.0, %v2466
        %v2468 = vpop.f32.mrb[0].mxu0
        %2469 = vdwg.mxu0
        %2470 = vrot.lane.b32.xlu0 %v657, 112
        %v2471 = vpop.permute.xlu0 %2470
        %2472 = vrot.lane.b32.xlu0 %v735, 112
        %v2473 = vpop.permute.xlu0 %2472
        %v2474 = vsel %vm832, %v2471, 0
        %v2476 = vsel %vm832, %v2473, 0
        %2478 = vmatprep.subr.mxu0 0.0
        %2479 = vmatpush1.xpose.msra.mxu0 %v2476
        %2480 = vmatprep.subr.mxu0 0.0
        %2481 = vmatpush1.xpose.msra.mxu0 0.0
        %2482 = vmatprep.subr.mxu0 0.0
        %2483 = vmatpush1.xpose.msra.mxu0 0.0
        %2484 = vmatprep.subr.mxu0 0.0
        %2485 = vmatpush1.xpose.msra.mxu0 0.0
        %2486 = vmatprep.subr.mxu0 0.0
        %2487 = vmatpush1.xpose.msra.mxu0 0.0
        %2488 = vmatprep.subr.mxu0 0.0
        %2489 = vmatpush1.xpose.msra.mxu0 0.0
        %2490 = vmatprep.subr.mxu0 0.0
        %2491 = vmatpush1.xpose.msra.mxu0 0.0
        %2492 = vmatprep.subr.mxu0 0.0
        %2493 = vmatpush1.xpose.msra.mxu0 0.0
        %2494 = vmatprep.subr.mxu0 0.0
        %2495 = vmatpush1.xpose.msra.mxu0 0.0
        %2496 = vmatprep.subr.mxu0 0.0
        %2497 = vmatpush1.xpose.msra.mxu0 0.0
        %2498 = vmatprep.subr.mxu0 0.0
        %2499 = vmatpush1.xpose.msra.mxu0 0.0
        %2500 = vmatprep.subr.mxu0 0.0
        %2501 = vmatpush1.xpose.msra.mxu0 0.0
        %2502 = vmatprep.subr.mxu0 0.0
        %2503 = vmatpush1.xpose.msra.mxu0 0.0
        %2504 = vmatprep.subr.mxu0 0.0
        %2505 = vmatpush1.xpose.msra.mxu0 0.0
        %2506 = vmatprep.subr.mxu0 0.0
        %2507 = vmatpush1.xpose.msra.mxu0 0.0
        %2508 = vmatprep.subr.mxu0 0.0
        %2509 = vmatpush1.xpose.msra.mxu0 0.0
        %2510 = vmatprep.subr.mxu0 0.0
        %2511 = vmatpush1.xpose.msra.mxu0 0.0
        %2512 = vmatprep.subr.mxu0 0.0
        %2513 = vmatpush1.xpose.msra.mxu0 0.0
        %2514 = vmatprep.subr.mxu0 0.0
        %2515 = vmatpush1.xpose.msra.mxu0 0.0
        %2516 = vmatprep.subr.mxu0 0.0
        %2517 = vmatpush1.xpose.msra.mxu0 0.0
        %2518 = vmatprep.subr.mxu0 0.0
        %2519 = vmatpush1.xpose.msra.mxu0 0.0
        %2520 = vmatprep.subr.mxu0 0.0
        %2521 = vmatpush1.xpose.msra.mxu0 0.0
        %2522 = vmatprep.subr.mxu0 0.0
        %2523 = vmatpush1.xpose.msra.mxu0 0.0
        %2524 = vmatprep.subr.mxu0 0.0
        %2525 = vmatpush1.xpose.msra.mxu0 0.0
        %2526 = vmatprep.subr.mxu0 0.0
        %2527 = vmatpush1.xpose.msra.mxu0 0.0
        %2528 = vmatprep.subr.mxu0 0.0
        %2529 = vmatpush1.xpose.msra.mxu0 0.0
        %2530 = vmatprep.subr.mxu0 0.0
        %2531 = vmatpush1.xpose.msra.mxu0 0.0
        %2532 = vmatprep.subr.mxu0 0.0
        %2533 = vmatpush1.xpose.msra.mxu0 0.0
        %2534 = vmatprep.subr.mxu0 0.0
        %2535 = vmatpush1.xpose.msra.mxu0 0.0
        %2536 = vmatprep.subr.mxu0 0.0
        %2537 = vmatpush1.xpose.msra.mxu0 0.0
        %2538 = vmatprep.subr.mxu0 0.0
        %2539 = vmatpush1.xpose.msra.mxu0 0.0
        %2540 = vmatprep.subr.mxu0 0.0
        %2541 = vmatpush1.xpose.msra.mxu0 0.0
        %2542 = vmatprep.mubr.f32.mxu0 0.0
        %2543 = vmatmul.mubr.f32.gmra.mrb[0].mxu0 %v2474
        %v2544 = vpop.f32.mrb[0].mxu0
        %v2545 = vadd.f32 0.0, %v2544
        %v2546 = vpop.f32.mrb[0].mxu0
        %2547 = vdwg.mxu0
        %2548 = vrot.lane.b32.xlu0 %v675, 112
        %v2549 = vpop.permute.xlu0 %2548
        %2550 = vrot.lane.b32.xlu0 %v753, 112
        %v2551 = vpop.permute.xlu0 %2550
        %v2552 = vsel %vm832, %v2549, 0
        %v2554 = vsel %vm832, %v2551, 0
        %2556 = vmatprep.subr.mxu0 0.0
        %2557 = vmatpush1.xpose.msra.mxu0 %v2554
        %2558 = vmatprep.subr.mxu0 0.0
        %2559 = vmatpush1.xpose.msra.mxu0 0.0
        %2560 = vmatprep.subr.mxu0 0.0
        %2561 = vmatpush1.xpose.msra.mxu0 0.0
        %2562 = vmatprep.subr.mxu0 0.0
        %2563 = vmatpush1.xpose.msra.mxu0 0.0
        %2564 = vmatprep.subr.mxu0 0.0
        %2565 = vmatpush1.xpose.msra.mxu0 0.0
        %2566 = vmatprep.subr.mxu0 0.0
        %2567 = vmatpush1.xpose.msra.mxu0 0.0
        %2568 = vmatprep.subr.mxu0 0.0
        %2569 = vmatpush1.xpose.msra.mxu0 0.0
        %2570 = vmatprep.subr.mxu0 0.0
        %2571 = vmatpush1.xpose.msra.mxu0 0.0
        %2572 = vmatprep.subr.mxu0 0.0
        %2573 = vmatpush1.xpose.msra.mxu0 0.0
        %2574 = vmatprep.subr.mxu0 0.0
        %2575 = vmatpush1.xpose.msra.mxu0 0.0
        %2576 = vmatprep.subr.mxu0 0.0
        %2577 = vmatpush1.xpose.msra.mxu0 0.0
        %2578 = vmatprep.subr.mxu0 0.0
        %2579 = vmatpush1.xpose.msra.mxu0 0.0
        %2580 = vmatprep.subr.mxu0 0.0
        %2581 = vmatpush1.xpose.msra.mxu0 0.0
        %2582 = vmatprep.subr.mxu0 0.0
        %2583 = vmatpush1.xpose.msra.mxu0 0.0
        %2584 = vmatprep.subr.mxu0 0.0
        %2585 = vmatpush1.xpose.msra.mxu0 0.0
        %2586 = vmatprep.subr.mxu0 0.0
        %2587 = vmatpush1.xpose.msra.mxu0 0.0
        %2588 = vmatprep.subr.mxu0 0.0
        %2589 = vmatpush1.xpose.msra.mxu0 0.0
        %2590 = vmatprep.subr.mxu0 0.0
        %2591 = vmatpush1.xpose.msra.mxu0 0.0
        %2592 = vmatprep.subr.mxu0 0.0
        %2593 = vmatpush1.xpose.msra.mxu0 0.0
        %2594 = vmatprep.subr.mxu0 0.0
        %2595 = vmatpush1.xpose.msra.mxu0 0.0
        %2596 = vmatprep.subr.mxu0 0.0
        %2597 = vmatpush1.xpose.msra.mxu0 0.0
        %2598 = vmatprep.subr.mxu0 0.0
        %2599 = vmatpush1.xpose.msra.mxu0 0.0
        %2600 = vmatprep.subr.mxu0 0.0
        %2601 = vmatpush1.xpose.msra.mxu0 0.0
        %2602 = vmatprep.subr.mxu0 0.0
        %2603 = vmatpush1.xpose.msra.mxu0 0.0
        %2604 = vmatprep.subr.mxu0 0.0
        %2605 = vmatpush1.xpose.msra.mxu0 0.0
        %2606 = vmatprep.subr.mxu0 0.0
        %2607 = vmatpush1.xpose.msra.mxu0 0.0
        %2608 = vmatprep.subr.mxu0 0.0
        %2609 = vmatpush1.xpose.msra.mxu0 0.0
        %2610 = vmatprep.subr.mxu0 0.0
        %2611 = vmatpush1.xpose.msra.mxu0 0.0
        %2612 = vmatprep.subr.mxu0 0.0
        %2613 = vmatpush1.xpose.msra.mxu0 0.0
        %2614 = vmatprep.subr.mxu0 0.0
        %2615 = vmatpush1.xpose.msra.mxu0 0.0
        %2616 = vmatprep.subr.mxu0 0.0
        %2617 = vmatpush1.xpose.msra.mxu0 0.0
        %2618 = vmatprep.subr.mxu0 0.0
        %2619 = vmatpush1.xpose.msra.mxu0 0.0
        %2620 = vmatprep.mubr.f32.mxu0 0.0
        %2621 = vmatmul.mubr.f32.gmra.mrb[0].mxu0 %v2552
        %v2622 = vpop.f32.mrb[0].mxu0
        %v2623 = vadd.f32 0.0, %v2622
        %v2624 = vpop.f32.mrb[0].mxu0
        %2625 = vdwg.mxu0
        %2626 = vrot.lane.b32.xlu0 %v666, 112
        %v2627 = vpop.permute.xlu0 %2626
        %2628 = vrot.lane.b32.xlu0 %v744, 112
        %v2629 = vpop.permute.xlu0 %2628
        %v2630 = vsel %vm832, %v2627, 0
        %v2632 = vsel %vm832, %v2629, 0
        %2634 = vmatprep.subr.mxu0 0.0
        %2635 = vmatpush1.xpose.msra.mxu0 %v2632
        %2636 = vmatprep.subr.mxu0 0.0
        %2637 = vmatpush1.xpose.msra.mxu0 0.0
        %2638 = vmatprep.subr.mxu0 0.0
        %2639 = vmatpush1.xpose.msra.mxu0 0.0
        %2640 = vmatprep.subr.mxu0 0.0
        %2641 = vmatpush1.xpose.msra.mxu0 0.0
        %2642 = vmatprep.subr.mxu0 0.0
        %2643 = vmatpush1.xpose.msra.mxu0 0.0
        %2644 = vmatprep.subr.mxu0 0.0
        %2645 = vmatpush1.xpose.msra.mxu0 0.0
        %2646 = vmatprep.subr.mxu0 0.0
        %2647 = vmatpush1.xpose.msra.mxu0 0.0
        %2648 = vmatprep.subr.mxu0 0.0
        %2649 = vmatpush1.xpose.msra.mxu0 0.0
        %2650 = vmatprep.subr.mxu0 0.0
        %2651 = vmatpush1.xpose.msra.mxu0 0.0
        %2652 = vmatprep.subr.mxu0 0.0
        %2653 = vmatpush1.xpose.msra.mxu0 0.0
        %2654 = vmatprep.subr.mxu0 0.0
        %2655 = vmatpush1.xpose.msra.mxu0 0.0
        %2656 = vmatprep.subr.mxu0 0.0
        %2657 = vmatpush1.xpose.msra.mxu0 0.0
        %2658 = vmatprep.subr.mxu0 0.0
        %2659 = vmatpush1.xpose.msra.mxu0 0.0
        %2660 = vmatprep.subr.mxu0 0.0
        %2661 = vmatpush1.xpose.msra.mxu0 0.0
        %2662 = vmatprep.subr.mxu0 0.0
        %2663 = vmatpush1.xpose.msra.mxu0 0.0
        %2664 = vmatprep.subr.mxu0 0.0
        %2665 = vmatpush1.xpose.msra.mxu0 0.0
        %2666 = vmatprep.subr.mxu0 0.0
        %2667 = vmatpush1.xpose.msra.mxu0 0.0
        %2668 = vmatprep.subr.mxu0 0.0
        %2669 = vmatpush1.xpose.msra.mxu0 0.0
        %2670 = vmatprep.subr.mxu0 0.0
        %2671 = vmatpush1.xpose.msra.mxu0 0.0
        %2672 = vmatprep.subr.mxu0 0.0
        %2673 = vmatpush1.xpose.msra.mxu0 0.0
        %2674 = vmatprep.subr.mxu0 0.0
        %2675 = vmatpush1.xpose.msra.mxu0 0.0
        %2676 = vmatprep.subr.mxu0 0.0
        %2677 = vmatpush1.xpose.msra.mxu0 0.0
        %2678 = vmatprep.subr.mxu0 0.0
        %2679 = vmatpush1.xpose.msra.mxu0 0.0
        %2680 = vmatprep.subr.mxu0 0.0
        %2681 = vmatpush1.xpose.msra.mxu0 0.0
        %2682 = vmatprep.subr.mxu0 0.0
        %2683 = vmatpush1.xpose.msra.mxu0 0.0
        %2684 = vmatprep.subr.mxu0 0.0
        %2685 = vmatpush1.xpose.msra.mxu0 0.0
        %2686 = vmatprep.subr.mxu0 0.0
        %2687 = vmatpush1.xpose.msra.mxu0 0.0
        %2688 = vmatprep.subr.mxu0 0.0
        %2689 = vmatpush1.xpose.msra.mxu0 0.0
        %2690 = vmatprep.subr.mxu0 0.0
        %2691 = vmatpush1.xpose.msra.mxu0 0.0
        %2692 = vmatprep.subr.mxu0 0.0
        %2693 = vmatpush1.xpose.msra.mxu0 0.0
        %2694 = vmatprep.subr.mxu0 0.0
        %2695 = vmatpush1.xpose.msra.mxu0 0.0
        %2696 = vmatprep.subr.mxu0 0.0
        %2697 = vmatpush1.xpose.msra.mxu0 0.0
        %2698 = vmatprep.mubr.f32.mxu0 0.0
        %2699 = vmatmul.mubr.f32.gmra.mrb[0].mxu0 %v2630
        %v2700 = vpop.f32.mrb[0].mxu0
        %v2701 = vadd.f32 0.0, %v2700
        %v2702 = vpop.f32.mrb[0].mxu0
        %2703 = vdwg.mxu0
        %2704 = vrot.lane.b32.xlu0 %v676, 112
        %v2705 = vpop.permute.xlu0 %2704
        %2706 = vrot.lane.b32.xlu0 %v754, 112
        %v2707 = vpop.permute.xlu0 %2706
        %v2708 = vsel %vm832, %v2705, 0
        %v2710 = vsel %vm832, %v2707, 0
        %2712 = vmatprep.subr.mxu0 0.0
        %2713 = vmatpush1.xpose.msra.mxu0 %v2710
        %2714 = vmatprep.subr.mxu0 0.0
        %2715 = vmatpush1.xpose.msra.mxu0 0.0
        %2716 = vmatprep.subr.mxu0 0.0
        %2717 = vmatpush1.xpose.msra.mxu0 0.0
        %2718 = vmatprep.subr.mxu0 0.0
        %2719 = vmatpush1.xpose.msra.mxu0 0.0
        %2720 = vmatprep.subr.mxu0 0.0
        %2721 = vmatpush1.xpose.msra.mxu0 0.0
        %2722 = vmatprep.subr.mxu0 0.0
        %2723 = vmatpush1.xpose.msra.mxu0 0.0
        %2724 = vmatprep.subr.mxu0 0.0
        %2725 = vmatpush1.xpose.msra.mxu0 0.0
        %2726 = vmatprep.subr.mxu0 0.0
        %2727 = vmatpush1.xpose.msra.mxu0 0.0
        %2728 = vmatprep.subr.mxu0 0.0
        %2729 = vmatpush1.xpose.msra.mxu0 0.0
        %2730 = vmatprep.subr.mxu0 0.0
        %2731 = vmatpush1.xpose.msra.mxu0 0.0
        %2732 = vmatprep.subr.mxu0 0.0
        %2733 = vmatpush1.xpose.msra.mxu0 0.0
        %2734 = vmatprep.subr.mxu0 0.0
        %2735 = vmatpush1.xpose.msra.mxu0 0.0
        %2736 = vmatprep.subr.mxu0 0.0
        %2737 = vmatpush1.xpose.msra.mxu0 0.0
        %2738 = vmatprep.subr.mxu0 0.0
        %2739 = vmatpush1.xpose.msra.mxu0 0.0
        %2740 = vmatprep.subr.mxu0 0.0
        %2741 = vmatpush1.xpose.msra.mxu0 0.0
        %2742 = vmatprep.subr.mxu0 0.0
        %2743 = vmatpush1.xpose.msra.mxu0 0.0
        %2744 = vmatprep.subr.mxu0 0.0
        %2745 = vmatpush1.xpose.msra.mxu0 0.0
        %2746 = vmatprep.subr.mxu0 0.0
        %2747 = vmatpush1.xpose.msra.mxu0 0.0
        %2748 = vmatprep.subr.mxu0 0.0
        %2749 = vmatpush1.xpose.msra.mxu0 0.0
        %2750 = vmatprep.subr.mxu0 0.0
        %2751 = vmatpush1.xpose.msra.mxu0 0.0
        %2752 = vmatprep.subr.mxu0 0.0
        %2753 = vmatpush1.xpose.msra.mxu0 0.0
        %2754 = vmatprep.subr.mxu0 0.0
        %2755 = vmatpush1.xpose.msra.mxu0 0.0
        %2756 = vmatprep.subr.mxu0 0.0
        %2757 = vmatpush1.xpose.msra.mxu0 0.0
        %2758 = vmatprep.subr.mxu0 0.0
        %2759 = vmatpush1.xpose.msra.mxu0 0.0
        %2760 = vmatprep.subr.mxu0 0.0
        %2761 = vmatpush1.xpose.msra.mxu0 0.0
        %2762 = vmatprep.subr.mxu0 0.0
        %2763 = vmatpush1.xpose.msra.mxu0 0.0
        %2764 = vmatprep.subr.mxu0 0.0
        %2765 = vmatpush1.xpose.msra.mxu0 0.0
        %2766 = vmatprep.subr.mxu0 0.0
        %2767 = vmatpush1.xpose.msra.mxu0 0.0
        %2768 = vmatprep.subr.mxu0 0.0
        %2769 = vmatpush1.xpose.msra.mxu0 0.0
        %2770 = vmatprep.subr.mxu0 0.0
        %2771 = vmatpush1.xpose.msra.mxu0 0.0
        %2772 = vmatprep.subr.mxu0 0.0
        %2773 = vmatpush1.xpose.msra.mxu0 0.0
        %2774 = vmatprep.subr.mxu0 0.0
        %2775 = vmatpush1.xpose.msra.mxu0 0.0
        %2776 = vmatprep.mubr.f32.mxu0 0.0
        %2777 = vmatmul.mubr.f32.gmra.mrb[0].mxu0 %v2708
        %v2778 = vpop.f32.mrb[0].mxu0
        %v2779 = vadd.f32 0.0, %v2778
        %v2780 = vpop.f32.mrb[0].mxu0
        %2781 = vdwg.mxu0
        %2782 = vrot.lane.b32.xlu0 %v673, 112
        %v2783 = vpop.permute.xlu0 %2782
        %2784 = vrot.lane.b32.xlu0 %v751, 112
        %v2785 = vpop.permute.xlu0 %2784
        %v2786 = vsel %vm832, %v2783, 0
        %v2788 = vsel %vm832, %v2785, 0
        %2790 = vmatprep.subr.mxu0 0.0
        %2791 = vmatpush1.xpose.msra.mxu0 %v2788
        %2792 = vmatprep.subr.mxu0 0.0
        %2793 = vmatpush1.xpose.msra.mxu0 0.0
        %2794 = vmatprep.subr.mxu0 0.0
        %2795 = vmatpush1.xpose.msra.mxu0 0.0
        %2796 = vmatprep.subr.mxu0 0.0
        %2797 = vmatpush1.xpose.msra.mxu0 0.0
        %2798 = vmatprep.subr.mxu0 0.0
        %2799 = vmatpush1.xpose.msra.mxu0 0.0
        %2800 = vmatprep.subr.mxu0 0.0
        %2801 = vmatpush1.xpose.msra.mxu0 0.0
        %2802 = vmatprep.subr.mxu0 0.0
        %2803 = vmatpush1.xpose.msra.mxu0 0.0
        %2804 = vmatprep.subr.mxu0 0.0
        %2805 = vmatpush1.xpose.msra.mxu0 0.0
        %2806 = vmatprep.subr.mxu0 0.0
        %2807 = vmatpush1.xpose.msra.mxu0 0.0
        %2808 = vmatprep.subr.mxu0 0.0
        %2809 = vmatpush1.xpose.msra.mxu0 0.0
        %2810 = vmatprep.subr.mxu0 0.0
        %2811 = vmatpush1.xpose.msra.mxu0 0.0
        %2812 = vmatprep.subr.mxu0 0.0
        %2813 = vmatpush1.xpose.msra.mxu0 0.0
        %2814 = vmatprep.subr.mxu0 0.0
        %2815 = vmatpush1.xpose.msra.mxu0 0.0
        %2816 = vmatprep.subr.mxu0 0.0
        %2817 = vmatpush1.xpose.msra.mxu0 0.0
        %2818 = vmatprep.subr.mxu0 0.0
        %2819 = vmatpush1.xpose.msra.mxu0 0.0
        %2820 = vmatprep.subr.mxu0 0.0
        %2821 = vmatpush1.xpose.msra.mxu0 0.0
        %2822 = vmatprep.subr.mxu0 0.0
        %2823 = vmatpush1.xpose.msra.mxu0 0.0
        %2824 = vmatprep.subr.mxu0 0.0
        %2825 = vmatpush1.xpose.msra.mxu0 0.0
        %2826 = vmatprep.subr.mxu0 0.0
        %2827 = vmatpush1.xpose.msra.mxu0 0.0
        %2828 = vmatprep.subr.mxu0 0.0
        %2829 = vmatpush1.xpose.msra.mxu0 0.0
        %2830 = vmatprep.subr.mxu0 0.0
        %2831 = vmatpush1.xpose.msra.mxu0 0.0
        %2832 = vmatprep.subr.mxu0 0.0
        %2833 = vmatpush1.xpose.msra.mxu0 0.0
        %2834 = vmatprep.subr.mxu0 0.0
        %2835 = vmatpush1.xpose.msra.mxu0 0.0
        %2836 = vmatprep.subr.mxu0 0.0
        %2837 = vmatpush1.xpose.msra.mxu0 0.0
        %2838 = vmatprep.subr.mxu0 0.0
        %2839 = vmatpush1.xpose.msra.mxu0 0.0
        %2840 = vmatprep.subr.mxu0 0.0
        %2841 = vmatpush1.xpose.msra.mxu0 0.0
        %2842 = vmatprep.subr.mxu0 0.0
        %2843 = vmatpush1.xpose.msra.mxu0 0.0
        %2844 = vmatprep.subr.mxu0 0.0
        %2845 = vmatpush1.xpose.msra.mxu0 0.0
        %2846 = vmatprep.subr.mxu0 0.0
        %2847 = vmatpush1.xpose.msra.mxu0 0.0
        %2848 = vmatprep.subr.mxu0 0.0
        %2849 = vmatpush1.xpose.msra.mxu0 0.0
        %2850 = vmatprep.subr.mxu0 0.0
        %2851 = vmatpush1.xpose.msra.mxu0 0.0
        %2852 = vmatprep.subr.mxu0 0.0
        %2853 = vmatpush1.xpose.msra.mxu0 0.0
        %2854 = vmatprep.mubr.f32.mxu0 0.0
        %2855 = vmatmul.mubr.f32.gmra.mrb[0].mxu0 %v2786
        %v2856 = vpop.f32.mrb[0].mxu0
        %v2857 = vadd.f32 0.0, %v2856
        %v2858 = vpop.f32.mrb[0].mxu0
        %2859 = vdwg.mxu0
        %2860 = vrot.lane.b32.xlu0 %v677, 112
        %v2861 = vpop.permute.xlu0 %2860
        %2862 = vrot.lane.b32.xlu0 %v755, 112
        %v2863 = vpop.permute.xlu0 %2862
        %v2864 = vsel %vm832, %v2861, 0
        %v2866 = vsel %vm832, %v2863, 0
        %2868 = vmatprep.subr.mxu0 0.0
        %2869 = vmatpush1.xpose.msra.mxu0 %v2866
        %2870 = vmatprep.subr.mxu0 0.0
        %2871 = vmatpush1.xpose.msra.mxu0 0.0
        %2872 = vmatprep.subr.mxu0 0.0
        %2873 = vmatpush1.xpose.msra.mxu0 0.0
        %2874 = vmatprep.subr.mxu0 0.0
        %2875 = vmatpush1.xpose.msra.mxu0 0.0
        %2876 = vmatprep.subr.mxu0 0.0
        %2877 = vmatpush1.xpose.msra.mxu0 0.0
        %2878 = vmatprep.subr.mxu0 0.0
        %2879 = vmatpush1.xpose.msra.mxu0 0.0
        %2880 = vmatprep.subr.mxu0 0.0
        %2881 = vmatpush1.xpose.msra.mxu0 0.0
        %2882 = vmatprep.subr.mxu0 0.0
        %2883 = vmatpush1.xpose.msra.mxu0 0.0
        %2884 = vmatprep.subr.mxu0 0.0
        %2885 = vmatpush1.xpose.msra.mxu0 0.0
        %2886 = vmatprep.subr.mxu0 0.0
        %2887 = vmatpush1.xpose.msra.mxu0 0.0
        %2888 = vmatprep.subr.mxu0 0.0
        %2889 = vmatpush1.xpose.msra.mxu0 0.0
        %2890 = vmatprep.subr.mxu0 0.0
        %2891 = vmatpush1.xpose.msra.mxu0 0.0
        %2892 = vmatprep.subr.mxu0 0.0
        %2893 = vmatpush1.xpose.msra.mxu0 0.0
        %2894 = vmatprep.subr.mxu0 0.0
        %2895 = vmatpush1.xpose.msra.mxu0 0.0
        %2896 = vmatprep.subr.mxu0 0.0
        %2897 = vmatpush1.xpose.msra.mxu0 0.0
        %2898 = vmatprep.subr.mxu0 0.0
        %2899 = vmatpush1.xpose.msra.mxu0 0.0
        %2900 = vmatprep.subr.mxu0 0.0
        %2901 = vmatpush1.xpose.msra.mxu0 0.0
        %2902 = vmatprep.subr.mxu0 0.0
        %2903 = vmatpush1.xpose.msra.mxu0 0.0
        %2904 = vmatprep.subr.mxu0 0.0
        %2905 = vmatpush1.xpose.msra.mxu0 0.0
        %2906 = vmatprep.subr.mxu0 0.0
        %2907 = vmatpush1.xpose.msra.mxu0 0.0
        %2908 = vmatprep.subr.mxu0 0.0
        %2909 = vmatpush1.xpose.msra.mxu0 0.0
        %2910 = vmatprep.subr.mxu0 0.0
        %2911 = vmatpush1.xpose.msra.mxu0 0.0
        %2912 = vmatprep.subr.mxu0 0.0
        %2913 = vmatpush1.xpose.msra.mxu0 0.0
        %2914 = vmatprep.subr.mxu0 0.0
        %2915 = vmatpush1.xpose.msra.mxu0 0.0
        %2916 = vmatprep.subr.mxu0 0.0
        %2917 = vmatpush1.xpose.msra.mxu0 0.0
        %2918 = vmatprep.subr.mxu0 0.0
        %2919 = vmatpush1.xpose.msra.mxu0 0.0
        %2920 = vmatprep.subr.mxu0 0.0
        %2921 = vmatpush1.xpose.msra.mxu0 0.0
        %2922 = vmatprep.subr.mxu0 0.0
        %2923 = vmatpush1.xpose.msra.mxu0 0.0
        %2924 = vmatprep.subr.mxu0 0.0
        %2925 = vmatpush1.xpose.msra.mxu0 0.0
        %2926 = vmatprep.subr.mxu0 0.0
        %2927 = vmatpush1.xpose.msra.mxu0 0.0
        %2928 = vmatprep.subr.mxu0 0.0
        %2929 = vmatpush1.xpose.msra.mxu0 0.0
        %2930 = vmatprep.subr.mxu0 0.0
        %2931 = vmatpush1.xpose.msra.mxu0 0.0
        %2932 = vmatprep.mubr.f32.mxu0 0.0
        %2933 = vmatmul.mubr.f32.gmra.mrb[0].mxu0 %v2864
        %v2934 = vpop.f32.mrb[0].mxu0
        %v2935 = vadd.f32 0.0, %v2934
        %v2936 = vpop.f32.mrb[0].mxu0
        %2937 = vdwg.mxu0
        %v2938 = vmul.f32 %v2389, 0.25
        %v2939 = vmul.f32 %v2467, 0.25
        %v2940 = vmul.f32 %v2545, 0.25
        %v2941 = vmul.f32 %v2623, 0.25
        %v2942 = vmul.f32 %v2701, 0.25
        %v2943 = vmul.f32 %v2779, 0.25
        %v2944 = vmul.f32 %v2857, 0.25
        %v2945 = vmul.f32 %v2935, 0.25
        %v2946 = vsel %vm1449, %v2938, -inf
        %2947 = vmax.xlane.f32.xlu0 %v2946
        %v2948 = vpop.xlane.xlu0 %2947
        %v2949 = vsel %vm1449, %v2939, -inf
        %2950 = vmax.xlane.f32.xlu0 %v2949
        %v2951 = vpop.xlane.xlu0 %2950
        %v2952 = vsel %vm1449, %v2940, -inf
        %2953 = vmax.xlane.f32.xlu0 %v2952
        %v2954 = vpop.xlane.xlu0 %2953
        %v2955 = vsel %vm1449, %v2941, -inf
        %2956 = vmax.xlane.f32.xlu0 %v2955
        %v2957 = vpop.xlane.xlu0 %2956
        %v2958 = vsel %vm1449, %v2942, -inf
        %2959 = vmax.xlane.f32.xlu0 %v2958
        %v2960 = vpop.xlane.xlu0 %2959
        %v2961 = vsel %vm1449, %v2943, -inf
        %2962 = vmax.xlane.f32.xlu0 %v2961
        %v2963 = vpop.xlane.xlu0 %2962
        %v2964 = vsel %vm1449, %v2944, -inf
        %2965 = vmax.xlane.f32.xlu0 %v2964
        %v2966 = vpop.xlane.xlu0 %2965
        %v2967 = vsel %vm1449, %v2945, -inf
        %2968 = vmax.xlane.f32.xlu0 %v2967
        %v2969 = vpop.xlane.xlu0 %2968
        %v2970 = vsub.f32 %v2938, %v2948
        %v2971 = vsub.f32 %v2939, %v2951
        %v2972 = vsub.f32 %v2940, %v2954
        %v2973 = vsub.f32 %v2941, %v2957
        %v2974 = vsub.f32 %v2942, %v2960
        %v2975 = vsub.f32 %v2943, %v2963
        %v2976 = vsub.f32 %v2944, %v2966
        %v2977 = vsub.f32 %v2945, %v2969
        %v2978 = vmul.f32 %v2970, 1.442695
        %v2979 = vpow.pop %v2978
        %v2980 = vmul.f32 %v2971, 1.442695
        %v2981 = vpow.pop %v2980
        %v2982 = vmul.f32 %v2972, 1.442695
        %v2983 = vpow.pop %v2982
        %v2984 = vmul.f32 %v2973, 1.442695
        %v2985 = vpow.pop %v2984
        %v2986 = vmul.f32 %v2974, 1.442695
        %v2987 = vpow.pop %v2986
        %v2988 = vmul.f32 %v2975, 1.442695
        %v2989 = vpow.pop %v2988
        %v2990 = vmul.f32 %v2976, 1.442695
        %v2991 = vpow.pop %v2990
        %v2992 = vmul.f32 %v2977, 1.442695
        %v2993 = vpow.pop %v2992
        %v2994 = vsel %vm1449, %v2979, 0.0
        %2995 = vadd.xlane.f32.xlu0 %v2994
        %v2996 = vpop.xlane.xlu0 %2995
        %v2997 = vsel %vm1449, %v2981, 0.0
        %2998 = vadd.xlane.f32.xlu0 %v2997
        %v2999 = vpop.xlane.xlu0 %2998
        %v3000 = vsel %vm1449, %v2983, 0.0
        %3001 = vadd.xlane.f32.xlu0 %v3000
        %v3002 = vpop.xlane.xlu0 %3001
        %v3003 = vsel %vm1449, %v2985, 0.0
        %3004 = vadd.xlane.f32.xlu0 %v3003
        %v3005 = vpop.xlane.xlu0 %3004
        %v3006 = vsel %vm1449, %v2987, 0.0
        %3007 = vadd.xlane.f32.xlu0 %v3006
        %v3008 = vpop.xlane.xlu0 %3007
        %v3009 = vsel %vm1449, %v2989, 0.0
        %3010 = vadd.xlane.f32.xlu0 %v3009
        %v3011 = vpop.xlane.xlu0 %3010
        %v3012 = vsel %vm1449, %v2991, 0.0
        %3013 = vadd.xlane.f32.xlu0 %v3012
        %v3014 = vpop.xlane.xlu0 %3013
        %v3015 = vsel %vm1449, %v2993, 0.0
        %3016 = vadd.xlane.f32.xlu0 %v3015
        %v3017 = vpop.xlane.xlu0 %3016
        %v3018 = vrcp.pop %v2996
        %v3019 = vrcp.pop %v2999
        %v3020 = vrcp.pop %v3002
        %v3021 = vrcp.pop %v3005
        %v3022 = vrcp.pop %v3008
        %v3023 = vrcp.pop %v3011
        %v3024 = vrcp.pop %v3014
        %v3025 = vrcp.pop %v3017
        %v3026 = vmul.f32 %v2979, %v3018
        %v3027 = vmul.f32 %v2981, %v3019
        %v3028 = vmul.f32 %v2983, %v3020
        %v3029 = vmul.f32 %v2985, %v3021
        %v3030 = vmul.f32 %v2987, %v3022
        %v3031 = vmul.f32 %v2989, %v3023
        %v3032 = vmul.f32 %v2991, %v3024
        %v3033 = vmul.f32 %v2993, %v3025
        %v3034 = vmul.f32 %v3026, %v1544
        %v3035 = vmul.f32 %v3027, %v1551
        %v3036 = vmul.f32 %v3028, %v1558
        %v3037 = vmul.f32 %v3029, %v1565
        %v3038 = vmul.f32 %v3030, %v1572
        %v3039 = vmul.f32 %v3031, %v1579
        %v3040 = vmul.f32 %v3032, %v1586
        %v3041 = vmul.f32 %v3033, %v1593
        %3042 = vrot.lane.b32.xlu0 %v804, 96
        %v3043 = vpop.permute.xlu0 %3042
        %v3045 = vsel %vm1602, %v3034, 0
        %v3047 = vsel %vm1606, %v3043, 0
        %3049 = vmatprep.subr.mxu0 0.0
        %3050 = vmatpush1.msra.mxu0 %v3047
        %3051 = vmatprep.subr.mxu0 0.0
        %3052 = vmatpush1.msra.mxu0 0.0
        %3053 = vmatprep.subr.mxu0 0.0
        %3054 = vmatpush1.msra.mxu0 0.0
        %3055 = vmatprep.subr.mxu0 0.0
        %3056 = vmatpush1.msra.mxu0 0.0
        %3057 = vmatprep.subr.mxu0 0.0
        %3058 = vmatpush1.msra.mxu0 0.0
        %3059 = vmatprep.subr.mxu0 0.0
        %3060 = vmatpush1.msra.mxu0 0.0
        %3061 = vmatprep.subr.mxu0 0.0
        %3062 = vmatpush1.msra.mxu0 0.0
        %3063 = vmatprep.subr.mxu0 0.0
        %3064 = vmatpush1.msra.mxu0 0.0
        %3065 = vmatprep.subr.mxu0 0.0
        %3066 = vmatpush1.msra.mxu0 0.0
        %3067 = vmatprep.subr.mxu0 0.0
        %3068 = vmatpush1.msra.mxu0 0.0
        %3069 = vmatprep.subr.mxu0 0.0
        %3070 = vmatpush1.msra.mxu0 0.0
        %3071 = vmatprep.subr.mxu0 0.0
        %3072 = vmatpush1.msra.mxu0 0.0
        %3073 = vmatprep.subr.mxu0 0.0
        %3074 = vmatpush1.msra.mxu0 0.0
        %3075 = vmatprep.subr.mxu0 0.0
        %3076 = vmatpush1.msra.mxu0 0.0
        %3077 = vmatprep.subr.mxu0 0.0
        %3078 = vmatpush1.msra.mxu0 0.0
        %3079 = vmatprep.subr.mxu0 0.0
        %3080 = vmatpush1.msra.mxu0 0.0
        %3081 = vmatprep.subr.mxu0 0.0
        %3082 = vmatpush1.msra.mxu0 0.0
        %3083 = vmatprep.subr.mxu0 0.0
        %3084 = vmatpush1.msra.mxu0 0.0
        %3085 = vmatprep.subr.mxu0 0.0
        %3086 = vmatpush1.msra.mxu0 0.0
        %3087 = vmatprep.subr.mxu0 0.0
        %3088 = vmatpush1.msra.mxu0 0.0
        %3089 = vmatprep.subr.mxu0 0.0
        %3090 = vmatpush1.msra.mxu0 0.0
        %3091 = vmatprep.subr.mxu0 0.0
        %3092 = vmatpush1.msra.mxu0 0.0
        %3093 = vmatprep.subr.mxu0 0.0
        %3094 = vmatpush1.msra.mxu0 0.0
        %3095 = vmatprep.subr.mxu0 0.0
        %3096 = vmatpush1.msra.mxu0 0.0
        %3097 = vmatprep.subr.mxu0 0.0
        %3098 = vmatpush1.msra.mxu0 0.0
        %3099 = vmatprep.subr.mxu0 0.0
        %3100 = vmatpush1.msra.mxu0 0.0
        %3101 = vmatprep.subr.mxu0 0.0
        %3102 = vmatpush1.msra.mxu0 0.0
        %3103 = vmatprep.subr.mxu0 0.0
        %3104 = vmatpush1.msra.mxu0 0.0
        %3105 = vmatprep.subr.mxu0 0.0
        %3106 = vmatpush1.msra.mxu0 0.0
        %3107 = vmatprep.subr.mxu0 0.0
        %3108 = vmatpush1.msra.mxu0 0.0
        %3109 = vmatprep.subr.mxu0 0.0
        %3110 = vmatpush1.msra.mxu0 0.0
        %3111 = vmatprep.subr.mxu0 0.0
        %3112 = vmatpush1.msra.mxu0 0.0
        %3113 = vmatprep.mubr.f32.mxu0 0.0
        %3114 = vmatmul.mubr.f32.gmra.mrb[0].mxu0 %v3045
        %v3115 = vpop.f32.mrb[0].mxu0
        %v3116 = vadd.f32 0.0, %v3115
        %v3117 = vpop.f32.mrb[0].mxu0
        %3118 = vdwg.mxu0
        %3119 = vrot.lane.b32.xlu0 %v828, 96
        %v3120 = vpop.permute.xlu0 %3119
        %v3122 = vsel %vm1602, %v3035, 0
        %v3124 = vsel %vm1606, %v3120, 0
        %3126 = vmatprep.subr.mxu0 0.0
        %3127 = vmatpush1.msra.mxu0 %v3124
        %3128 = vmatprep.subr.mxu0 0.0
        %3129 = vmatpush1.msra.mxu0 0.0
        %3130 = vmatprep.subr.mxu0 0.0
        %3131 = vmatpush1.msra.mxu0 0.0
        %3132 = vmatprep.subr.mxu0 0.0
        %3133 = vmatpush1.msra.mxu0 0.0
        %3134 = vmatprep.subr.mxu0 0.0
        %3135 = vmatpush1.msra.mxu0 0.0
        %3136 = vmatprep.subr.mxu0 0.0
        %3137 = vmatpush1.msra.mxu0 0.0
        %3138 = vmatprep.subr.mxu0 0.0
        %3139 = vmatpush1.msra.mxu0 0.0
        %3140 = vmatprep.subr.mxu0 0.0
        %3141 = vmatpush1.msra.mxu0 0.0
        %3142 = vmatprep.subr.mxu0 0.0
        %3143 = vmatpush1.msra.mxu0 0.0
        %3144 = vmatprep.subr.mxu0 0.0
        %3145 = vmatpush1.msra.mxu0 0.0
        %3146 = vmatprep.subr.mxu0 0.0
        %3147 = vmatpush1.msra.mxu0 0.0
        %3148 = vmatprep.subr.mxu0 0.0
        %3149 = vmatpush1.msra.mxu0 0.0
        %3150 = vmatprep.subr.mxu0 0.0
        %3151 = vmatpush1.msra.mxu0 0.0
        %3152 = vmatprep.subr.mxu0 0.0
        %3153 = vmatpush1.msra.mxu0 0.0
        %3154 = vmatprep.subr.mxu0 0.0
        %3155 = vmatpush1.msra.mxu0 0.0
        %3156 = vmatprep.subr.mxu0 0.0
        %3157 = vmatpush1.msra.mxu0 0.0
        %3158 = vmatprep.subr.mxu0 0.0
        %3159 = vmatpush1.msra.mxu0 0.0
        %3160 = vmatprep.subr.mxu0 0.0
        %3161 = vmatpush1.msra.mxu0 0.0
        %3162 = vmatprep.subr.mxu0 0.0
        %3163 = vmatpush1.msra.mxu0 0.0
        %3164 = vmatprep.subr.mxu0 0.0
        %3165 = vmatpush1.msra.mxu0 0.0
        %3166 = vmatprep.subr.mxu0 0.0
        %3167 = vmatpush1.msra.mxu0 0.0
        %3168 = vmatprep.subr.mxu0 0.0
        %3169 = vmatpush1.msra.mxu0 0.0
        %3170 = vmatprep.subr.mxu0 0.0
        %3171 = vmatpush1.msra.mxu0 0.0
        %3172 = vmatprep.subr.mxu0 0.0
        %3173 = vmatpush1.msra.mxu0 0.0
        %3174 = vmatprep.subr.mxu0 0.0
        %3175 = vmatpush1.msra.mxu0 0.0
        %3176 = vmatprep.subr.mxu0 0.0
        %3177 = vmatpush1.msra.mxu0 0.0
        %3178 = vmatprep.subr.mxu0 0.0
        %3179 = vmatpush1.msra.mxu0 0.0
        %3180 = vmatprep.subr.mxu0 0.0
        %3181 = vmatpush1.msra.mxu0 0.0
        %3182 = vmatprep.subr.mxu0 0.0
        %3183 = vmatpush1.msra.mxu0 0.0
        %3184 = vmatprep.subr.mxu0 0.0
        %3185 = vmatpush1.msra.mxu0 0.0
        %3186 = vmatprep.subr.mxu0 0.0
        %3187 = vmatpush1.msra.mxu0 0.0
        %3188 = vmatprep.subr.mxu0 0.0
        %3189 = vmatpush1.msra.mxu0 0.0
        %3190 = vmatprep.mubr.f32.mxu0 0.0
        %3191 = vmatmul.mubr.f32.gmra.mrb[0].mxu0 %v3122
        %v3192 = vpop.f32.mrb[0].mxu0
        %v3193 = vadd.f32 0.0, %v3192
        %v3194 = vpop.f32.mrb[0].mxu0
        %3195 = vdwg.mxu0
        %3196 = vrot.lane.b32.xlu0 %v811, 96
        %v3197 = vpop.permute.xlu0 %3196
        %v3199 = vsel %vm1602, %v3036, 0
        %v3201 = vsel %vm1606, %v3197, 0
        %3203 = vmatprep.subr.mxu0 0.0
        %3204 = vmatpush1.msra.mxu0 %v3201
        %3205 = vmatprep.subr.mxu0 0.0
        %3206 = vmatpush1.msra.mxu0 0.0
        %3207 = vmatprep.subr.mxu0 0.0
        %3208 = vmatpush1.msra.mxu0 0.0
        %3209 = vmatprep.subr.mxu0 0.0
        %3210 = vmatpush1.msra.mxu0 0.0
        %3211 = vmatprep.subr.mxu0 0.0
        %3212 = vmatpush1.msra.mxu0 0.0
        %3213 = vmatprep.subr.mxu0 0.0
        %3214 = vmatpush1.msra.mxu0 0.0
        %3215 = vmatprep.subr.mxu0 0.0
        %3216 = vmatpush1.msra.mxu0 0.0
        %3217 = vmatprep.subr.mxu0 0.0
        %3218 = vmatpush1.msra.mxu0 0.0
        %3219 = vmatprep.subr.mxu0 0.0
        %3220 = vmatpush1.msra.mxu0 0.0
        %3221 = vmatprep.subr.mxu0 0.0
        %3222 = vmatpush1.msra.mxu0 0.0
        %3223 = vmatprep.subr.mxu0 0.0
        %3224 = vmatpush1.msra.mxu0 0.0
        %3225 = vmatprep.subr.mxu0 0.0
        %3226 = vmatpush1.msra.mxu0 0.0
        %3227 = vmatprep.subr.mxu0 0.0
        %3228 = vmatpush1.msra.mxu0 0.0
        %3229 = vmatprep.subr.mxu0 0.0
        %3230 = vmatpush1.msra.mxu0 0.0
        %3231 = vmatprep.subr.mxu0 0.0
        %3232 = vmatpush1.msra.mxu0 0.0
        %3233 = vmatprep.subr.mxu0 0.0
        %3234 = vmatpush1.msra.mxu0 0.0
        %3235 = vmatprep.subr.mxu0 0.0
        %3236 = vmatpush1.msra.mxu0 0.0
        %3237 = vmatprep.subr.mxu0 0.0
        %3238 = vmatpush1.msra.mxu0 0.0
        %3239 = vmatprep.subr.mxu0 0.0
        %3240 = vmatpush1.msra.mxu0 0.0
        %3241 = vmatprep.subr.mxu0 0.0
        %3242 = vmatpush1.msra.mxu0 0.0
        %3243 = vmatprep.subr.mxu0 0.0
        %3244 = vmatpush1.msra.mxu0 0.0
        %3245 = vmatprep.subr.mxu0 0.0
        %3246 = vmatpush1.msra.mxu0 0.0
        %3247 = vmatprep.subr.mxu0 0.0
        %3248 = vmatpush1.msra.mxu0 0.0
        %3249 = vmatprep.subr.mxu0 0.0
        %3250 = vmatpush1.msra.mxu0 0.0
        %3251 = vmatprep.subr.mxu0 0.0
        %3252 = vmatpush1.msra.mxu0 0.0
        %3253 = vmatprep.subr.mxu0 0.0
        %3254 = vmatpush1.msra.mxu0 0.0
        %3255 = vmatprep.subr.mxu0 0.0
        %3256 = vmatpush1.msra.mxu0 0.0
        %3257 = vmatprep.subr.mxu0 0.0
        %3258 = vmatpush1.msra.mxu0 0.0
        %3259 = vmatprep.subr.mxu0 0.0
        %3260 = vmatpush1.msra.mxu0 0.0
        %3261 = vmatprep.subr.mxu0 0.0
        %3262 = vmatpush1.msra.mxu0 0.0
        %3263 = vmatprep.subr.mxu0 0.0
        %3264 = vmatpush1.msra.mxu0 0.0
        %3265 = vmatprep.subr.mxu0 0.0
        %3266 = vmatpush1.msra.mxu0 0.0
        %3267 = vmatprep.mubr.f32.mxu0 0.0
        %3268 = vmatmul.mubr.f32.gmra.mrb[0].mxu0 %v3199
        %v3269 = vpop.f32.mrb[0].mxu0
        %v3270 = vadd.f32 0.0, %v3269
        %v3271 = vpop.f32.mrb[0].mxu0
        %3272 = vdwg.mxu0
        %3273 = vrot.lane.b32.xlu0 %v829, 96
        %v3274 = vpop.permute.xlu0 %3273
        %v3276 = vsel %vm1602, %v3037, 0
        %v3278 = vsel %vm1606, %v3274, 0
        %3280 = vmatprep.subr.mxu0 0.0
        %3281 = vmatpush1.msra.mxu0 %v3278
        %3282 = vmatprep.subr.mxu0 0.0
        %3283 = vmatpush1.msra.mxu0 0.0
        %3284 = vmatprep.subr.mxu0 0.0
        %3285 = vmatpush1.msra.mxu0 0.0
        %3286 = vmatprep.subr.mxu0 0.0
        %3287 = vmatpush1.msra.mxu0 0.0
        %3288 = vmatprep.subr.mxu0 0.0
        %3289 = vmatpush1.msra.mxu0 0.0
        %3290 = vmatprep.subr.mxu0 0.0
        %3291 = vmatpush1.msra.mxu0 0.0
        %3292 = vmatprep.subr.mxu0 0.0
        %3293 = vmatpush1.msra.mxu0 0.0
        %3294 = vmatprep.subr.mxu0 0.0
        %3295 = vmatpush1.msra.mxu0 0.0
        %3296 = vmatprep.subr.mxu0 0.0
        %3297 = vmatpush1.msra.mxu0 0.0
        %3298 = vmatprep.subr.mxu0 0.0
        %3299 = vmatpush1.msra.mxu0 0.0
        %3300 = vmatprep.subr.mxu0 0.0
        %3301 = vmatpush1.msra.mxu0 0.0
        %3302 = vmatprep.subr.mxu0 0.0
        %3303 = vmatpush1.msra.mxu0 0.0
        %3304 = vmatprep.subr.mxu0 0.0
        %3305 = vmatpush1.msra.mxu0 0.0
        %3306 = vmatprep.subr.mxu0 0.0
        %3307 = vmatpush1.msra.mxu0 0.0
        %3308 = vmatprep.subr.mxu0 0.0
        %3309 = vmatpush1.msra.mxu0 0.0
        %3310 = vmatprep.subr.mxu0 0.0
        %3311 = vmatpush1.msra.mxu0 0.0
        %3312 = vmatprep.subr.mxu0 0.0
        %3313 = vmatpush1.msra.mxu0 0.0
        %3314 = vmatprep.subr.mxu0 0.0
        %3315 = vmatpush1.msra.mxu0 0.0
        %3316 = vmatprep.subr.mxu0 0.0
        %3317 = vmatpush1.msra.mxu0 0.0
        %3318 = vmatprep.subr.mxu0 0.0
        %3319 = vmatpush1.msra.mxu0 0.0
        %3320 = vmatprep.subr.mxu0 0.0
        %3321 = vmatpush1.msra.mxu0 0.0
        %3322 = vmatprep.subr.mxu0 0.0
        %3323 = vmatpush1.msra.mxu0 0.0
        %3324 = vmatprep.subr.mxu0 0.0
        %3325 = vmatpush1.msra.mxu0 0.0
        %3326 = vmatprep.subr.mxu0 0.0
        %3327 = vmatpush1.msra.mxu0 0.0
        %3328 = vmatprep.subr.mxu0 0.0
        %3329 = vmatpush1.msra.mxu0 0.0
        %3330 = vmatprep.subr.mxu0 0.0
        %3331 = vmatpush1.msra.mxu0 0.0
        %3332 = vmatprep.subr.mxu0 0.0
        %3333 = vmatpush1.msra.mxu0 0.0
        %3334 = vmatprep.subr.mxu0 0.0
        %3335 = vmatpush1.msra.mxu0 0.0
        %3336 = vmatprep.subr.mxu0 0.0
        %3337 = vmatpush1.msra.mxu0 0.0
        %3338 = vmatprep.subr.mxu0 0.0
        %3339 = vmatpush1.msra.mxu0 0.0
        %3340 = vmatprep.subr.mxu0 0.0
        %3341 = vmatpush1.msra.mxu0 0.0
        %3342 = vmatprep.subr.mxu0 0.0
        %3343 = vmatpush1.msra.mxu0 0.0
        %3344 = vmatprep.mubr.f32.mxu0 0.0
        %3345 = vmatmul.mubr.f32.gmra.mrb[0].mxu0 %v3276
        %v3346 = vpop.f32.mrb[0].mxu0
        %v3347 = vadd.f32 0.0, %v3346
        %v3348 = vpop.f32.mrb[0].mxu0
        %3349 = vdwg.mxu0
        %3350 = vrot.lane.b32.xlu0 %v820, 96
        %v3351 = vpop.permute.xlu0 %3350
        %v3353 = vsel %vm1602, %v3038, 0
        %v3355 = vsel %vm1606, %v3351, 0
        %3357 = vmatprep.subr.mxu0 0.0
        %3358 = vmatpush1.msra.mxu0 %v3355
        %3359 = vmatprep.subr.mxu0 0.0
        %3360 = vmatpush1.msra.mxu0 0.0
        %3361 = vmatprep.subr.mxu0 0.0
        %3362 = vmatpush1.msra.mxu0 0.0
        %3363 = vmatprep.subr.mxu0 0.0
        %3364 = vmatpush1.msra.mxu0 0.0
        %3365 = vmatprep.subr.mxu0 0.0
        %3366 = vmatpush1.msra.mxu0 0.0
        %3367 = vmatprep.subr.mxu0 0.0
        %3368 = vmatpush1.msra.mxu0 0.0
        %3369 = vmatprep.subr.mxu0 0.0
        %3370 = vmatpush1.msra.mxu0 0.0
        %3371 = vmatprep.subr.mxu0 0.0
        %3372 = vmatpush1.msra.mxu0 0.0
        %3373 = vmatprep.subr.mxu0 0.0
        %3374 = vmatpush1.msra.mxu0 0.0
        %3375 = vmatprep.subr.mxu0 0.0
        %3376 = vmatpush1.msra.mxu0 0.0
        %3377 = vmatprep.subr.mxu0 0.0
        %3378 = vmatpush1.msra.mxu0 0.0
        %3379 = vmatprep.subr.mxu0 0.0
        %3380 = vmatpush1.msra.mxu0 0.0
        %3381 = vmatprep.subr.mxu0 0.0
        %3382 = vmatpush1.msra.mxu0 0.0
        %3383 = vmatprep.subr.mxu0 0.0
        %3384 = vmatpush1.msra.mxu0 0.0
        %3385 = vmatprep.subr.mxu0 0.0
        %3386 = vmatpush1.msra.mxu0 0.0
        %3387 = vmatprep.subr.mxu0 0.0
        %3388 = vmatpush1.msra.mxu0 0.0
        %3389 = vmatprep.subr.mxu0 0.0
        %3390 = vmatpush1.msra.mxu0 0.0
        %3391 = vmatprep.subr.mxu0 0.0
        %3392 = vmatpush1.msra.mxu0 0.0
        %3393 = vmatprep.subr.mxu0 0.0
        %3394 = vmatpush1.msra.mxu0 0.0
        %3395 = vmatprep.subr.mxu0 0.0
        %3396 = vmatpush1.msra.mxu0 0.0
        %3397 = vmatprep.subr.mxu0 0.0
        %3398 = vmatpush1.msra.mxu0 0.0
        %3399 = vmatprep.subr.mxu0 0.0
        %3400 = vmatpush1.msra.mxu0 0.0
        %3401 = vmatprep.subr.mxu0 0.0
        %3402 = vmatpush1.msra.mxu0 0.0
        %3403 = vmatprep.subr.mxu0 0.0
        %3404 = vmatpush1.msra.mxu0 0.0
        %3405 = vmatprep.subr.mxu0 0.0
        %3406 = vmatpush1.msra.mxu0 0.0
        %3407 = vmatprep.subr.mxu0 0.0
        %3408 = vmatpush1.msra.mxu0 0.0
        %3409 = vmatprep.subr.mxu0 0.0
        %3410 = vmatpush1.msra.mxu0 0.0
        %3411 = vmatprep.subr.mxu0 0.0
        %3412 = vmatpush1.msra.mxu0 0.0
        %3413 = vmatprep.subr.mxu0 0.0
        %3414 = vmatpush1.msra.mxu0 0.0
        %3415 = vmatprep.subr.mxu0 0.0
        %3416 = vmatpush1.msra.mxu0 0.0
        %3417 = vmatprep.subr.mxu0 0.0
        %3418 = vmatpush1.msra.mxu0 0.0
        %3419 = vmatprep.subr.mxu0 0.0
        %3420 = vmatpush1.msra.mxu0 0.0
        %3421 = vmatprep.mubr.f32.mxu0 0.0
        %3422 = vmatmul.mubr.f32.gmra.mrb[0].mxu0 %v3353
        %v3423 = vpop.f32.mrb[0].mxu0
        %v3424 = vadd.f32 0.0, %v3423
        %v3425 = vpop.f32.mrb[0].mxu0
        %3426 = vdwg.mxu0
        %3427 = vrot.lane.b32.xlu0 %v830, 96
        %v3428 = vpop.permute.xlu0 %3427
        %v3430 = vsel %vm1602, %v3039, 0
        %v3432 = vsel %vm1606, %v3428, 0
        %3434 = vmatprep.subr.mxu0 0.0
        %3435 = vmatpush1.msra.mxu0 %v3432
        %3436 = vmatprep.subr.mxu0 0.0
        %3437 = vmatpush1.msra.mxu0 0.0
        %3438 = vmatprep.subr.mxu0 0.0
        %3439 = vmatpush1.msra.mxu0 0.0
        %3440 = vmatprep.subr.mxu0 0.0
        %3441 = vmatpush1.msra.mxu0 0.0
        %3442 = vmatprep.subr.mxu0 0.0
        %3443 = vmatpush1.msra.mxu0 0.0
        %3444 = vmatprep.subr.mxu0 0.0
        %3445 = vmatpush1.msra.mxu0 0.0
        %3446 = vmatprep.subr.mxu0 0.0
        %3447 = vmatpush1.msra.mxu0 0.0
        %3448 = vmatprep.subr.mxu0 0.0
        %3449 = vmatpush1.msra.mxu0 0.0
        %3450 = vmatprep.subr.mxu0 0.0
        %3451 = vmatpush1.msra.mxu0 0.0
        %3452 = vmatprep.subr.mxu0 0.0
        %3453 = vmatpush1.msra.mxu0 0.0
        %3454 = vmatprep.subr.mxu0 0.0
        %3455 = vmatpush1.msra.mxu0 0.0
        %3456 = vmatprep.subr.mxu0 0.0
        %3457 = vmatpush1.msra.mxu0 0.0
        %3458 = vmatprep.subr.mxu0 0.0
        %3459 = vmatpush1.msra.mxu0 0.0
        %3460 = vmatprep.subr.mxu0 0.0
        %3461 = vmatpush1.msra.mxu0 0.0
        %3462 = vmatprep.subr.mxu0 0.0
        %3463 = vmatpush1.msra.mxu0 0.0
        %3464 = vmatprep.subr.mxu0 0.0
        %3465 = vmatpush1.msra.mxu0 0.0
        %3466 = vmatprep.subr.mxu0 0.0
        %3467 = vmatpush1.msra.mxu0 0.0
        %3468 = vmatprep.subr.mxu0 0.0
        %3469 = vmatpush1.msra.mxu0 0.0
        %3470 = vmatprep.subr.mxu0 0.0
        %3471 = vmatpush1.msra.mxu0 0.0
        %3472 = vmatprep.subr.mxu0 0.0
        %3473 = vmatpush1.msra.mxu0 0.0
        %3474 = vmatprep.subr.mxu0 0.0
        %3475 = vmatpush1.msra.mxu0 0.0
        %3476 = vmatprep.subr.mxu0 0.0
        %3477 = vmatpush1.msra.mxu0 0.0
        %3478 = vmatprep.subr.mxu0 0.0
        %3479 = vmatpush1.msra.mxu0 0.0
        %3480 = vmatprep.subr.mxu0 0.0
        %3481 = vmatpush1.msra.mxu0 0.0
        %3482 = vmatprep.subr.mxu0 0.0
        %3483 = vmatpush1.msra.mxu0 0.0
        %3484 = vmatprep.subr.mxu0 0.0
        %3485 = vmatpush1.msra.mxu0 0.0
        %3486 = vmatprep.subr.mxu0 0.0
        %3487 = vmatpush1.msra.mxu0 0.0
        %3488 = vmatprep.subr.mxu0 0.0
        %3489 = vmatpush1.msra.mxu0 0.0
        %3490 = vmatprep.subr.mxu0 0.0
        %3491 = vmatpush1.msra.mxu0 0.0
        %3492 = vmatprep.subr.mxu0 0.0
        %3493 = vmatpush1.msra.mxu0 0.0
        %3494 = vmatprep.subr.mxu0 0.0
        %3495 = vmatpush1.msra.mxu0 0.0
        %3496 = vmatprep.subr.mxu0 0.0
        %3497 = vmatpush1.msra.mxu0 0.0
        %3498 = vmatprep.mubr.f32.mxu0 0.0
        %3499 = vmatmul.mubr.f32.gmra.mrb[0].mxu0 %v3430
        %v3500 = vpop.f32.mrb[0].mxu0
        %v3501 = vadd.f32 0.0, %v3500
        %v3502 = vpop.f32.mrb[0].mxu0
        %3503 = vdwg.mxu0
        %3504 = vrot.lane.b32.xlu0 %v827, 96
        %v3505 = vpop.permute.xlu0 %3504
        %v3507 = vsel %vm1602, %v3040, 0
        %v3509 = vsel %vm1606, %v3505, 0
        %3511 = vmatprep.subr.mxu0 0.0
        %3512 = vmatpush1.msra.mxu0 %v3509
        %3513 = vmatprep.subr.mxu0 0.0
        %3514 = vmatpush1.msra.mxu0 0.0
        %3515 = vmatprep.subr.mxu0 0.0
        %3516 = vmatpush1.msra.mxu0 0.0
        %3517 = vmatprep.subr.mxu0 0.0
        %3518 = vmatpush1.msra.mxu0 0.0
        %3519 = vmatprep.subr.mxu0 0.0
        %3520 = vmatpush1.msra.mxu0 0.0
        %3521 = vmatprep.subr.mxu0 0.0
        %3522 = vmatpush1.msra.mxu0 0.0
        %3523 = vmatprep.subr.mxu0 0.0
        %3524 = vmatpush1.msra.mxu0 0.0
        %3525 = vmatprep.subr.mxu0 0.0
        %3526 = vmatpush1.msra.mxu0 0.0
        %3527 = vmatprep.subr.mxu0 0.0
        %3528 = vmatpush1.msra.mxu0 0.0
        %3529 = vmatprep.subr.mxu0 0.0
        %3530 = vmatpush1.msra.mxu0 0.0
        %3531 = vmatprep.subr.mxu0 0.0
        %3532 = vmatpush1.msra.mxu0 0.0
        %3533 = vmatprep.subr.mxu0 0.0
        %3534 = vmatpush1.msra.mxu0 0.0
        %3535 = vmatprep.subr.mxu0 0.0
        %3536 = vmatpush1.msra.mxu0 0.0
        %3537 = vmatprep.subr.mxu0 0.0
        %3538 = vmatpush1.msra.mxu0 0.0
        %3539 = vmatprep.subr.mxu0 0.0
        %3540 = vmatpush1.msra.mxu0 0.0
        %3541 = vmatprep.subr.mxu0 0.0
        %3542 = vmatpush1.msra.mxu0 0.0
        %3543 = vmatprep.subr.mxu0 0.0
        %3544 = vmatpush1.msra.mxu0 0.0
        %3545 = vmatprep.subr.mxu0 0.0
        %3546 = vmatpush1.msra.mxu0 0.0
        %3547 = vmatprep.subr.mxu0 0.0
        %3548 = vmatpush1.msra.mxu0 0.0
        %3549 = vmatprep.subr.mxu0 0.0
        %3550 = vmatpush1.msra.mxu0 0.0
        %3551 = vmatprep.subr.mxu0 0.0
        %3552 = vmatpush1.msra.mxu0 0.0
        %3553 = vmatprep.subr.mxu0 0.0
        %3554 = vmatpush1.msra.mxu0 0.0
        %3555 = vmatprep.subr.mxu0 0.0
        %3556 = vmatpush1.msra.mxu0 0.0
        %3557 = vmatprep.subr.mxu0 0.0
        %3558 = vmatpush1.msra.mxu0 0.0
        %3559 = vmatprep.subr.mxu0 0.0
        %3560 = vmatpush1.msra.mxu0 0.0
        %3561 = vmatprep.subr.mxu0 0.0
        %3562 = vmatpush1.msra.mxu0 0.0
        %3563 = vmatprep.subr.mxu0 0.0
        %3564 = vmatpush1.msra.mxu0 0.0
        %3565 = vmatprep.subr.mxu0 0.0
        %3566 = vmatpush1.msra.mxu0 0.0
        %3567 = vmatprep.subr.mxu0 0.0
        %3568 = vmatpush1.msra.mxu0 0.0
        %3569 = vmatprep.subr.mxu0 0.0
        %3570 = vmatpush1.msra.mxu0 0.0
        %3571 = vmatprep.subr.mxu0 0.0
        %3572 = vmatpush1.msra.mxu0 0.0
        %3573 = vmatprep.subr.mxu0 0.0
        %3574 = vmatpush1.msra.mxu0 0.0
        %3575 = vmatprep.mubr.f32.mxu0 0.0
        %3576 = vmatmul.mubr.f32.gmra.mrb[0].mxu0 %v3507
        %v3577 = vpop.f32.mrb[0].mxu0
        %v3578 = vadd.f32 0.0, %v3577
        %v3579 = vpop.f32.mrb[0].mxu0
        %3580 = vdwg.mxu0
        %3581 = vrot.lane.b32.xlu0 %v831, 96
        %v3582 = vpop.permute.xlu0 %3581
        %v3584 = vsel %vm1602, %v3041, 0
        %v3586 = vsel %vm1606, %v3582, 0
        %3588 = vmatprep.subr.mxu0 0.0
        %3589 = vmatpush1.msra.mxu0 %v3586
        %3590 = vmatprep.subr.mxu0 0.0
        %3591 = vmatpush1.msra.mxu0 0.0
        %3592 = vmatprep.subr.mxu0 0.0
        %3593 = vmatpush1.msra.mxu0 0.0
        %3594 = vmatprep.subr.mxu0 0.0
        %3595 = vmatpush1.msra.mxu0 0.0
        %3596 = vmatprep.subr.mxu0 0.0
        %3597 = vmatpush1.msra.mxu0 0.0
        %3598 = vmatprep.subr.mxu0 0.0
        %3599 = vmatpush1.msra.mxu0 0.0
        %3600 = vmatprep.subr.mxu0 0.0
        %3601 = vmatpush1.msra.mxu0 0.0
        %3602 = vmatprep.subr.mxu0 0.0
        %3603 = vmatpush1.msra.mxu0 0.0
        %3604 = vmatprep.subr.mxu0 0.0
        %3605 = vmatpush1.msra.mxu0 0.0
        %3606 = vmatprep.subr.mxu0 0.0
        %3607 = vmatpush1.msra.mxu0 0.0
        %3608 = vmatprep.subr.mxu0 0.0
        %3609 = vmatpush1.msra.mxu0 0.0
        %3610 = vmatprep.subr.mxu0 0.0
        %3611 = vmatpush1.msra.mxu0 0.0
        %3612 = vmatprep.subr.mxu0 0.0
        %3613 = vmatpush1.msra.mxu0 0.0
        %3614 = vmatprep.subr.mxu0 0.0
        %3615 = vmatpush1.msra.mxu0 0.0
        %3616 = vmatprep.subr.mxu0 0.0
        %3617 = vmatpush1.msra.mxu0 0.0
        %3618 = vmatprep.subr.mxu0 0.0
        %3619 = vmatpush1.msra.mxu0 0.0
        %3620 = vmatprep.subr.mxu0 0.0
        %3621 = vmatpush1.msra.mxu0 0.0
        %3622 = vmatprep.subr.mxu0 0.0
        %3623 = vmatpush1.msra.mxu0 0.0
        %3624 = vmatprep.subr.mxu0 0.0
        %3625 = vmatpush1.msra.mxu0 0.0
        %3626 = vmatprep.subr.mxu0 0.0
        %3627 = vmatpush1.msra.mxu0 0.0
        %3628 = vmatprep.subr.mxu0 0.0
        %3629 = vmatpush1.msra.mxu0 0.0
        %3630 = vmatprep.subr.mxu0 0.0
        %3631 = vmatpush1.msra.mxu0 0.0
        %3632 = vmatprep.subr.mxu0 0.0
        %3633 = vmatpush1.msra.mxu0 0.0
        %3634 = vmatprep.subr.mxu0 0.0
        %3635 = vmatpush1.msra.mxu0 0.0
        %3636 = vmatprep.subr.mxu0 0.0
        %3637 = vmatpush1.msra.mxu0 0.0
        %3638 = vmatprep.subr.mxu0 0.0
        %3639 = vmatpush1.msra.mxu0 0.0
        %3640 = vmatprep.subr.mxu0 0.0
        %3641 = vmatpush1.msra.mxu0 0.0
        %3642 = vmatprep.subr.mxu0 0.0
        %3643 = vmatpush1.msra.mxu0 0.0
        %3644 = vmatprep.subr.mxu0 0.0
        %3645 = vmatpush1.msra.mxu0 0.0
        %3646 = vmatprep.subr.mxu0 0.0
        %3647 = vmatpush1.msra.mxu0 0.0
        %3648 = vmatprep.subr.mxu0 0.0
        %3649 = vmatpush1.msra.mxu0 0.0
        %3650 = vmatprep.subr.mxu0 0.0
        %3651 = vmatpush1.msra.mxu0 0.0
        %3652 = vmatprep.mubr.f32.mxu0 0.0
        %3653 = vmatmul.mubr.f32.gmra.mrb[0].mxu0 %v3584
        %v3654 = vpop.f32.mrb[0].mxu0
        %v3655 = vadd.f32 0.0, %v3654
        %v3656 = vpop.f32.mrb[0].mxu0
        %3657 = vdwg.mxu0
        %v3658 = vcombine.low %v3116, %v3270
        %v3660 = vunpack.c.l.s4 1983009808
        %v3661 = vunpack.c.0.s8 %v3660
        %v3662 = vlaneseq
        %v3663 = vshrl.u32 %v3662, 7
        %v3664 = vsub.s32 %v3661, %v3663
        %v3665 = vrot.slane %v3658, %v3664
        %v3666 = vcombine.low %v3193, %v3347
        %v3668 = vunpack.c.l.s4 1983009808
        %v3669 = vunpack.c.0.s8 %v3668
        %v3670 = vlaneseq
        %v3671 = vshrl.u32 %v3670, 7
        %v3672 = vsub.s32 %v3669, %v3671
        %v3673 = vrot.slane %v3666, %v3672
        %v3674 = vcombine.low %v3424, %v3578
        %v3676 = vunpack.c.l.s4 1983009808
        %v3677 = vunpack.c.0.s8 %v3676
        %v3678 = vlaneseq
        %v3679 = vshrl.u32 %v3678, 7
        %v3680 = vsub.s32 %v3677, %v3679
        %v3681 = vrot.slane %v3674, %v3680
        %v3682 = vcombine.low %v3501, %v3655
        %v3684 = vunpack.c.l.s4 1983009808
        %v3685 = vunpack.c.0.s8 %v3684
        %v3686 = vlaneseq
        %v3687 = vshrl.u32 %v3686, 7
        %v3688 = vsub.s32 %v3685, %v3687
        %v3689 = vrot.slane %v3682, %v3688
        %v3690 = vcombine.low %v3665, %v3673
        %v3691 = vcombine.high %v3665, %v3673
        %v3693 = vunpack.c.l.s4 1934713408
        %v3694 = vunpack.c.0.s8 %v3693
        %v3695 = vlaneseq
        %v3696 = vshrl.u32 %v3695, 7
        %v3697 = vsub.s32 %v3694, %v3696
        %v3698 = vrot.slane %v3690, %v3697
        %v3700 = vunpack.c.l.s4 1934713408
        %v3701 = vunpack.c.0.s8 %v3700
        %v3702 = vlaneseq
        %v3703 = vshrl.u32 %v3702, 7
        %v3704 = vsub.s32 %v3701, %v3703
        %v3705 = vrot.slane %v3691, %v3704
        %v3706 = vcombine.low %v3681, %v3689
        %v3707 = vcombine.high %v3681, %v3689
        %v3709 = vunpack.c.l.s4 1934713408
        %v3710 = vunpack.c.0.s8 %v3709
        %v3711 = vlaneseq
        %v3712 = vshrl.u32 %v3711, 7
        %v3713 = vsub.s32 %v3710, %v3712
        %v3714 = vrot.slane %v3706, %v3713
        %v3716 = vunpack.c.l.s4 1934713408
        %v3717 = vunpack.c.0.s8 %v3716
        %v3718 = vlaneseq
        %v3719 = vshrl.u32 %v3718, 7
        %v3720 = vsub.s32 %v3717, %v3719
        %v3721 = vrot.slane %v3707, %v3720
        %v3722 = vcombine.low %v3698, %v3714
        %v3723 = vcombine.high %v3698, %v3714
        %v3724 = vcombine.low %v3705, %v3721
        %v3725 = vcombine.high %v3705, %v3721
        %3727 = vrot.lane.b32.xlu0 %v3723, 32
        %v3728 = vpop.permute.xlu0 %3727
        %3731 = vrot.lane.b32.xlu0 %v3724, 64
        %v3732 = vpop.permute.xlu0 %3731
        %3735 = vrot.lane.b32.xlu0 %v3725, 96
        %v3736 = vpop.permute.xlu0 %3735
        %v3738 = vsel %vm2292, %v3722, %v3728
        %v3739 = vsel %vm2294, %v3738, %v3732
        %v3740 = vsel %vm2296, %v3739, %v3736
        %s3741 = scalar_lea.vmem [#allocation8], 128
        %v3742 = vld [vmem:[%s3741] sm:$0xff]
        %v3743 = vld [vmem:[%s3741 + $0x8] sm:$0xff]
        %v3744 = vld [vmem:[%s3741 + $0x10] sm:$0xff]
        %v3745 = vld [vmem:[%s3741 + $0x18] sm:$0xff]
        %v3746 = vld [vmem:[%s3741 + $0x20] sm:$0xff]
        %v3747 = vld [vmem:[%s3741 + $0x28] sm:$0xff]
        %v3748 = vld [vmem:[%s3741 + $0x30] sm:$0xff]
        %v3749 = vld [vmem:[%s3741 + $0x38] sm:$0xff]
        %v3750 = vld [vmem:[%s3741 + $0x40] sm:$0xff]
        %v3751 = vld [vmem:[%s3741 + $0x48] sm:$0xff]
        %v3752 = vld [vmem:[%s3741 + $0x50] sm:$0xff]
        %v3753 = vld [vmem:[%s3741 + $0x58] sm:$0xff]
        %v3754 = vld [vmem:[%s3741 + $0x60] sm:$0xff]
        %v3755 = vld [vmem:[%s3741 + $0x68] sm:$0xff]
        %v3756 = vld [vmem:[%s3741 + $0x70] sm:$0xff]
        %v3757 = vld [vmem:[%s3741 + $0x78] sm:$0xff]
        %3758 = vmatprep.subr.mxu0 0.0
        %3759 = vmatpush1.msra.mxu0 %v3742
        %3760 = vmatprep.subr.mxu0 0.0
        %3761 = vmatpush1.msra.mxu0 %v3743
        %3762 = vmatprep.subr.mxu0 0.0
        %3763 = vmatpush1.msra.mxu0 %v3744
        %3764 = vmatprep.subr.mxu0 0.0
        %3765 = vmatpush1.msra.mxu0 %v3745
        %3766 = vmatprep.subr.mxu0 0.0
        %3767 = vmatpush1.msra.mxu0 %v3746
        %3768 = vmatprep.subr.mxu0 0.0
        %3769 = vmatpush1.msra.mxu0 %v3747
        %3770 = vmatprep.subr.mxu0 0.0
        %3771 = vmatpush1.msra.mxu0 %v3748
        %3772 = vmatprep.subr.mxu0 0.0
        %3773 = vmatpush1.msra.mxu0 %v3749
        %3774 = vmatprep.subr.mxu0 0.0
        %3775 = vmatpush1.msra.mxu0 %v3750
        %3776 = vmatprep.subr.mxu0 0.0
        %3777 = vmatpush1.msra.mxu0 %v3751
        %3778 = vmatprep.subr.mxu0 0.0
        %3779 = vmatpush1.msra.mxu0 %v3752
        %3780 = vmatprep.subr.mxu0 0.0
        %3781 = vmatpush1.msra.mxu0 %v3753
        %3782 = vmatprep.subr.mxu0 0.0
        %3783 = vmatpush1.msra.mxu0 %v3754
        %3784 = vmatprep.subr.mxu0 0.0
        %3785 = vmatpush1.msra.mxu0 %v3755
        %3786 = vmatprep.subr.mxu0 0.0
        %3787 = vmatpush1.msra.mxu0 %v3756
        %3788 = vmatprep.subr.mxu0 0.0
        %3789 = vmatpush1.msra.mxu0 %v3757
        %3790 = vmatprep.subr.mxu0 0.0
        %3791 = vmatpush1.msra.mxu0 0.0
        %3792 = vmatprep.subr.mxu0 0.0
        %3793 = vmatpush1.msra.mxu0 0.0
        %3794 = vmatprep.subr.mxu0 0.0
        %3795 = vmatpush1.msra.mxu0 0.0
        %3796 = vmatprep.subr.mxu0 0.0
        %3797 = vmatpush1.msra.mxu0 0.0
        %3798 = vmatprep.subr.mxu0 0.0
        %3799 = vmatpush1.msra.mxu0 0.0
        %3800 = vmatprep.subr.mxu0 0.0
        %3801 = vmatpush1.msra.mxu0 0.0
        %3802 = vmatprep.subr.mxu0 0.0
        %3803 = vmatpush1.msra.mxu0 0.0
        %3804 = vmatprep.subr.mxu0 0.0
        %3805 = vmatpush1.msra.mxu0 0.0
        %3806 = vmatprep.subr.mxu0 0.0
        %3807 = vmatpush1.msra.mxu0 0.0
        %3808 = vmatprep.subr.mxu0 0.0
        %3809 = vmatpush1.msra.mxu0 0.0
        %3810 = vmatprep.subr.mxu0 0.0
        %3811 = vmatpush1.msra.mxu0 0.0
        %3812 = vmatprep.subr.mxu0 0.0
        %3813 = vmatpush1.msra.mxu0 0.0
        %3814 = vmatprep.subr.mxu0 0.0
        %3815 = vmatpush1.msra.mxu0 0.0
        %3816 = vmatprep.subr.mxu0 0.0
        %3817 = vmatpush1.msra.mxu0 0.0
        %3818 = vmatprep.subr.mxu0 0.0
        %3819 = vmatpush1.msra.mxu0 0.0
        %3820 = vmatprep.subr.mxu0 0.0
        %3821 = vmatpush1.msra.mxu0 0.0
        %3822 = vmatprep.mubr.f32.mxu0 0.0
        %3823 = vmatmul.mubr.f32.gmra.mrb[0].mxu0 %v3740
        %v3824 = vpop.f32.mrb[0].mxu0
        %v3825 = vadd.f32 0.0, %v3824
        %v3826 = vpop.f32.mrb[0].mxu0
        %3827 = vdwg.mxu0
        %3828 = vmatprep.subr.mxu0 0.0
        %3829 = vmatpush1.msra.mxu0 %v2298
        %3830 = vmatprep.subr.mxu0 0.0
        %3831 = vmatpush1.msra.mxu0 %v2299
        %3832 = vmatprep.subr.mxu0 0.0
        %3833 = vmatpush1.msra.mxu0 %v2300
        %3834 = vmatprep.subr.mxu0 0.0
        %3835 = vmatpush1.msra.mxu0 %v2301
        %3836 = vmatprep.subr.mxu0 0.0
        %3837 = vmatpush1.msra.mxu0 %v2302
        %3838 = vmatprep.subr.mxu0 0.0
        %3839 = vmatpush1.msra.mxu0 %v2303
        %3840 = vmatprep.subr.mxu0 0.0
        %3841 = vmatpush1.msra.mxu0 %v2304
        %3842 = vmatprep.subr.mxu0 0.0
        %3843 = vmatpush1.msra.mxu0 %v2305
        %3844 = vmatprep.subr.mxu0 0.0
        %3845 = vmatpush1.msra.mxu0 %v2306
        %3846 = vmatprep.subr.mxu0 0.0
        %3847 = vmatpush1.msra.mxu0 %v2307
        %3848 = vmatprep.subr.mxu0 0.0
        %3849 = vmatpush1.msra.mxu0 %v2308
        %3850 = vmatprep.subr.mxu0 0.0
        %3851 = vmatpush1.msra.mxu0 %v2309
        %3852 = vmatprep.subr.mxu0 0.0
        %3853 = vmatpush1.msra.mxu0 %v2310
        %3854 = vmatprep.subr.mxu0 0.0
        %3855 = vmatpush1.msra.mxu0 %v2311
        %3856 = vmatprep.subr.mxu0 0.0
        %3857 = vmatpush1.msra.mxu0 %v2312
        %3858 = vmatprep.subr.mxu0 0.0
        %3859 = vmatpush1.msra.mxu0 %v2313
        %3860 = vmatprep.subr.mxu0 0.0
        %3861 = vmatpush1.msra.mxu0 0.0
        %3862 = vmatprep.subr.mxu0 0.0
        %3863 = vmatpush1.msra.mxu0 0.0
        %3864 = vmatprep.subr.mxu0 0.0
        %3865 = vmatpush1.msra.mxu0 0.0
        %3866 = vmatprep.subr.mxu0 0.0
        %3867 = vmatpush1.msra.mxu0 0.0
        %3868 = vmatprep.subr.mxu0 0.0
        %3869 = vmatpush1.msra.mxu0 0.0
        %3870 = vmatprep.subr.mxu0 0.0
        %3871 = vmatpush1.msra.mxu0 0.0
        %3872 = vmatprep.subr.mxu0 0.0
        %3873 = vmatpush1.msra.mxu0 0.0
        %3874 = vmatprep.subr.mxu0 0.0
        %3875 = vmatpush1.msra.mxu0 0.0
        %3876 = vmatprep.subr.mxu0 0.0
        %3877 = vmatpush1.msra.mxu0 0.0
        %3878 = vmatprep.subr.mxu0 0.0
        %3879 = vmatpush1.msra.mxu0 0.0
        %3880 = vmatprep.subr.mxu0 0.0
        %3881 = vmatpush1.msra.mxu0 0.0
        %3882 = vmatprep.subr.mxu0 0.0
        %3883 = vmatpush1.msra.mxu0 0.0
        %3884 = vmatprep.subr.mxu0 0.0
        %3885 = vmatpush1.msra.mxu0 0.0
        %3886 = vmatprep.subr.mxu0 0.0
        %3887 = vmatpush1.msra.mxu0 0.0
        %3888 = vmatprep.subr.mxu0 0.0
        %3889 = vmatpush1.msra.mxu0 0.0
        %3890 = vmatprep.subr.mxu0 0.0
        %3891 = vmatpush1.msra.mxu0 0.0
        %3892 = vmatprep.mubr.f32.mxu0 0.0
        %3893 = vmatmul.mubr.f32.gmra.mrb[0].mxu0 %v2297
        %v3894 = vpop.f32.mrb[0].mxu0
        %v3895 = vadd.f32 %v3825, %v3894
        %v3896 = vpop.f32.mrb[0].mxu0
        %3897 = vdwg.mxu0
        %3898 = vst [vmem:[%s314] sm:$0xff] %v3895
        %s3899 = sand.u32 %s167, 1
        %s3900 = scalar_lea.sflag [#allocation4], %s3899
        %s3901 = sand.u32 %s167, 1
        %s3902 = smul.addr %s3901, 8
        %s3903 = scalar_lea.vmem [#allocation10], %s3902
        // Predicated region
        $region61: #{tpu_custom_call.1} parent=43 // pred_check
          %p3904 = pneg %p177
        $region62: #{tpu_custom_call.1} parent=43 // pred_check_branch
          %3906 = sbr.rel (%p3904) target = $region64
        $region63: #{tpu_custom_call.1} parent=43 // pred_region
          %s3908 = ssub.s32 128, 128
          %3909 = vsyncadd %s3900, %s3908
          %s3910 = smul.addr %s23, 128
          %s3911 = scalar_lea.hbm %s6, %s3910
          %s3913 = sshll.u32 %s3903, 4
          %s3914 = int_to_ptr.vmem [resolvable:$true] %s3913
          %3916 = dma.vmem_to_hbm [thread:$0]  %s3914, 128, %s3911, %s3900
        $region64: #{tpu_custom_call.1} parent=43 // pred_fallthru
          _
      $region44: #{tpu_custom_call.1} parent=5 // pred_fallthru
        _
      %p3917 = scmp.le.s32.totalorder 2, %s18
      // Predicated region
      $region65: #{tpu_custom_call.1} parent=5 // pred_check
        %p3918 = pneg %p3917
      $region66: #{tpu_custom_call.1} parent=5 // pred_check_branch
        %3920 = sbr.rel (%p3918) target = $region68
      $region67: #{tpu_custom_call.1} parent=5 // pred_region
        %s3921 = ssub.s32 %s18, 2
        // Predicated region
        $region69: #{tpu_custom_call.1} parent=67 // pred_check
          %p3922 = pneg %p183
        $region70: #{tpu_custom_call.1} parent=67 // pred_check_branch
          %3924 = sbr.rel (%p3922) target = $region72
        $region71: #{tpu_custom_call.1} parent=67 // pred_region
          %s3925 = sand.u32 %s168, 1
          %s3926 = scalar_lea.sflag [#allocation4], %s3925
          %s3927 = sand.u32 %s168, 1
          %s3928 = smul.addr %s3927, 8
          %s3929 = scalar_lea.vmem [#allocation10], %s3928
          %3930 = dma.done %s3926, 128
        $region72: #{tpu_custom_call.1} parent=67 // pred_fallthru
          _
      $region68: #{tpu_custom_call.1} parent=5 // pred_fallthru
        _
    $region6: #{tpu_custom_call.1} parent=1 // loop_footer
      %s22 = sadd.s32 1, %s18
    $region7: #{tpu_custom_call.1} parent=1 // loop_footer_branch
      %17 = sbr.rel target = $region3
    $region8: #{tpu_custom_call.1} parent=1 // loop_exit
      _
    %3931 = vsyncpa [#allocation3], 1
    %s3932 = scalar_lea.sflag [#allocation3], 1
    %3933 = vsyncpa %s3932, 1
    %3934 = vsyncpa [#allocation6], 1
    %3935 = vsyncpa [#allocation9], 1
    %3936 = vsyncpa [#allocation4], 1
    %s3937 = scalar_lea.sflag [#allocation4], 1
    %3938 = vsyncpa %s3937, 1

</llo_original>
